<compile_context>
chip_gen: v7x
topology: tpu7x:2x2x1
jax: 0.10.0
libtpu: 0.0.40
codegen_flags: <defaults>
</compile_context>

<pallas_src>
import math

import numpy as np
import jax
import jax.numpy as jnp
from jax import lax
from jax.experimental import pallas as pl
from jax.experimental.pallas import tpu as pltpu

# ----------------------------- configuration ---------------------------------
B = 2            # batch
C = 4            # image channels
IMG = 16         # image size
P = 4            # patch size
G = IMG // P     # patch grid (4)
NP = G * G       # num patches (16)
S = NP + 1       # tokens per image incl. cls (17)
SP = 24          # padded tokens per image (multiple of 8)
NT = B * SP      # total rows processed by the kernel (48)
E = 32           # embed dim
H = 4            # heads
DH = E // H      # per-head dim (8)
MLP = 64         # mlp hidden dim
L = 2            # num transformer layers
NC = 10          # num classes
CPP = C * P * P  # pixels per patch (64)
AUG = CPP + 2    # patch row + [conv-bias indicator | cls indicator] (66)
EPS = 1e-5       # nn.LayerNorm default eps
NEG = -1e30      # additive mask value

# per-layer parameter-slab rows (width 3E, entries left-aligned & zero padded)
WSLAB = 3 * E                                         # 96
R_LN1G, R_LN1B, R_LN2G, R_LN2B = 0, 1, 2, 3
R_BQKV, R_BO, R_B1, R_B2 = 4, 5, 6, 7
LSLAB_ROWS = 8

# head slab: row 0 ln_g, 1 ln_b, 2 head bias (padded), 3..7 zeros, 8..8+E-1 padded head weight
HSLAB_W0 = 8
HSLAB_ROWS = HSLAB_W0 + E


# ------------------------------ kernel helpers --------------------------------
def _layernorm(x, g, b):
    mu = jnp.mean(x, axis=-1, keepdims=True)
    var = jnp.mean((x - mu) * (x - mu), axis=-1, keepdims=True)
    return (x - mu) * lax.rsqrt(var + EPS) * g + b


def _gelu_exact(x):
    # PyTorch nn.GELU() default: exact erf-based GELU (kept exact for 1e-4 parity).
    return 0.5 * x * (1.0 + lax.erf(x * (1.0 / math.sqrt(2.0))))


# --------------------------------- kernel -------------------------------------
def vit_kernel(
    patches_ref,   # (NT, AUG)   patch pixels + [conv-bias ind | cls ind] columns (pad rows zero)
    waug_ref,      # (AUG, E)    [conv weight ; conv bias ; cls token]
    pos_ref,       # (NT, E)     positional embedding, padded to SP and tiled over batch
    mask_ref,      # (NT, NT)    constant additive attention mask (block-diag, keys < S)
    wqkv_ref,      # (L, E, 3E)  fused Q|K|V weights (Q pre-scaled by 1/sqrt(DH))
    wo_ref,        # (L, E, E)   attention output projection
    w1_ref,        # (L, E, MLP) MLP dense1
    w2_ref,        # (L, MLP, E) MLP dense2
    lslab_ref,     # (L, LSLAB_ROWS, 3E) per-layer LN params + fused biases
    hslab_ref,     # (HSLAB_ROWS, E)     head LN params, head bias, padded head weight
    o_ref,         # (B, NC)     logits
):
    f32 = jnp.float32

    # ---- patch embedding + conv bias + cls token in ONE matmul ----
    x = jnp.dot(patches_ref[...], waug_ref[...], preferred_element_type=f32)
    x = x + pos_ref[...]                                       # (NT, E); pad rows stay 0

    mask_bias = mask_ref[...]                                   # precomputed constant

    # ---- transformer blocks (static unroll over L) ----
    for l in range(L):
        sl = lslab_ref[l]                                       # (LSLAB_ROWS, 3E)
        ln1g = sl[R_LN1G:R_LN1G + 1, :E]
        ln1b = sl[R_LN1B:R_LN1B + 1, :E]
        ln2g = sl[R_LN2G:R_LN2G + 1, :E]
        ln2b = sl[R_LN2B:R_LN2B + 1, :E]
        bqkv = sl[R_BQKV:R_BQKV + 1, :]                         # (1, 3E) fused q|k|v bias
        bo = sl[R_BO:R_BO + 1, :E]
        b1 = sl[R_B1:R_B1 + 1, :MLP]
        b2 = sl[R_B2:R_B2 + 1, :E]

        # ---- multi-head self-attention ----
        y = _layernorm(x, ln1g, ln1b)
        qkv = jnp.dot(y, wqkv_ref[l], preferred_element_type=f32) + bqkv   # (NT, 3E)
        q = qkv[:, 0:E]                                         # already scaled by 1/sqrt(DH)
        k = qkv[:, E:2 * E]
        v = qkv[:, 2 * E:3 * E]

        heads = []
        for h in range(H):
            lo = h * DH
            qh = q[:, lo:lo + DH]                               # (NT, DH) static lane slices
            kh = k[:, lo:lo + DH]
            vh = v[:, lo:lo + DH]
            # scores = qh @ kh^T : contract dim 1 of both operands (no transpose materialized)
            s = lax.dot_general(qh, kh, (((1,), (1,)), ((), ())),
                                preferred_element_type=f32)     # (NT, NT)
            s = s + mask_bias
            m = jnp.max(s, axis=-1, keepdims=True)
            p = jnp.exp(s - m)                                  # un-normalized weights
            rs = jnp.sum(p, axis=-1, keepdims=True)             # (NT, 1)
            # (attention dropout is identity in eval mode)
            ch = jnp.dot(p, vh, preferred_element_type=f32)     # (NT, DH)
            ch = ch * pl.reciprocal(rs, approx=False)           # normalize on the small tile
            heads.append(ch)
        ctx = jnp.concatenate(heads, axis=1)                    # (NT, E) merged heads
        x = x + jnp.dot(ctx, wo_ref[l], preferred_element_type=f32) + bo   # residual 1

        # ---- MLP ----
        z = _layernorm(x, ln2g, ln2b)
        hmid = jnp.dot(z, w1_ref[l], preferred_element_type=f32) + b1
        hmid = _gelu_exact(hmid)
        # (MLP dropouts are identity in eval mode)
        x = x + jnp.dot(hmid, w2_ref[l], preferred_element_type=f32) + b2  # residual 2

    # ---- classifier head on the CLS token of each batch element ----
    hs = hslab_ref[...]
    hg = hs[0:1, :]
    hb = hs[1:2, :]
    hbias = hs[2:3, :]
    hw = hs[HSLAB_W0:HSLAB_W0 + E, :]                           # (E, E), cols >= NC are zero
    xcls = jnp.concatenate([x[b * SP:b * SP + 1, :] for b in range(B)], axis=0)   # (B, E)
    hn = _layernorm(xcls, hg, hb)
    logits = jnp.dot(hn, hw, preferred_element_type=f32) + hbias                  # (B, E)
    o_ref[...] = logits[:, :NC].astype(o_ref.dtype)


# ------------------------------ packing (ONCE) ---------------------------------
def _extract_patches(X):
    """(B, C, IMG, IMG) -> (B, NP, CPP), patch order row-major, feature order (c, ph, pw)."""
    Xp = X.reshape(B, C, G, P, G, P)
    Xp = Xp.transpose(0, 2, 4, 1, 3, 5)          # (B, G, G, C, P, P)
    return Xp.reshape(B, NP, CPP)


def pack_params(p):
    """Parameter packing hoisted out of the per-call path: run once at init."""
    f32 = jnp.float32
    scale = 1.0 / math.sqrt(DH)

    # fused embedding weight: [conv weight ; conv bias ; cls token]
    w_aug = jnp.concatenate([
        p["conv_w"].reshape(E, CPP).T,             # (CPP, E)
        p["conv_b"].reshape(1, E),
        p["cls"].reshape(1, E)], axis=0)           # (AUG, E)

    pos_pad = jnp.concatenate([p["pos"], jnp.zeros((SP - S, E), f32)], axis=0)   # (SP, E)
    pos_slab = jnp.tile(pos_pad, (B, 1))                                          # (NT, E)

    # constant block-diagonal attention mask (numpy, built once)
    mask = np.full((NT, NT), NEG, dtype=np.float32)
    for b in range(B):
        mask[b * SP:(b + 1) * SP, b * SP:b * SP + S] = 0.0
    mask_bias = jnp.asarray(mask)                                                  # (NT, NT)

    # fused QKV weights per layer; 1/sqrt(DH) folded into Q
    wqkv = jnp.stack([jnp.concatenate([p["wq"][l] * scale, p["wk"][l], p["wv"][l]], axis=1)
                      for l in range(L)])                                          # (L, E, 3E)

    def pad_to(v, w):   # (n,) -> (w,) left-aligned zero-padded
        return jnp.concatenate([v, jnp.zeros((w - v.shape[0],), f32)])

    lslab = jnp.stack([
        jnp.stack([pad_to(p["ln1_g"][l], WSLAB), pad_to(p["ln1_b"][l], WSLAB),
                   pad_to(p["ln2_g"][l], WSLAB), pad_to(p["ln2_b"][l], WSLAB),
                   jnp.concatenate([p["bq"][l] * scale, p["bk"][l], p["bv"][l]]),  # fused bqkv
                   pad_to(p["bo"][l], WSLAB),
                   pad_to(p["b1"][l], WSLAB),
                   pad_to(p["b2"][l], WSLAB)])
        for l in range(L)])                                                        # (L, 8, 3E)

    head_w_pad = jnp.zeros((E, E), f32).at[:, :NC].set(p["head_w"])
    head_b_pad = jnp.zeros((E,), f32).at[:NC].set(p["head_b"])
    hslab = jnp.concatenate([
        p["head_ln_g"].reshape(1, E),
        p["head_ln_b"].reshape(1, E),
        head_b_pad.reshape(1, E),
        jnp.zeros((HSLAB_W0 - 3, E), f32),
        head_w_pad], axis=0)                                                       # (HSLAB_ROWS, E)

    return (w_aug, pos_slab, mask_bias, wqkv, p["wo"], p["w1"], p["w2"], lslab, hslab)


# ------------------------------ per-call wrapper --------------------------------
def build_patch_rows(X):
    """Only per-call work: patch extraction + indicator columns + cls/pad rows."""
    f32 = jnp.float32
    patches = _extract_patches(X)                                   # (B, NP, CPP)
    patch_rows = jnp.concatenate(
        [patches, jnp.ones((B, NP, 1), f32), jnp.zeros((B, NP, 1), f32)], axis=-1)
    cls_row = jnp.zeros((B, 1, AUG), f32).at[:, :, AUG - 1].set(1.0)
    pad_rows = jnp.zeros((B, SP - S, AUG), f32)
    return jnp.concatenate([cls_row, patch_rows, pad_rows], axis=1).reshape(NT, AUG)


def vit_forward(X, packed):
    patches_aug = build_patch_rows(X)
    inputs = (patches_aug,) + tuple(packed)
    return pl.pallas_call(
        vit_kernel,
        out_shape=jax.ShapeDtypeStruct((B, NC), jnp.float32),
        in_specs=[pl.BlockSpec(memory_space=pltpu.MemorySpace.VMEM) for _ in inputs],
        out_specs=pl.BlockSpec(memory_space=pltpu.MemorySpace.VMEM),
    )(*inputs)


# ------------------------------ params & reference ----------------------------
def init_params(key):
    ks = jax.random.split(key, 20)
    sc = 0.05

    def nrm(k, shape):
        return sc * jax.random.normal(k, shape, jnp.float32)

    return dict(
        conv_w=nrm(ks[0], (E, C, P, P)),
        conv_b=nrm(ks[1], (E,)),
        cls=jnp.zeros((E,), jnp.float32),              # PyTorch init: zeros
        pos=nrm(ks[2], (S, E)),
        ln1_g=jnp.ones((L, E), jnp.float32), ln1_b=jnp.zeros((L, E), jnp.float32),
        ln2_g=jnp.ones((L, E), jnp.float32), ln2_b=jnp.zeros((L, E), jnp.float32),
        wq=nrm(ks[3], (L, E, E)), bq=nrm(ks[4], (L, E)),
        wk=nrm(ks[5], (L, E, E)), bk=nrm(ks[6], (L, E)),
        wv=nrm(ks[7], (L, E, E)), bv=nrm(ks[8], (L, E)),
        wo=nrm(ks[9], (L, E, E)), bo=nrm(ks[10], (L, E)),
        w1=nrm(ks[11], (L, E, MLP)), b1=nrm(ks[12], (L, MLP)),
        w2=nrm(ks[13], (L, MLP, E)), b2=nrm(ks[14], (L, E)),
        head_ln_g=jnp.ones((E,), jnp.float32), head_ln_b=jnp.zeros((E,), jnp.float32),
        head_w=nrm(ks[15], (E, NC)), head_b=nrm(ks[16], (NC,)),
    )


def vit_ref(X, p):
    """Pure-JAX reference mirroring the PyTorch VisionTransformer_custom forward (eval)."""
    patches = _extract_patches(X)
    emb = patches @ p["conv_w"].reshape(E, CPP).T + p["conv_b"]            # (B, NP, E)
    cls = jnp.broadcast_to(p["cls"].reshape(1, 1, E), (B, 1, E))
    x = jnp.concatenate([cls, emb], axis=1) + p["pos"].reshape(1, S, E)    # (B, S, E)

    def ln(v, g, b):
        mu = jnp.mean(v, -1, keepdims=True)
        var = jnp.mean((v - mu) ** 2, -1, keepdims=True)
        return (v - mu) / jnp.sqrt(var + EPS) * g + b

    for l in range(L):
        y = ln(x, p["ln1_g"][l], p["ln1_b"][l])
        q = y @ p["wq"][l] + p["bq"][l]
        k = y @ p["wk"][l] + p["bk"][l]
        v = y @ p["wv"][l] + p["bv"][l]

        def split(t):
            return t.reshape(B, S, H, DH).transpose(0, 2, 1, 3)

        qh, kh, vh = split(q), split(k), split(v)
        sc = jnp.einsum('bhqd,bhkd->bhqk', qh, kh) / math.sqrt(DH)
        a = jax.nn.softmax(sc, axis=-1)
        ctx = jnp.einsum('bhqk,bhkd->bhqd', a, vh)
        ctx = ctx.transpose(0, 2, 1, 3).reshape(B, S, E)
        x = x + (ctx @ p["wo"][l] + p["bo"][l])

        z = ln(x, p["ln2_g"][l], p["ln2_b"][l])
        hmid = z @ p["w1"][l] + p["b1"][l]
        hmid = 0.5 * hmid * (1.0 + lax.erf(hmid / math.sqrt(2.0)))
        x = x + (hmid @ p["w2"][l] + p["b2"][l])

    xc = ln(x[:, 0], p["head_ln_g"], p["head_ln_b"])
    return xc @ p["head_w"] + p["head_b"]


# ----------------------------------- main --------------------------------------
if __name__ == "__main__":
    key = jax.random.PRNGKey(0)
    kx, kp = jax.random.split(key)
    X = jax.random.normal(kx, (B, C, IMG, IMG), jnp.float32)
    params = init_params(kp)

    packed = pack_params(params)          # packed ONCE, outside the per-call path
    fwd = jax.jit(vit_forward)

    out = jax.block_until_ready(fwd(X, packed))

    ref = vit_ref(X, params)
    assert out.shape == (B, NC)
    max_err = float(jnp.max(jnp.abs(out - ref)))
    assert jnp.allclose(out, ref, atol=1e-4, rtol=1e-4), max_err

    print("KERNEL_OK")
</pallas_src>

<mosaic_0001>
module attributes {stable_mosaic.version = 11 : i64} {
  func.func @vit_kernel(%arg0: memref<48x66xf32, #tpu.memory_space<vmem>>, %arg1: memref<66x32xf32, #tpu.memory_space<vmem>>, %arg2: memref<48x32xf32, #tpu.memory_space<vmem>>, %arg3: memref<48x48xf32, #tpu.memory_space<vmem>>, %arg4: memref<2x32x96xf32, #tpu.memory_space<vmem>>, %arg5: memref<2x32x32xf32, #tpu.memory_space<vmem>>, %arg6: memref<2x32x64xf32, #tpu.memory_space<vmem>>, %arg7: memref<2x64x32xf32, #tpu.memory_space<vmem>>, %arg8: memref<2x8x96xf32, #tpu.memory_space<vmem>>, %arg9: memref<40x32xf32, #tpu.memory_space<vmem>>, %arg10: memref<2x10xf32, #tpu.memory_space<vmem>>) attributes {dimension_semantics = [], scalar_prefetch = 0 : i64, scratch_operands = 0 : i64, tpu.core_type = #tpu.core_type<tc>} {
    %c0 = arith.constant 0 : index
    %c0_0 = arith.constant 0 : index
    %0 = vector.load %arg0[%c0, %c0_0] : memref<48x66xf32, #tpu.memory_space<vmem>>, vector<48x66xf32>
    %c0_1 = arith.constant 0 : index
    %c0_2 = arith.constant 0 : index
    %1 = vector.load %arg1[%c0_1, %c0_2] : memref<66x32xf32, #tpu.memory_space<vmem>>, vector<66x32xf32>
    %cst = arith.constant dense<0.000000e+00> : vector<48x32xf32>
    %2 = tpu.matmul %0, %1, %cst {dimension_numbers = #tpu.dot_dimension_numbers<[1], [0], [0], [1], [0, 0, 1, 1], [], []>} : vector<48x66xf32>, vector<66x32xf32>, vector<48x32xf32> -> vector<48x32xf32>
    %c0_3 = arith.constant 0 : index
    %c0_4 = arith.constant 0 : index
    %3 = vector.load %arg2[%c0_3, %c0_4] : memref<48x32xf32, #tpu.memory_space<vmem>>, vector<48x32xf32>
    %4 = arith.addf %2, %3 : vector<48x32xf32>
    %c0_5 = arith.constant 0 : index
    %c0_6 = arith.constant 0 : index
    %5 = vector.load %arg3[%c0_5, %c0_6] : memref<48x48xf32, #tpu.memory_space<vmem>>, vector<48x48xf32>
    %c0_7 = arith.constant 0 : index
    %c0_8 = arith.constant 0 : index
    %c0_9 = arith.constant 0 : index
    %6 = vector.load %arg8[%c0_7, %c0_8, %c0_9] : memref<2x8x96xf32, #tpu.memory_space<vmem>>, vector<1x8x96xf32>
    %7 = vector.shape_cast %6 : vector<1x8x96xf32> to vector<8x96xf32>
    %8 = vector.extract_strided_slice %7 {offsets = [0, 0], sizes = [1, 32], strides = [1, 1]} : vector<8x96xf32> to vector<1x32xf32>
    %9 = vector.extract_strided_slice %7 {offsets = [1, 0], sizes = [1, 32], strides = [1, 1]} : vector<8x96xf32> to vector<1x32xf32>
    %10 = vector.extract_strided_slice %7 {offsets = [2, 0], sizes = [1, 32], strides = [1, 1]} : vector<8x96xf32> to vector<1x32xf32>
    %11 = vector.extract_strided_slice %7 {offsets = [3, 0], sizes = [1, 32], strides = [1, 1]} : vector<8x96xf32> to vector<1x32xf32>
    %12 = vector.extract_strided_slice %7 {offsets = [4, 0], sizes = [1, 96], strides = [1, 1]} : vector<8x96xf32> to vector<1x96xf32>
    %13 = vector.extract_strided_slice %7 {offsets = [5, 0], sizes = [1, 32], strides = [1, 1]} : vector<8x96xf32> to vector<1x32xf32>
    %14 = vector.extract_strided_slice %7 {offsets = [6, 0], sizes = [1, 64], strides = [1, 1]} : vector<8x96xf32> to vector<1x64xf32>
    %15 = vector.extract_strided_slice %7 {offsets = [7, 0], sizes = [1, 32], strides = [1, 1]} : vector<8x96xf32> to vector<1x32xf32>
    %cst_10 = arith.constant dense<0.000000e+00> : vector<48xf32>
    %16 = vector.multi_reduction <add>, %4, %cst_10 [1] : vector<48x32xf32> to vector<48xf32>
    %17 = vector.shape_cast %16 : vector<48xf32> to vector<48x1xf32>
    %cst_11 = arith.constant 3.200000e+01 : f32
    %18 = vector.broadcast %cst_11 : f32 to vector<48x1xf32>
    %19 = arith.divf %17, %18 : vector<48x1xf32>
    %20 = vector.broadcast %19 : vector<48x1xf32> to vector<48x32xf32>
    %21 = arith.subf %4, %20 : vector<48x32xf32>
    %22 = vector.broadcast %19 : vector<48x1xf32> to vector<48x32xf32>
    %23 = arith.subf %4, %22 : vector<48x32xf32>
    %24 = arith.mulf %21, %23 : vector<48x32xf32>
    %cst_12 = arith.constant dense<0.000000e+00> : vector<48xf32>
    %25 = vector.multi_reduction <add>, %24, %cst_12 [1] : vector<48x32xf32> to vector<48xf32>
    %26 = vector.shape_cast %25 : vector<48xf32> to vector<48x1xf32>
    %cst_13 = arith.constant 3.200000e+01 : f32
    %27 = vector.broadcast %cst_13 : f32 to vector<48x1xf32>
    %28 = arith.divf %26, %27 : vector<48x1xf32>
    %29 = vector.broadcast %19 : vector<48x1xf32> to vector<48x32xf32>
    %30 = arith.subf %4, %29 : vector<48x32xf32>
    %cst_14 = arith.constant 9.99999974E-6 : f32
    %31 = vector.broadcast %cst_14 : f32 to vector<48x1xf32>
    %32 = arith.addf %28, %31 : vector<48x1xf32>
    %33 = math.rsqrt %32 : vector<48x1xf32>
    %34 = vector.broadcast %33 : vector<48x1xf32> to vector<48x32xf32>
    %35 = arith.mulf %30, %34 : vector<48x32xf32>
    %36 = vector.broadcast %8 : vector<1x32xf32> to vector<48x32xf32>
    %37 = arith.mulf %35, %36 : vector<48x32xf32>
    %38 = vector.broadcast %9 : vector<1x32xf32> to vector<48x32xf32>
    %39 = arith.addf %37, %38 : vector<48x32xf32>
    %c0_15 = arith.constant 0 : index
    %c0_16 = arith.constant 0 : index
    %c0_17 = arith.constant 0 : index
    %40 = vector.load %arg4[%c0_15, %c0_16, %c0_17] : memref<2x32x96xf32, #tpu.memory_space<vmem>>, vector<1x32x96xf32>
    %41 = vector.shape_cast %40 : vector<1x32x96xf32> to vector<32x96xf32>
    %cst_18 = arith.constant dense<0.000000e+00> : vector<48x96xf32>
    %42 = tpu.matmul %39, %41, %cst_18 {dimension_numbers = #tpu.dot_dimension_numbers<[1], [0], [0], [1], [0, 0, 1, 1], [], []>} : vector<48x32xf32>, vector<32x96xf32>, vector<48x96xf32> -> vector<48x96xf32>
    %43 = vector.broadcast %12 : vector<1x96xf32> to vector<48x96xf32>
    %44 = arith.addf %42, %43 : vector<48x96xf32>
    %45 = vector.extract_strided_slice %44 {offsets = [0, 0], sizes = [48, 32], strides = [1, 1]} : vector<48x96xf32> to vector<48x32xf32>
    %46 = vector.extract_strided_slice %44 {offsets = [0, 32], sizes = [48, 32], strides = [1, 1]} : vector<48x96xf32> to vector<48x32xf32>
    %47 = vector.extract_strided_slice %44 {offsets = [0, 64], sizes = [48, 32], strides = [1, 1]} : vector<48x96xf32> to vector<48x32xf32>
    %48 = vector.extract_strided_slice %45 {offsets = [0, 0], sizes = [48, 8], strides = [1, 1]} : vector<48x32xf32> to vector<48x8xf32>
    %49 = vector.extract_strided_slice %46 {offsets = [0, 0], sizes = [48, 8], strides = [1, 1]} : vector<48x32xf32> to vector<48x8xf32>
    %50 = vector.extract_strided_slice %47 {offsets = [0, 0], sizes = [48, 8], strides = [1, 1]} : vector<48x32xf32> to vector<48x8xf32>
    %cst_19 = arith.constant dense<0.000000e+00> : vector<48x48xf32>
    %51 = tpu.matmul %48, %49, %cst_19 {dimension_numbers = #tpu.dot_dimension_numbers<[1], [1], [0], [0], [0, 0, 1, 0], [], []>} : vector<48x8xf32>, vector<48x8xf32>, vector<48x48xf32> -> vector<48x48xf32>
    %52 = arith.addf %51, %5 : vector<48x48xf32>
    %cst_20 = arith.constant dense<0xFF800000> : vector<48xf32>
    %53 = vector.multi_reduction <maximumf>, %52, %cst_20 [1] : vector<48x48xf32> to vector<48xf32>
    %54 = vector.shape_cast %53 : vector<48xf32> to vector<48x1xf32>
    %55 = vector.broadcast %54 : vector<48x1xf32> to vector<48x48xf32>
    %56 = arith.subf %52, %55 : vector<48x48xf32>
    %57 = math.exp %56 : vector<48x48xf32>
    %cst_21 = arith.constant dense<0.000000e+00> : vector<48xf32>
    %58 = vector.multi_reduction <add>, %57, %cst_21 [1] : vector<48x48xf32> to vector<48xf32>
    %59 = vector.shape_cast %58 : vector<48xf32> to vector<48x1xf32>
    %cst_22 = arith.constant dense<0.000000e+00> : vector<48x8xf32>
    %60 = tpu.matmul %57, %50, %cst_22 {dimension_numbers = #tpu.dot_dimension_numbers<[1], [0], [0], [1], [0, 0, 1, 1], [], []>} : vector<48x48xf32>, vector<48x8xf32>, vector<48x8xf32> -> vector<48x8xf32>
    %61 = tpu.reciprocal %59 : vector<48x1xf32> -> vector<48x1xf32>
    %62 = vector.broadcast %61 : vector<48x1xf32> to vector<48x8xf32>
    %63 = arith.mulf %60, %62 : vector<48x8xf32>
    %64 = vector.extract_strided_slice %45 {offsets = [0, 8], sizes = [48, 8], strides = [1, 1]} : vector<48x32xf32> to vector<48x8xf32>
    %65 = vector.extract_strided_slice %46 {offsets = [0, 8], sizes = [48, 8], strides = [1, 1]} : vector<48x32xf32> to vector<48x8xf32>
    %66 = vector.extract_strided_slice %47 {offsets = [0, 8], sizes = [48, 8], strides = [1, 1]} : vector<48x32xf32> to vector<48x8xf32>
    %cst_23 = arith.constant dense<0.000000e+00> : vector<48x48xf32>
    %67 = tpu.matmul %64, %65, %cst_23 {dimension_numbers = #tpu.dot_dimension_numbers<[1], [1], [0], [0], [0, 0, 1, 0], [], []>} : vector<48x8xf32>, vector<48x8xf32>, vector<48x48xf32> -> vector<48x48xf32>
    %68 = arith.addf %67, %5 : vector<48x48xf32>
    %cst_24 = arith.constant dense<0xFF800000> : vector<48xf32>
    %69 = vector.multi_reduction <maximumf>, %68, %cst_24 [1] : vector<48x48xf32> to vector<48xf32>
    %70 = vector.shape_cast %69 : vector<48xf32> to vector<48x1xf32>
    %71 = vector.broadcast %70 : vector<48x1xf32> to vector<48x48xf32>
    %72 = arith.subf %68, %71 : vector<48x48xf32>
    %73 = math.exp %72 : vector<48x48xf32>
    %cst_25 = arith.constant dense<0.000000e+00> : vector<48xf32>
    %74 = vector.multi_reduction <add>, %73, %cst_25 [1] : vector<48x48xf32> to vector<48xf32>
    %75 = vector.shape_cast %74 : vector<48xf32> to vector<48x1xf32>
    %cst_26 = arith.constant dense<0.000000e+00> : vector<48x8xf32>
    %76 = tpu.matmul %73, %66, %cst_26 {dimension_numbers = #tpu.dot_dimension_numbers<[1], [0], [0], [1], [0, 0, 1, 1], [], []>} : vector<48x48xf32>, vector<48x8xf32>, vector<48x8xf32> -> vector<48x8xf32>
    %77 = tpu.reciprocal %75 : vector<48x1xf32> -> vector<48x1xf32>
    %78 = vector.broadcast %77 : vector<48x1xf32> to vector<48x8xf32>
    %79 = arith.mulf %76, %78 : vector<48x8xf32>
    %80 = vector.extract_strided_slice %45 {offsets = [0, 16], sizes = [48, 8], strides = [1, 1]} : vector<48x32xf32> to vector<48x8xf32>
    %81 = vector.extract_strided_slice %46 {offsets = [0, 16], sizes = [48, 8], strides = [1, 1]} : vector<48x32xf32> to vector<48x8xf32>
    %82 = vector.extract_strided_slice %47 {offsets = [0, 16], sizes = [48, 8], strides = [1, 1]} : vector<48x32xf32> to vector<48x8xf32>
    %cst_27 = arith.constant dense<0.000000e+00> : vector<48x48xf32>
    %83 = tpu.matmul %80, %81, %cst_27 {dimension_numbers = #tpu.dot_dimension_numbers<[1], [1], [0], [0], [0, 0, 1, 0], [], []>} : vector<48x8xf32>, vector<48x8xf32>, vector<48x48xf32> -> vector<48x48xf32>
    %84 = arith.addf %83, %5 : vector<48x48xf32>
    %cst_28 = arith.constant dense<0xFF800000> : vector<48xf32>
    %85 = vector.multi_reduction <maximumf>, %84, %cst_28 [1] : vector<48x48xf32> to vector<48xf32>
    %86 = vector.shape_cast %85 : vector<48xf32> to vector<48x1xf32>
    %87 = vector.broadcast %86 : vector<48x1xf32> to vector<48x48xf32>
    %88 = arith.subf %84, %87 : vector<48x48xf32>
    %89 = math.exp %88 : vector<48x48xf32>
    %cst_29 = arith.constant dense<0.000000e+00> : vector<48xf32>
    %90 = vector.multi_reduction <add>, %89, %cst_29 [1] : vector<48x48xf32> to vector<48xf32>
    %91 = vector.shape_cast %90 : vector<48xf32> to vector<48x1xf32>
    %cst_30 = arith.constant dense<0.000000e+00> : vector<48x8xf32>
    %92 = tpu.matmul %89, %82, %cst_30 {dimension_numbers = #tpu.dot_dimension_numbers<[1], [0], [0], [1], [0, 0, 1, 1], [], []>} : vector<48x48xf32>, vector<48x8xf32>, vector<48x8xf32> -> vector<48x8xf32>
    %93 = tpu.reciprocal %91 : vector<48x1xf32> -> vector<48x1xf32>
    %94 = vector.broadcast %93 : vector<48x1xf32> to vector<48x8xf32>
    %95 = arith.mulf %92, %94 : vector<48x8xf32>
    %96 = vector.extract_strided_slice %45 {offsets = [0, 24], sizes = [48, 8], strides = [1, 1]} : vector<48x32xf32> to vector<48x8xf32>
    %97 = vector.extract_strided_slice %46 {offsets = [0, 24], sizes = [48, 8], strides = [1, 1]} : vector<48x32xf32> to vector<48x8xf32>
    %98 = vector.extract_strided_slice %47 {offsets = [0, 24], sizes = [48, 8], strides = [1, 1]} : vector<48x32xf32> to vector<48x8xf32>
    %cst_31 = arith.constant dense<0.000000e+00> : vector<48x48xf32>
    %99 = tpu.matmul %96, %97, %cst_31 {dimension_numbers = #tpu.dot_dimension_numbers<[1], [1], [0], [0], [0, 0, 1, 0], [], []>} : vector<48x8xf32>, vector<48x8xf32>, vector<48x48xf32> -> vector<48x48xf32>
    %100 = arith.addf %99, %5 : vector<48x48xf32>
    %cst_32 = arith.constant dense<0xFF800000> : vector<48xf32>
    %101 = vector.multi_reduction <maximumf>, %100, %cst_32 [1] : vector<48x48xf32> to vector<48xf32>
    %102 = vector.shape_cast %101 : vector<48xf32> to vector<48x1xf32>
    %103 = vector.broadcast %102 : vector<48x1xf32> to vector<48x48xf32>
    %104 = arith.subf %100, %103 : vector<48x48xf32>
    %105 = math.exp %104 : vector<48x48xf32>
    %cst_33 = arith.constant dense<0.000000e+00> : vector<48xf32>
    %106 = vector.multi_reduction <add>, %105, %cst_33 [1] : vector<48x48xf32> to vector<48xf32>
    %107 = vector.shape_cast %106 : vector<48xf32> to vector<48x1xf32>
    %cst_34 = arith.constant dense<0.000000e+00> : vector<48x8xf32>
    %108 = tpu.matmul %105, %98, %cst_34 {dimension_numbers = #tpu.dot_dimension_numbers<[1], [0], [0], [1], [0, 0, 1, 1], [], []>} : vector<48x48xf32>, vector<48x8xf32>, vector<48x8xf32> -> vector<48x8xf32>
    %109 = tpu.reciprocal %107 : vector<48x1xf32> -> vector<48x1xf32>
    %110 = vector.broadcast %109 : vector<48x1xf32> to vector<48x8xf32>
    %111 = arith.mulf %108, %110 : vector<48x8xf32>
    %112 = tpu.concatenate %63, %79, %95, %111 in 1 : vector<48x8xf32>, vector<48x8xf32>, vector<48x8xf32>, vector<48x8xf32> -> vector<48x32xf32>
    %c0_35 = arith.constant 0 : index
    %c0_36 = arith.constant 0 : index
    %c0_37 = arith.constant 0 : index
    %113 = vector.load %arg5[%c0_35, %c0_36, %c0_37] : memref<2x32x32xf32, #tpu.memory_space<vmem>>, vector<1x32x32xf32>
    %114 = vector.shape_cast %113 : vector<1x32x32xf32> to vector<32x32xf32>
    %cst_38 = arith.constant dense<0.000000e+00> : vector<48x32xf32>
    %115 = tpu.matmul %112, %114, %cst_38 {dimension_numbers = #tpu.dot_dimension_numbers<[1], [0], [0], [1], [0, 0, 1, 1], [], []>} : vector<48x32xf32>, vector<32x32xf32>, vector<48x32xf32> -> vector<48x32xf32>
    %116 = arith.addf %4, %115 : vector<48x32xf32>
    %117 = vector.broadcast %13 : vector<1x32xf32> to vector<48x32xf32>
    %118 = arith.addf %116, %117 : vector<48x32xf32>
    %cst_39 = arith.constant dense<0.000000e+00> : vector<48xf32>
    %119 = vector.multi_reduction <add>, %118, %cst_39 [1] : vector<48x32xf32> to vector<48xf32>
    %120 = vector.shape_cast %119 : vector<48xf32> to vector<48x1xf32>
    %cst_40 = arith.constant 3.200000e+01 : f32
    %121 = vector.broadcast %cst_40 : f32 to vector<48x1xf32>
    %122 = arith.divf %120, %121 : vector<48x1xf32>
    %123 = vector.broadcast %122 : vector<48x1xf32> to vector<48x32xf32>
    %124 = arith.subf %118, %123 : vector<48x32xf32>
    %125 = vector.broadcast %122 : vector<48x1xf32> to vector<48x32xf32>
    %126 = arith.subf %118, %125 : vector<48x32xf32>
    %127 = arith.mulf %124, %126 : vector<48x32xf32>
    %cst_41 = arith.constant dense<0.000000e+00> : vector<48xf32>
    %128 = vector.multi_reduction <add>, %127, %cst_41 [1] : vector<48x32xf32> to vector<48xf32>
    %129 = vector.shape_cast %128 : vector<48xf32> to vector<48x1xf32>
    %cst_42 = arith.constant 3.200000e+01 : f32
    %130 = vector.broadcast %cst_42 : f32 to vector<48x1xf32>
    %131 = arith.divf %129, %130 : vector<48x1xf32>
    %132 = vector.broadcast %122 : vector<48x1xf32> to vector<48x32xf32>
    %133 = arith.subf %118, %132 : vector<48x32xf32>
    %cst_43 = arith.constant 9.99999974E-6 : f32
    %134 = vector.broadcast %cst_43 : f32 to vector<48x1xf32>
    %135 = arith.addf %131, %134 : vector<48x1xf32>
    %136 = math.rsqrt %135 : vector<48x1xf32>
    %137 = vector.broadcast %136 : vector<48x1xf32> to vector<48x32xf32>
    %138 = arith.mulf %133, %137 : vector<48x32xf32>
    %139 = vector.broadcast %10 : vector<1x32xf32> to vector<48x32xf32>
    %140 = arith.mulf %138, %139 : vector<48x32xf32>
    %141 = vector.broadcast %11 : vector<1x32xf32> to vector<48x32xf32>
    %142 = arith.addf %140, %141 : vector<48x32xf32>
    %c0_44 = arith.constant 0 : index
    %c0_45 = arith.constant 0 : index
    %c0_46 = arith.constant 0 : index
    %143 = vector.load %arg6[%c0_44, %c0_45, %c0_46] : memref<2x32x64xf32, #tpu.memory_space<vmem>>, vector<1x32x64xf32>
    %144 = vector.shape_cast %143 : vector<1x32x64xf32> to vector<32x64xf32>
    %cst_47 = arith.constant dense<0.000000e+00> : vector<48x64xf32>
    %145 = tpu.matmul %142, %144, %cst_47 {dimension_numbers = #tpu.dot_dimension_numbers<[1], [0], [0], [1], [0, 0, 1, 1], [], []>} : vector<48x32xf32>, vector<32x64xf32>, vector<48x64xf32> -> vector<48x64xf32>
    %146 = vector.broadcast %14 : vector<1x64xf32> to vector<48x64xf32>
    %147 = arith.addf %145, %146 : vector<48x64xf32>
    %cst_48 = arith.constant 5.000000e-01 : f32
    %148 = vector.broadcast %cst_48 : f32 to vector<48x64xf32>
    %149 = arith.mulf %148, %147 : vector<48x64xf32>
    %cst_49 = arith.constant 0.707106769 : f32
    %150 = vector.broadcast %cst_49 : f32 to vector<48x64xf32>
    %151 = arith.mulf %147, %150 : vector<48x64xf32>
    %152 = math.erf %151 : vector<48x64xf32>
    %cst_50 = arith.constant 1.000000e+00 : f32
    %153 = vector.broadcast %cst_50 : f32 to vector<48x64xf32>
    %154 = arith.addf %153, %152 : vector<48x64xf32>
    %155 = arith.mulf %149, %154 : vector<48x64xf32>
    %c0_51 = arith.constant 0 : index
    %c0_52 = arith.constant 0 : index
    %c0_53 = arith.constant 0 : index
    %156 = vector.load %arg7[%c0_51, %c0_52, %c0_53] : memref<2x64x32xf32, #tpu.memory_space<vmem>>, vector<1x64x32xf32>
    %157 = vector.shape_cast %156 : vector<1x64x32xf32> to vector<64x32xf32>
    %cst_54 = arith.constant dense<0.000000e+00> : vector<48x32xf32>
    %158 = tpu.matmul %155, %157, %cst_54 {dimension_numbers = #tpu.dot_dimension_numbers<[1], [0], [0], [1], [0, 0, 1, 1], [], []>} : vector<48x64xf32>, vector<64x32xf32>, vector<48x32xf32> -> vector<48x32xf32>
    %159 = arith.addf %118, %158 : vector<48x32xf32>
    %160 = vector.broadcast %15 : vector<1x32xf32> to vector<48x32xf32>
    %161 = arith.addf %159, %160 : vector<48x32xf32>
    %c1 = arith.constant 1 : index
    %c0_55 = arith.constant 0 : index
    %c0_56 = arith.constant 0 : index
    %162 = vector.load %arg8[%c1, %c0_55, %c0_56] : memref<2x8x96xf32, #tpu.memory_space<vmem>>, vector<1x8x96xf32>
    %163 = vector.shape_cast %162 : vector<1x8x96xf32> to vector<8x96xf32>
    %164 = vector.extract_strided_slice %163 {offsets = [0, 0], sizes = [1, 32], strides = [1, 1]} : vector<8x96xf32> to vector<1x32xf32>
    %165 = vector.extract_strided_slice %163 {offsets = [1, 0], sizes = [1, 32], strides = [1, 1]} : vector<8x96xf32> to vector<1x32xf32>
    %166 = vector.extract_strided_slice %163 {offsets = [2, 0], sizes = [1, 32], strides = [1, 1]} : vector<8x96xf32> to vector<1x32xf32>
    %167 = vector.extract_strided_slice %163 {offsets = [3, 0], sizes = [1, 32], strides = [1, 1]} : vector<8x96xf32> to vector<1x32xf32>
    %168 = vector.extract_strided_slice %163 {offsets = [4, 0], sizes = [1, 96], strides = [1, 1]} : vector<8x96xf32> to vector<1x96xf32>
    %169 = vector.extract_strided_slice %163 {offsets = [5, 0], sizes = [1, 32], strides = [1, 1]} : vector<8x96xf32> to vector<1x32xf32>
    %170 = vector.extract_strided_slice %163 {offsets = [6, 0], sizes = [1, 64], strides = [1, 1]} : vector<8x96xf32> to vector<1x64xf32>
    %171 = vector.extract_strided_slice %163 {offsets = [7, 0], sizes = [1, 32], strides = [1, 1]} : vector<8x96xf32> to vector<1x32xf32>
    %cst_57 = arith.constant dense<0.000000e+00> : vector<48xf32>
    %172 = vector.multi_reduction <add>, %161, %cst_57 [1] : vector<48x32xf32> to vector<48xf32>
    %173 = vector.shape_cast %172 : vector<48xf32> to vector<48x1xf32>
    %cst_58 = arith.constant 3.200000e+01 : f32
    %174 = vector.broadcast %cst_58 : f32 to vector<48x1xf32>
    %175 = arith.divf %173, %174 : vector<48x1xf32>
    %176 = vector.broadcast %175 : vector<48x1xf32> to vector<48x32xf32>
    %177 = arith.subf %161, %176 : vector<48x32xf32>
    %178 = vector.broadcast %175 : vector<48x1xf32> to vector<48x32xf32>
    %179 = arith.subf %161, %178 : vector<48x32xf32>
    %180 = arith.mulf %177, %179 : vector<48x32xf32>
    %cst_59 = arith.constant dense<0.000000e+00> : vector<48xf32>
    %181 = vector.multi_reduction <add>, %180, %cst_59 [1] : vector<48x32xf32> to vector<48xf32>
    %182 = vector.shape_cast %181 : vector<48xf32> to vector<48x1xf32>
    %cst_60 = arith.constant 3.200000e+01 : f32
    %183 = vector.broadcast %cst_60 : f32 to vector<48x1xf32>
    %184 = arith.divf %182, %183 : vector<48x1xf32>
    %185 = vector.broadcast %175 : vector<48x1xf32> to vector<48x32xf32>
    %186 = arith.subf %161, %185 : vector<48x32xf32>
    %cst_61 = arith.constant 9.99999974E-6 : f32
    %187 = vector.broadcast %cst_61 : f32 to vector<48x1xf32>
    %188 = arith.addf %184, %187 : vector<48x1xf32>
    %189 = math.rsqrt %188 : vector<48x1xf32>
    %190 = vector.broadcast %189 : vector<48x1xf32> to vector<48x32xf32>
    %191 = arith.mulf %186, %190 : vector<48x32xf32>
    %192 = vector.broadcast %164 : vector<1x32xf32> to vector<48x32xf32>
    %193 = arith.mulf %191, %192 : vector<48x32xf32>
    %194 = vector.broadcast %165 : vector<1x32xf32> to vector<48x32xf32>
    %195 = arith.addf %193, %194 : vector<48x32xf32>
    %c1_62 = arith.constant 1 : index
    %c0_63 = arith.constant 0 : index
    %c0_64 = arith.constant 0 : index
    %196 = vector.load %arg4[%c1_62, %c0_63, %c0_64] : memref<2x32x96xf32, #tpu.memory_space<vmem>>, vector<1x32x96xf32>
    %197 = vector.shape_cast %196 : vector<1x32x96xf32> to vector<32x96xf32>
    %cst_65 = arith.constant dense<0.000000e+00> : vector<48x96xf32>
    %198 = tpu.matmul %195, %197, %cst_65 {dimension_numbers = #tpu.dot_dimension_numbers<[1], [0], [0], [1], [0, 0, 1, 1], [], []>} : vector<48x32xf32>, vector<32x96xf32>, vector<48x96xf32> -> vector<48x96xf32>
    %199 = vector.broadcast %168 : vector<1x96xf32> to vector<48x96xf32>
    %200 = arith.addf %198, %199 : vector<48x96xf32>
    %201 = vector.extract_strided_slice %200 {offsets = [0, 0], sizes = [48, 32], strides = [1, 1]} : vector<48x96xf32> to vector<48x32xf32>
    %202 = vector.extract_strided_slice %200 {offsets = [0, 32], sizes = [48, 32], strides = [1, 1]} : vector<48x96xf32> to vector<48x32xf32>
    %203 = vector.extract_strided_slice %200 {offsets = [0, 64], sizes = [48, 32], strides = [1, 1]} : vector<48x96xf32> to vector<48x32xf32>
    %204 = vector.extract_strided_slice %201 {offsets = [0, 0], sizes = [48, 8], strides = [1, 1]} : vector<48x32xf32> to vector<48x8xf32>
    %205 = vector.extract_strided_slice %202 {offsets = [0, 0], sizes = [48, 8], strides = [1, 1]} : vector<48x32xf32> to vector<48x8xf32>
    %206 = vector.extract_strided_slice %203 {offsets = [0, 0], sizes = [48, 8], strides = [1, 1]} : vector<48x32xf32> to vector<48x8xf32>
    %cst_66 = arith.constant dense<0.000000e+00> : vector<48x48xf32>
    %207 = tpu.matmul %204, %205, %cst_66 {dimension_numbers = #tpu.dot_dimension_numbers<[1], [1], [0], [0], [0, 0, 1, 0], [], []>} : vector<48x8xf32>, vector<48x8xf32>, vector<48x48xf32> -> vector<48x48xf32>
    %208 = arith.addf %207, %5 : vector<48x48xf32>
    %cst_67 = arith.constant dense<0xFF800000> : vector<48xf32>
    %209 = vector.multi_reduction <maximumf>, %208, %cst_67 [1] : vector<48x48xf32> to vector<48xf32>
    %210 = vector.shape_cast %209 : vector<48xf32> to vector<48x1xf32>
    %211 = vector.broadcast %210 : vector<48x1xf32> to vector<48x48xf32>
    %212 = arith.subf %208, %211 : vector<48x48xf32>
    %213 = math.exp %212 : vector<48x48xf32>
    %cst_68 = arith.constant dense<0.000000e+00> : vector<48xf32>
    %214 = vector.multi_reduction <add>, %213, %cst_68 [1] : vector<48x48xf32> to vector<48xf32>
    %215 = vector.shape_cast %214 : vector<48xf32> to vector<48x1xf32>
    %cst_69 = arith.constant dense<0.000000e+00> : vector<48x8xf32>
    %216 = tpu.matmul %213, %206, %cst_69 {dimension_numbers = #tpu.dot_dimension_numbers<[1], [0], [0], [1], [0, 0, 1, 1], [], []>} : vector<48x48xf32>, vector<48x8xf32>, vector<48x8xf32> -> vector<48x8xf32>
    %217 = tpu.reciprocal %215 : vector<48x1xf32> -> vector<48x1xf32>
    %218 = vector.broadcast %217 : vector<48x1xf32> to vector<48x8xf32>
    %219 = arith.mulf %216, %218 : vector<48x8xf32>
    %220 = vector.extract_strided_slice %201 {offsets = [0, 8], sizes = [48, 8], strides = [1, 1]} : vector<48x32xf32> to vector<48x8xf32>
    %221 = vector.extract_strided_slice %202 {offsets = [0, 8], sizes = [48, 8], strides = [1, 1]} : vector<48x32xf32> to vector<48x8xf32>
    %222 = vector.extract_strided_slice %203 {offsets = [0, 8], sizes = [48, 8], strides = [1, 1]} : vector<48x32xf32> to vector<48x8xf32>
    %cst_70 = arith.constant dense<0.000000e+00> : vector<48x48xf32>
    %223 = tpu.matmul %220, %221, %cst_70 {dimension_numbers = #tpu.dot_dimension_numbers<[1], [1], [0], [0], [0, 0, 1, 0], [], []>} : vector<48x8xf32>, vector<48x8xf32>, vector<48x48xf32> -> vector<48x48xf32>
    %224 = arith.addf %223, %5 : vector<48x48xf32>
    %cst_71 = arith.constant dense<0xFF800000> : vector<48xf32>
    %225 = vector.multi_reduction <maximumf>, %224, %cst_71 [1] : vector<48x48xf32> to vector<48xf32>
    %226 = vector.shape_cast %225 : vector<48xf32> to vector<48x1xf32>
    %227 = vector.broadcast %226 : vector<48x1xf32> to vector<48x48xf32>
    %228 = arith.subf %224, %227 : vector<48x48xf32>
    %229 = math.exp %228 : vector<48x48xf32>
    %cst_72 = arith.constant dense<0.000000e+00> : vector<48xf32>
    %230 = vector.multi_reduction <add>, %229, %cst_72 [1] : vector<48x48xf32> to vector<48xf32>
    %231 = vector.shape_cast %230 : vector<48xf32> to vector<48x1xf32>
    %cst_73 = arith.constant dense<0.000000e+00> : vector<48x8xf32>
    %232 = tpu.matmul %229, %222, %cst_73 {dimension_numbers = #tpu.dot_dimension_numbers<[1], [0], [0], [1], [0, 0, 1, 1], [], []>} : vector<48x48xf32>, vector<48x8xf32>, vector<48x8xf32> -> vector<48x8xf32>
    %233 = tpu.reciprocal %231 : vector<48x1xf32> -> vector<48x1xf32>
    %234 = vector.broadcast %233 : vector<48x1xf32> to vector<48x8xf32>
    %235 = arith.mulf %232, %234 : vector<48x8xf32>
    %236 = vector.extract_strided_slice %201 {offsets = [0, 16], sizes = [48, 8], strides = [1, 1]} : vector<48x32xf32> to vector<48x8xf32>
    %237 = vector.extract_strided_slice %202 {offsets = [0, 16], sizes = [48, 8], strides = [1, 1]} : vector<48x32xf32> to vector<48x8xf32>
    %238 = vector.extract_strided_slice %203 {offsets = [0, 16], sizes = [48, 8], strides = [1, 1]} : vector<48x32xf32> to vector<48x8xf32>
    %cst_74 = arith.constant dense<0.000000e+00> : vector<48x48xf32>
    %239 = tpu.matmul %236, %237, %cst_74 {dimension_numbers = #tpu.dot_dimension_numbers<[1], [1], [0], [0], [0, 0, 1, 0], [], []>} : vector<48x8xf32>, vector<48x8xf32>, vector<48x48xf32> -> vector<48x48xf32>
    %240 = arith.addf %239, %5 : vector<48x48xf32>
    %cst_75 = arith.constant dense<0xFF800000> : vector<48xf32>
    %241 = vector.multi_reduction <maximumf>, %240, %cst_75 [1] : vector<48x48xf32> to vector<48xf32>
    %242 = vector.shape_cast %241 : vector<48xf32> to vector<48x1xf32>
    %243 = vector.broadcast %242 : vector<48x1xf32> to vector<48x48xf32>
    %244 = arith.subf %240, %243 : vector<48x48xf32>
    %245 = math.exp %244 : vector<48x48xf32>
    %cst_76 = arith.constant dense<0.000000e+00> : vector<48xf32>
    %246 = vector.multi_reduction <add>, %245, %cst_76 [1] : vector<48x48xf32> to vector<48xf32>
    %247 = vector.shape_cast %246 : vector<48xf32> to vector<48x1xf32>
    %cst_77 = arith.constant dense<0.000000e+00> : vector<48x8xf32>
    %248 = tpu.matmul %245, %238, %cst_77 {dimension_numbers = #tpu.dot_dimension_numbers<[1], [0], [0], [1], [0, 0, 1, 1], [], []>} : vector<48x48xf32>, vector<48x8xf32>, vector<48x8xf32> -> vector<48x8xf32>
    %249 = tpu.reciprocal %247 : vector<48x1xf32> -> vector<48x1xf32>
    %250 = vector.broadcast %249 : vector<48x1xf32> to vector<48x8xf32>
    %251 = arith.mulf %248, %250 : vector<48x8xf32>
    %252 = vector.extract_strided_slice %201 {offsets = [0, 24], sizes = [48, 8], strides = [1, 1]} : vector<48x32xf32> to vector<48x8xf32>
    %253 = vector.extract_strided_slice %202 {offsets = [0, 24], sizes = [48, 8], strides = [1, 1]} : vector<48x32xf32> to vector<48x8xf32>
    %254 = vector.extract_strided_slice %203 {offsets = [0, 24], sizes = [48, 8], strides = [1, 1]} : vector<48x32xf32> to vector<48x8xf32>
    %cst_78 = arith.constant dense<0.000000e+00> : vector<48x48xf32>
    %255 = tpu.matmul %252, %253, %cst_78 {dimension_numbers = #tpu.dot_dimension_numbers<[1], [1], [0], [0], [0, 0, 1, 0], [], []>} : vector<48x8xf32>, vector<48x8xf32>, vector<48x48xf32> -> vector<48x48xf32>
    %256 = arith.addf %255, %5 : vector<48x48xf32>
    %cst_79 = arith.constant dense<0xFF800000> : vector<48xf32>
    %257 = vector.multi_reduction <maximumf>, %256, %cst_79 [1] : vector<48x48xf32> to vector<48xf32>
    %258 = vector.shape_cast %257 : vector<48xf32> to vector<48x1xf32>
    %259 = vector.broadcast %258 : vector<48x1xf32> to vector<48x48xf32>
    %260 = arith.subf %256, %259 : vector<48x48xf32>
    %261 = math.exp %260 : vector<48x48xf32>
    %cst_80 = arith.constant dense<0.000000e+00> : vector<48xf32>
    %262 = vector.multi_reduction <add>, %261, %cst_80 [1] : vector<48x48xf32> to vector<48xf32>
    %263 = vector.shape_cast %262 : vector<48xf32> to vector<48x1xf32>
    %cst_81 = arith.constant dense<0.000000e+00> : vector<48x8xf32>
    %264 = tpu.matmul %261, %254, %cst_81 {dimension_numbers = #tpu.dot_dimension_numbers<[1], [0], [0], [1], [0, 0, 1, 1], [], []>} : vector<48x48xf32>, vector<48x8xf32>, vector<48x8xf32> -> vector<48x8xf32>
    %265 = tpu.reciprocal %263 : vector<48x1xf32> -> vector<48x1xf32>
    %266 = vector.broadcast %265 : vector<48x1xf32> to vector<48x8xf32>
    %267 = arith.mulf %264, %266 : vector<48x8xf32>
    %268 = tpu.concatenate %219, %235, %251, %267 in 1 : vector<48x8xf32>, vector<48x8xf32>, vector<48x8xf32>, vector<48x8xf32> -> vector<48x32xf32>
    %c1_82 = arith.constant 1 : index
    %c0_83 = arith.constant 0 : index
    %c0_84 = arith.constant 0 : index
    %269 = vector.load %arg5[%c1_82, %c0_83, %c0_84] : memref<2x32x32xf32, #tpu.memory_space<vmem>>, vector<1x32x32xf32>
    %270 = vector.shape_cast %269 : vector<1x32x32xf32> to vector<32x32xf32>
    %cst_85 = arith.constant dense<0.000000e+00> : vector<48x32xf32>
    %271 = tpu.matmul %268, %270, %cst_85 {dimension_numbers = #tpu.dot_dimension_numbers<[1], [0], [0], [1], [0, 0, 1, 1], [], []>} : vector<48x32xf32>, vector<32x32xf32>, vector<48x32xf32> -> vector<48x32xf32>
    %272 = arith.addf %161, %271 : vector<48x32xf32>
    %273 = vector.broadcast %169 : vector<1x32xf32> to vector<48x32xf32>
    %274 = arith.addf %272, %273 : vector<48x32xf32>
    %cst_86 = arith.constant dense<0.000000e+00> : vector<48xf32>
    %275 = vector.multi_reduction <add>, %274, %cst_86 [1] : vector<48x32xf32> to vector<48xf32>
    %276 = vector.shape_cast %275 : vector<48xf32> to vector<48x1xf32>
    %cst_87 = arith.constant 3.200000e+01 : f32
    %277 = vector.broadcast %cst_87 : f32 to vector<48x1xf32>
    %278 = arith.divf %276, %277 : vector<48x1xf32>
    %279 = vector.broadcast %278 : vector<48x1xf32> to vector<48x32xf32>
    %280 = arith.subf %274, %279 : vector<48x32xf32>
    %281 = vector.broadcast %278 : vector<48x1xf32> to vector<48x32xf32>
    %282 = arith.subf %274, %281 : vector<48x32xf32>
    %283 = arith.mulf %280, %282 : vector<48x32xf32>
    %cst_88 = arith.constant dense<0.000000e+00> : vector<48xf32>
    %284 = vector.multi_reduction <add>, %283, %cst_88 [1] : vector<48x32xf32> to vector<48xf32>
    %285 = vector.shape_cast %284 : vector<48xf32> to vector<48x1xf32>
    %cst_89 = arith.constant 3.200000e+01 : f32
    %286 = vector.broadcast %cst_89 : f32 to vector<48x1xf32>
    %287 = arith.divf %285, %286 : vector<48x1xf32>
    %288 = vector.broadcast %278 : vector<48x1xf32> to vector<48x32xf32>
    %289 = arith.subf %274, %288 : vector<48x32xf32>
    %cst_90 = arith.constant 9.99999974E-6 : f32
    %290 = vector.broadcast %cst_90 : f32 to vector<48x1xf32>
    %291 = arith.addf %287, %290 : vector<48x1xf32>
    %292 = math.rsqrt %291 : vector<48x1xf32>
    %293 = vector.broadcast %292 : vector<48x1xf32> to vector<48x32xf32>
    %294 = arith.mulf %289, %293 : vector<48x32xf32>
    %295 = vector.broadcast %166 : vector<1x32xf32> to vector<48x32xf32>
    %296 = arith.mulf %294, %295 : vector<48x32xf32>
    %297 = vector.broadcast %167 : vector<1x32xf32> to vector<48x32xf32>
    %298 = arith.addf %296, %297 : vector<48x32xf32>
    %c1_91 = arith.constant 1 : index
    %c0_92 = arith.constant 0 : index
    %c0_93 = arith.constant 0 : index
    %299 = vector.load %arg6[%c1_91, %c0_92, %c0_93] : memref<2x32x64xf32, #tpu.memory_space<vmem>>, vector<1x32x64xf32>
    %300 = vector.shape_cast %299 : vector<1x32x64xf32> to vector<32x64xf32>
    %cst_94 = arith.constant dense<0.000000e+00> : vector<48x64xf32>
    %301 = tpu.matmul %298, %300, %cst_94 {dimension_numbers = #tpu.dot_dimension_numbers<[1], [0], [0], [1], [0, 0, 1, 1], [], []>} : vector<48x32xf32>, vector<32x64xf32>, vector<48x64xf32> -> vector<48x64xf32>
    %302 = vector.broadcast %170 : vector<1x64xf32> to vector<48x64xf32>
    %303 = arith.addf %301, %302 : vector<48x64xf32>
    %cst_95 = arith.constant 5.000000e-01 : f32
    %304 = vector.broadcast %cst_95 : f32 to vector<48x64xf32>
    %305 = arith.mulf %304, %303 : vector<48x64xf32>
    %cst_96 = arith.constant 0.707106769 : f32
    %306 = vector.broadcast %cst_96 : f32 to vector<48x64xf32>
    %307 = arith.mulf %303, %306 : vector<48x64xf32>
    %308 = math.erf %307 : vector<48x64xf32>
    %cst_97 = arith.constant 1.000000e+00 : f32
    %309 = vector.broadcast %cst_97 : f32 to vector<48x64xf32>
    %310 = arith.addf %309, %308 : vector<48x64xf32>
    %311 = arith.mulf %305, %310 : vector<48x64xf32>
    %c1_98 = arith.constant 1 : index
    %c0_99 = arith.constant 0 : index
    %c0_100 = arith.constant 0 : index
    %312 = vector.load %arg7[%c1_98, %c0_99, %c0_100] : memref<2x64x32xf32, #tpu.memory_space<vmem>>, vector<1x64x32xf32>
    %313 = vector.shape_cast %312 : vector<1x64x32xf32> to vector<64x32xf32>
    %cst_101 = arith.constant dense<0.000000e+00> : vector<48x32xf32>
    %314 = tpu.matmul %311, %313, %cst_101 {dimension_numbers = #tpu.dot_dimension_numbers<[1], [0], [0], [1], [0, 0, 1, 1], [], []>} : vector<48x64xf32>, vector<64x32xf32>, vector<48x32xf32> -> vector<48x32xf32>
    %315 = arith.addf %274, %314 : vector<48x32xf32>
    %316 = vector.broadcast %171 : vector<1x32xf32> to vector<48x32xf32>
    %317 = arith.addf %315, %316 : vector<48x32xf32>
    %c0_102 = arith.constant 0 : index
    %c0_103 = arith.constant 0 : index
    %318 = vector.load %arg9[%c0_102, %c0_103] : memref<40x32xf32, #tpu.memory_space<vmem>>, vector<40x32xf32>
    %319 = vector.extract_strided_slice %318 {offsets = [0, 0], sizes = [1, 32], strides = [1, 1]} : vector<40x32xf32> to vector<1x32xf32>
    %320 = vector.extract_strided_slice %318 {offsets = [1, 0], sizes = [1, 32], strides = [1, 1]} : vector<40x32xf32> to vector<1x32xf32>
    %321 = vector.extract_strided_slice %318 {offsets = [2, 0], sizes = [1, 32], strides = [1, 1]} : vector<40x32xf32> to vector<1x32xf32>
    %322 = vector.extract_strided_slice %318 {offsets = [8, 0], sizes = [32, 32], strides = [1, 1]} : vector<40x32xf32> to vector<32x32xf32>
    %323 = vector.extract_strided_slice %317 {offsets = [0, 0], sizes = [1, 32], strides = [1, 1]} : vector<48x32xf32> to vector<1x32xf32>
    %324 = vector.extract_strided_slice %317 {offsets = [24, 0], sizes = [1, 32], strides = [1, 1]} : vector<48x32xf32> to vector<1x32xf32>
    %325 = tpu.concatenate %323, %324 in 0 : vector<1x32xf32>, vector<1x32xf32> -> vector<2x32xf32>
    %cst_104 = arith.constant dense<0.000000e+00> : vector<2xf32>
    %326 = vector.multi_reduction <add>, %325, %cst_104 [1] : vector<2x32xf32> to vector<2xf32>
    %327 = vector.shape_cast %326 : vector<2xf32> to vector<2x1xf32>
    %cst_105 = arith.constant 3.200000e+01 : f32
    %328 = vector.broadcast %cst_105 : f32 to vector<2x1xf32>
    %329 = arith.divf %327, %328 : vector<2x1xf32>
    %330 = vector.broadcast %329 : vector<2x1xf32> to vector<2x32xf32>
    %331 = arith.subf %325, %330 : vector<2x32xf32>
    %332 = vector.broadcast %329 : vector<2x1xf32> to vector<2x32xf32>
    %333 = arith.subf %325, %332 : vector<2x32xf32>
    %334 = arith.mulf %331, %333 : vector<2x32xf32>
    %cst_106 = arith.constant dense<0.000000e+00> : vector<2xf32>
    %335 = vector.multi_reduction <add>, %334, %cst_106 [1] : vector<2x32xf32> to vector<2xf32>
    %336 = vector.shape_cast %335 : vector<2xf32> to vector<2x1xf32>
    %cst_107 = arith.constant 3.200000e+01 : f32
    %337 = vector.broadcast %cst_107 : f32 to vector<2x1xf32>
    %338 = arith.divf %336, %337 : vector<2x1xf32>
    %339 = vector.broadcast %329 : vector<2x1xf32> to vector<2x32xf32>
    %340 = arith.subf %325, %339 : vector<2x32xf32>
    %cst_108 = arith.constant 9.99999974E-6 : f32
    %341 = vector.broadcast %cst_108 : f32 to vector<2x1xf32>
    %342 = arith.addf %338, %341 : vector<2x1xf32>
    %343 = math.rsqrt %342 : vector<2x1xf32>
    %344 = vector.broadcast %343 : vector<2x1xf32> to vector<2x32xf32>
    %345 = arith.mulf %340, %344 : vector<2x32xf32>
    %346 = vector.broadcast %319 : vector<1x32xf32> to vector<2x32xf32>
    %347 = arith.mulf %345, %346 : vector<2x32xf32>
    %348 = vector.broadcast %320 : vector<1x32xf32> to vector<2x32xf32>
    %349 = arith.addf %347, %348 : vector<2x32xf32>
    %cst_109 = arith.constant dense<0.000000e+00> : vector<2x32xf32>
    %350 = tpu.matmul %349, %322, %cst_109 {dimension_numbers = #tpu.dot_dimension_numbers<[1], [0], [0], [1], [0, 0, 1, 1], [], []>} : vector<2x32xf32>, vector<32x32xf32>, vector<2x32xf32> -> vector<2x32xf32>
    %351 = vector.broadcast %321 : vector<1x32xf32> to vector<2x32xf32>
    %352 = arith.addf %350, %351 : vector<2x32xf32>
    %353 = vector.extract_strided_slice %352 {offsets = [0, 0], sizes = [2, 10], strides = [1, 1]} : vector<2x32xf32> to vector<2x10xf32>
    %c0_110 = arith.constant 0 : index
    %c0_111 = arith.constant 0 : index
    %354 = vector.load %arg10[%c0_110, %c0_111] : memref<2x10xf32, #tpu.memory_space<vmem>>, vector<2x10xf32>
    tpu.vector_store %arg10[%c0_110, %c0_111], %353 {strides = array<i32>} : memref<2x10xf32, #tpu.memory_space<vmem>>, vector<2x10xf32>,
    return
  }
}

</mosaic_0001>

<llo_original>
// kernel: vit_forward.1
$region0: #{vit_forward.1}
  #allocation0 [shape = 'u32[]', space=smem, size = 0x4, offset = 0x4, fixed_abs, tag = 'smem constant byte address 0x4 - core index']
  #allocation1 [shape = 'u32[144,128]{1,0:T(1,128)}', space=vmem, size = 0x12000, scoped, tag = 'internal scratch']
  %s0 = inlined_call_operand.vmem [shape: f32[48,66], index: 0, kind: input, shape index: {}]
  %s1 = inlined_call_operand.vmem [shape: f32[66,32], index: 1, kind: input, shape index: {}]
  %s2 = inlined_call_operand.vmem [shape: f32[48,32], index: 2, kind: input, shape index: {}]
  %s3 = inlined_call_operand.vmem [shape: f32[48,48], index: 3, kind: input, shape index: {}]
  %s4 = inlined_call_operand.vmem [shape: f32[2,32,96], index: 4, kind: input, shape index: {}]
  %s5 = inlined_call_operand.vmem [shape: f32[2,32,32], index: 5, kind: input, shape index: {}]
  %s6 = inlined_call_operand.vmem [shape: f32[2,32,64], index: 6, kind: input, shape index: {}]
  %s7 = inlined_call_operand.vmem [shape: f32[2,64,32], index: 7, kind: input, shape index: {}]
  %s8 = inlined_call_operand.vmem [shape: f32[2,8,96], index: 8, kind: input, shape index: {}]
  %s9 = inlined_call_operand.vmem [shape: f32[40,32], index: 9, kind: input, shape index: {}]
  %s10 = inlined_call_operand.hbm [shape: f32[2,10], index: 10, kind: output, shape index: {}]
  %s11 = sld [smem:[#allocation0]]
  $region50: #{vit_forward.1} parent=0
    _
  %s13 = ssub.s32 1, %s11
  %s14 = scalar_select 0, %s13, %s11
  $region1: #{vit_forward.1} parent=0
    #allocation2 [shape = 'u8[1024]{0}', space=vmem, size = 0x400, scoped, tag = 'output window, operand 0, single buffered']
    #allocation3 [shape = 's32[1]{0}', space=sflag, size = 0x4, scoped, tag = 'scoped memory for vit_forward.1']
    %15 = vsyncpa [#allocation3], 0
    // Predicated region
    $region2: #{vit_forward.1} parent=1 // pred_check
      _
    $region3: #{vit_forward.1} parent=1 // pred_check_branch
      %17 = sbr.rel (0) target = $region5
    $region4: #{vit_forward.1} parent=1 // pred_region
      _
    $region5: #{vit_forward.1} parent=1 // pred_fallthru
      _
    // Predicated region
    $region6: #{vit_forward.1} parent=1 // pred_check
      _
    $region7: #{vit_forward.1} parent=1 // pred_check_branch
      %19 = sbr.rel (0) target = $region9
    $region8: #{vit_forward.1} parent=1 // pred_region
      _
    $region9: #{vit_forward.1} parent=1 // pred_fallthru
      _
    // Predicated region
    $region10: #{vit_forward.1} parent=1 // pred_check
      _
    $region11: #{vit_forward.1} parent=1 // pred_check_branch
      %21 = sbr.rel (0) target = $region13
    $region12: #{vit_forward.1} parent=1 // pred_region
      _
    $region13: #{vit_forward.1} parent=1 // pred_fallthru
      _
    // Predicated region
    $region14: #{vit_forward.1} parent=1 // pred_check
      _
    $region15: #{vit_forward.1} parent=1 // pred_check_branch
      %23 = sbr.rel (0) target = $region17
    $region16: #{vit_forward.1} parent=1 // pred_region
      _
    $region17: #{vit_forward.1} parent=1 // pred_fallthru
      _
    // Predicated region
    $region18: #{vit_forward.1} parent=1 // pred_check
      _
    $region19: #{vit_forward.1} parent=1 // pred_check_branch
      %25 = sbr.rel (0) target = $region21
    $region20: #{vit_forward.1} parent=1 // pred_region
      _
    $region21: #{vit_forward.1} parent=1 // pred_fallthru
      _
    // Predicated region
    $region22: #{vit_forward.1} parent=1 // pred_check
      _
    $region23: #{vit_forward.1} parent=1 // pred_check_branch
      %27 = sbr.rel (0) target = $region25
    $region24: #{vit_forward.1} parent=1 // pred_region
      _
    $region25: #{vit_forward.1} parent=1 // pred_fallthru
      _
    // Predicated region
    $region26: #{vit_forward.1} parent=1 // pred_check
      _
    $region27: #{vit_forward.1} parent=1 // pred_check_branch
      %29 = sbr.rel (0) target = $region29
    $region28: #{vit_forward.1} parent=1 // pred_region
      _
    $region29: #{vit_forward.1} parent=1 // pred_fallthru
      _
    // Predicated region
    $region30: #{vit_forward.1} parent=1 // pred_check
      _
    $region31: #{vit_forward.1} parent=1 // pred_check_branch
      %31 = sbr.rel (0) target = $region33
    $region32: #{vit_forward.1} parent=1 // pred_region
      _
    $region33: #{vit_forward.1} parent=1 // pred_fallthru
      _
    // Predicated region
    $region34: #{vit_forward.1} parent=1 // pred_check
      _
    $region35: #{vit_forward.1} parent=1 // pred_check_branch
      %33 = sbr.rel (0) target = $region37
    $region36: #{vit_forward.1} parent=1 // pred_region
      _
    $region37: #{vit_forward.1} parent=1 // pred_fallthru
      _
    // Predicated region
    $region38: #{vit_forward.1} parent=1 // pred_check
      _
    $region39: #{vit_forward.1} parent=1 // pred_check_branch
      %35 = sbr.rel (0) target = $region41
    $region40: #{vit_forward.1} parent=1 // pred_region
      _
    $region41: #{vit_forward.1} parent=1 // pred_fallthru
      _
    %v36 = vld [vmem:[%s0] sm:$0xff]
    %v37 = vld [vmem:[%s0 + $0x8] sm:$0xff]
    %v38 = vld [vmem:[%s0 + $0x10] sm:$0xff]
    %v39 = vld [vmem:[%s0 + $0x18] sm:$0xff]
    %v40 = vld [vmem:[%s0 + $0x20] sm:$0xff]
    %v41 = vld [vmem:[%s0 + $0x28] sm:$0xff]
    %v42 = vld [vmem:[%s1] sm:$0xff]
    %v43 = vld [vmem:[%s1 + $0x8] sm:$0xff]
    %v44 = vld [vmem:[%s1 + $0x10] sm:$0xff]
    %v45 = vld [vmem:[%s1 + $0x18] sm:$0xff]
    %v46 = vld [vmem:[%s1 + $0x20] sm:$0xff]
    %v47 = vld [vmem:[%s1 + $0x28] sm:$0xff]
    %v48 = vld [vmem:[%s1 + $0x30] sm:$0xff]
    %v49 = vld [vmem:[%s1 + $0x38] sm:$0xff]
    %v50 = vld [vmem:[%s1 + $0x40] sm:$0x3]
    %v51 = vld [vmem:[%s2] sm:$0xff]
    %v52 = vld [vmem:[%s2 + $0x8] sm:$0xff]
    %v53 = vld [vmem:[%s2 + $0x10] sm:$0xff]
    %v54 = vld [vmem:[%s2 + $0x18] sm:$0xff]
    %v55 = vld [vmem:[%s2 + $0x20] sm:$0xff]
    %v56 = vld [vmem:[%s2 + $0x28] sm:$0xff]
    %vm57 = vcmask 539648
    %v59 = vsel %vm57, %v36, 0
    %v62 = vsel %vm57, %v37, 0
    %v65 = vsel %vm57, %v38, 0
    %v68 = vsel %vm57, %v39, 0
    %v71 = vsel %vm57, %v40, 0
    %v74 = vsel %vm57, %v41, 0
    %vm76 = vcmask 1041408
    %v78 = vsel %vm76, %v50, 0
    %80 = vmatprep.subr.mxu0 0.0
    %81 = vmatpush1.msra.mxu0 %v42
    %82 = vmatprep.subr.mxu0 0.0
    %83 = vmatpush1.msra.mxu0 %v43
    %84 = vmatprep.subr.mxu0 0.0
    %85 = vmatpush1.msra.mxu0 %v44
    %86 = vmatprep.subr.mxu0 0.0
    %87 = vmatpush1.msra.mxu0 %v45
    %88 = vmatprep.subr.mxu0 0.0
    %89 = vmatpush1.msra.mxu0 %v46
    %90 = vmatprep.subr.mxu0 0.0
    %91 = vmatpush1.msra.mxu0 %v47
    %92 = vmatprep.subr.mxu0 0.0
    %93 = vmatpush1.msra.mxu0 %v48
    %94 = vmatprep.subr.mxu0 0.0
    %95 = vmatpush1.msra.mxu0 %v49
    %96 = vmatprep.subr.mxu0 0.0
    %97 = vmatpush1.msra.mxu0 %v78
    %98 = vmatprep.subr.mxu0 0.0
    %99 = vmatpush1.msra.mxu0 0.0
    %100 = vmatprep.subr.mxu0 0.0
    %101 = vmatpush1.msra.mxu0 0.0
    %102 = vmatprep.subr.mxu0 0.0
    %103 = vmatpush1.msra.mxu0 0.0
    %104 = vmatprep.subr.mxu0 0.0
    %105 = vmatpush1.msra.mxu0 0.0
    %106 = vmatprep.subr.mxu0 0.0
    %107 = vmatpush1.msra.mxu0 0.0
    %108 = vmatprep.subr.mxu0 0.0
    %109 = vmatpush1.msra.mxu0 0.0
    %110 = vmatprep.subr.mxu0 0.0
    %111 = vmatpush1.msra.mxu0 0.0
    %112 = vmatprep.subr.mxu0 0.0
    %113 = vmatpush1.msra.mxu0 0.0
    %114 = vmatprep.subr.mxu0 0.0
    %115 = vmatpush1.msra.mxu0 0.0
    %116 = vmatprep.subr.mxu0 0.0
    %117 = vmatpush1.msra.mxu0 0.0
    %118 = vmatprep.subr.mxu0 0.0
    %119 = vmatpush1.msra.mxu0 0.0
    %120 = vmatprep.subr.mxu0 0.0
    %121 = vmatpush1.msra.mxu0 0.0
    %122 = vmatprep.subr.mxu0 0.0
    %123 = vmatpush1.msra.mxu0 0.0
    %124 = vmatprep.subr.mxu0 0.0
    %125 = vmatpush1.msra.mxu0 0.0
    %126 = vmatprep.subr.mxu0 0.0
    %127 = vmatpush1.msra.mxu0 0.0
    %128 = vmatprep.subr.mxu0 0.0
    %129 = vmatpush1.msra.mxu0 0.0
    %130 = vmatprep.subr.mxu0 0.0
    %131 = vmatpush1.msra.mxu0 0.0
    %132 = vmatprep.subr.mxu0 0.0
    %133 = vmatpush1.msra.mxu0 0.0
    %134 = vmatprep.subr.mxu0 0.0
    %135 = vmatpush1.msra.mxu0 0.0
    %136 = vmatprep.subr.mxu0 0.0
    %137 = vmatpush1.msra.mxu0 0.0
    %138 = vmatprep.subr.mxu0 0.0
    %139 = vmatpush1.msra.mxu0 0.0
    %140 = vmatprep.subr.mxu0 0.0
    %141 = vmatpush1.msra.mxu0 0.0
    %142 = vmatprep.subr.mxu0 0.0
    %143 = vmatpush1.msra.mxu0 0.0
    %144 = vmatprep.mubr.f32.mxu0 0.0
    %145 = vmatmul.mubr.f32.gmra.mrb[0].mxu0 %v59
    %v146 = vpop.f32.mrb[0].mxu0
    %v147 = vadd.f32 %v51, %v146
    %v148 = vpop.f32.mrb[0].mxu0
    %149 = vmatprep.mubr.f32.mxu0 0.0
    %150 = vmatmul.mubr.f32.gmra.mrb[0].mxu0 %v62
    %v151 = vpop.f32.mrb[0].mxu0
    %v152 = vadd.f32 %v52, %v151
    %v153 = vpop.f32.mrb[0].mxu0
    %154 = vmatprep.mubr.f32.mxu0 0.0
    %155 = vmatmul.mubr.f32.gmra.mrb[0].mxu0 %v65
    %v156 = vpop.f32.mrb[0].mxu0
    %v157 = vadd.f32 %v53, %v156
    %v158 = vpop.f32.mrb[0].mxu0
    %159 = vmatprep.mubr.f32.mxu0 0.0
    %160 = vmatmul.mubr.f32.gmra.mrb[0].mxu0 %v68
    %v161 = vpop.f32.mrb[0].mxu0
    %v162 = vadd.f32 %v54, %v161
    %v163 = vpop.f32.mrb[0].mxu0
    %164 = vmatprep.mubr.f32.mxu0 0.0
    %165 = vmatmul.mubr.f32.gmra.mrb[0].mxu0 %v71
    %v166 = vpop.f32.mrb[0].mxu0
    %v167 = vadd.f32 %v55, %v166
    %v168 = vpop.f32.mrb[0].mxu0
    %169 = vmatprep.mubr.f32.mxu0 0.0
    %170 = vmatmul.mubr.f32.gmra.mrb[0].mxu0 %v74
    %v171 = vpop.f32.mrb[0].mxu0
    %v172 = vadd.f32 %v56, %v171
    %v173 = vpop.f32.mrb[0].mxu0
    %174 = vdwg.mxu0
    %v175 = vld [vmem:[%s3] sm:$0xff]
    %v176 = vld [vmem:[%s3 + $0x8] sm:$0xff]
    %v177 = vld [vmem:[%s3 + $0x10] sm:$0xff]
    %v178 = vld [vmem:[%s3 + $0x18] sm:$0xff]
    %v179 = vld [vmem:[%s3 + $0x20] sm:$0xff]
    %v180 = vld [vmem:[%s3 + $0x28] sm:$0xff]
    %v181 = vld [vmem:[%s8] sm:$0xff]
    %vm182 = vcmask 261120
    %v183 = vsel %vm182, %v147, 0.0
    %184 = vadd.xlane.f32.xlu0 %v183
    %v185 = vpop.xlane.xlu0 %184
    %v186 = vsel %vm182, %v152, 0.0
    %187 = vadd.xlane.f32.xlu0 %v186
    %v188 = vpop.xlane.xlu0 %187
    %v189 = vsel %vm182, %v157, 0.0
    %190 = vadd.xlane.f32.xlu0 %v189
    %v191 = vpop.xlane.xlu0 %190
    %v192 = vsel %vm182, %v162, 0.0
    %193 = vadd.xlane.f32.xlu0 %v192
    %v194 = vpop.xlane.xlu0 %193
    %v195 = vsel %vm182, %v167, 0.0
    %196 = vadd.xlane.f32.xlu0 %v195
    %v197 = vpop.xlane.xlu0 %196
    %v198 = vsel %vm182, %v172, 0.0
    %199 = vadd.xlane.f32.xlu0 %v198
    %v200 = vpop.xlane.xlu0 %199
    %v201 = vrcp.pop 32.0
    %v202 = vmul.f32 %v185, %v201
    %v203 = vmul.f32 %v188, %v201
    %v204 = vmul.f32 %v191, %v201
    %v205 = vmul.f32 %v194, %v201
    %v206 = vmul.f32 %v197, %v201
    %v207 = vmul.f32 %v200, %v201
    %v208 = vsub.f32 %v147, %v202
    %v209 = vsub.f32 %v152, %v203
    %v210 = vsub.f32 %v157, %v204
    %v211 = vsub.f32 %v162, %v205
    %v212 = vsub.f32 %v167, %v206
    %v213 = vsub.f32 %v172, %v207
    %v214 = vmul.f32 %v208, %v208
    %v215 = vmul.f32 %v209, %v209
    %v216 = vmul.f32 %v210, %v210
    %v217 = vmul.f32 %v211, %v211
    %v218 = vmul.f32 %v212, %v212
    %v219 = vmul.f32 %v213, %v213
    %v220 = vsel %vm182, %v214, 0.0
    %221 = vadd.xlane.f32.xlu0 %v220
    %v222 = vpop.xlane.xlu0 %221
    %v223 = vsel %vm182, %v215, 0.0
    %224 = vadd.xlane.f32.xlu0 %v223
    %v225 = vpop.xlane.xlu0 %224
    %v226 = vsel %vm182, %v216, 0.0
    %227 = vadd.xlane.f32.xlu0 %v226
    %v228 = vpop.xlane.xlu0 %227
    %v229 = vsel %vm182, %v217, 0.0
    %230 = vadd.xlane.f32.xlu0 %v229
    %v231 = vpop.xlane.xlu0 %230
    %v232 = vsel %vm182, %v218, 0.0
    %233 = vadd.xlane.f32.xlu0 %v232
    %v234 = vpop.xlane.xlu0 %233
    %v235 = vsel %vm182, %v219, 0.0
    %236 = vadd.xlane.f32.xlu0 %v235
    %v237 = vpop.xlane.xlu0 %236
    %v238 = vmul.f32 %v222, %v201
    %v239 = vmul.f32 %v225, %v201
    %v240 = vmul.f32 %v228, %v201
    %v241 = vmul.f32 %v231, %v201
    %v242 = vmul.f32 %v234, %v201
    %v243 = vmul.f32 %v237, %v201
    %v244 = vadd.f32 %v238, 1e-05
    %v245 = vadd.f32 %v239, 1e-05
    %v246 = vadd.f32 %v240, 1e-05
    %v247 = vadd.f32 %v241, 1e-05
    %v248 = vadd.f32 %v242, 1e-05
    %v249 = vadd.f32 %v243, 1e-05
    %v250 = vrsqrt.pop %v244
    %v251 = vrsqrt.pop %v245
    %v252 = vrsqrt.pop %v246
    %v253 = vrsqrt.pop %v247
    %v254 = vrsqrt.pop %v248
    %v255 = vrsqrt.pop %v249
    %v256 = vmul.f32 %v208, %v250
    %v257 = vmul.f32 %v209, %v251
    %v258 = vmul.f32 %v210, %v252
    %v259 = vmul.f32 %v211, %v253
    %v260 = vmul.f32 %v212, %v254
    %v261 = vmul.f32 %v213, %v255
    %v262 = vlaneseq
    %v263 = vshrl.u32 %v262, 7
    %v264 = vsub.s32 0, %v263
    %v265 = vrot.slane %v181, %v264
    %v266 = vmul.f32 %v256, %v265
    %v267 = vmul.f32 %v257, %v265
    %v268 = vmul.f32 %v258, %v265
    %v269 = vmul.f32 %v259, %v265
    %v270 = vmul.f32 %v260, %v265
    %v271 = vmul.f32 %v261, %v265
    %v272 = vlaneseq
    %v273 = vshrl.u32 %v272, 7
    %v274 = vsub.s32 1, %v273
    %v275 = vrot.slane %v181, %v274
    %v276 = vadd.f32 %v266, %v275
    %v277 = vadd.f32 %v267, %v275
    %v278 = vadd.f32 %v268, %v275
    %v279 = vadd.f32 %v269, %v275
    %v280 = vadd.f32 %v270, %v275
    %v281 = vadd.f32 %v271, %v275
    %v282 = vld [vmem:[%s4] sm:$0xff]
    %v283 = vld [vmem:[%s4 + $0x8] sm:$0xff]
    %v284 = vld [vmem:[%s4 + $0x10] sm:$0xff]
    %v285 = vld [vmem:[%s4 + $0x18] sm:$0xff]
    %v286 = vlaneseq
    %v287 = vshrl.u32 %v286, 7
    %v288 = vsub.s32 4, %v287
    %v289 = vrot.slane %v181, %v288
    %v291 = vsel %vm182, %v276, 0
    %v294 = vsel %vm182, %v277, 0
    %v297 = vsel %vm182, %v278, 0
    %v300 = vsel %vm182, %v279, 0
    %v303 = vsel %vm182, %v280, 0
    %v306 = vsel %vm182, %v281, 0
    %308 = vmatprep.subr.mxu0 0.0
    %309 = vmatpush1.msra.mxu0 %v282
    %310 = vmatprep.subr.mxu0 0.0
    %311 = vmatpush1.msra.mxu0 %v283
    %312 = vmatprep.subr.mxu0 0.0
    %313 = vmatpush1.msra.mxu0 %v284
    %314 = vmatprep.subr.mxu0 0.0
    %315 = vmatpush1.msra.mxu0 %v285
    %316 = vmatprep.subr.mxu0 0.0
    %317 = vmatpush1.msra.mxu0 0.0
    %318 = vmatprep.subr.mxu0 0.0
    %319 = vmatpush1.msra.mxu0 0.0
    %320 = vmatprep.subr.mxu0 0.0
    %321 = vmatpush1.msra.mxu0 0.0
    %322 = vmatprep.subr.mxu0 0.0
    %323 = vmatpush1.msra.mxu0 0.0
    %324 = vmatprep.subr.mxu0 0.0
    %325 = vmatpush1.msra.mxu0 0.0
    %326 = vmatprep.subr.mxu0 0.0
    %327 = vmatpush1.msra.mxu0 0.0
    %328 = vmatprep.subr.mxu0 0.0
    %329 = vmatpush1.msra.mxu0 0.0
    %330 = vmatprep.subr.mxu0 0.0
    %331 = vmatpush1.msra.mxu0 0.0
    %332 = vmatprep.subr.mxu0 0.0
    %333 = vmatpush1.msra.mxu0 0.0
    %334 = vmatprep.subr.mxu0 0.0
    %335 = vmatpush1.msra.mxu0 0.0
    %336 = vmatprep.subr.mxu0 0.0
    %337 = vmatpush1.msra.mxu0 0.0
    %338 = vmatprep.subr.mxu0 0.0
    %339 = vmatpush1.msra.mxu0 0.0
    %340 = vmatprep.subr.mxu0 0.0
    %341 = vmatpush1.msra.mxu0 0.0
    %342 = vmatprep.subr.mxu0 0.0
    %343 = vmatpush1.msra.mxu0 0.0
    %344 = vmatprep.subr.mxu0 0.0
    %345 = vmatpush1.msra.mxu0 0.0
    %346 = vmatprep.subr.mxu0 0.0
    %347 = vmatpush1.msra.mxu0 0.0
    %348 = vmatprep.subr.mxu0 0.0
    %349 = vmatpush1.msra.mxu0 0.0
    %350 = vmatprep.subr.mxu0 0.0
    %351 = vmatpush1.msra.mxu0 0.0
    %352 = vmatprep.subr.mxu0 0.0
    %353 = vmatpush1.msra.mxu0 0.0
    %354 = vmatprep.subr.mxu0 0.0
    %355 = vmatpush1.msra.mxu0 0.0
    %356 = vmatprep.subr.mxu0 0.0
    %357 = vmatpush1.msra.mxu0 0.0
    %358 = vmatprep.subr.mxu0 0.0
    %359 = vmatpush1.msra.mxu0 0.0
    %360 = vmatprep.subr.mxu0 0.0
    %361 = vmatpush1.msra.mxu0 0.0
    %362 = vmatprep.subr.mxu0 0.0
    %363 = vmatpush1.msra.mxu0 0.0
    %364 = vmatprep.subr.mxu0 0.0
    %365 = vmatpush1.msra.mxu0 0.0
    %366 = vmatprep.subr.mxu0 0.0
    %367 = vmatpush1.msra.mxu0 0.0
    %368 = vmatprep.subr.mxu0 0.0
    %369 = vmatpush1.msra.mxu0 0.0
    %370 = vmatprep.subr.mxu0 0.0
    %371 = vmatpush1.msra.mxu0 0.0
    %372 = vmatprep.mubr.f32.mxu0 0.0
    %373 = vmatmul.mubr.f32.gmra.mrb[0].mxu0 %v291
    %v374 = vpop.f32.mrb[0].mxu0
    %v375 = vadd.f32 %v289, %v374
    %v376 = vpop.f32.mrb[0].mxu0
    %377 = vmatprep.mubr.f32.mxu0 0.0
    %378 = vmatmul.mubr.f32.gmra.mrb[0].mxu0 %v294
    %v379 = vpop.f32.mrb[0].mxu0
    %v380 = vadd.f32 %v289, %v379
    %v381 = vpop.f32.mrb[0].mxu0
    %382 = vmatprep.mubr.f32.mxu0 0.0
    %383 = vmatmul.mubr.f32.gmra.mrb[0].mxu0 %v297
    %v384 = vpop.f32.mrb[0].mxu0
    %v385 = vadd.f32 %v289, %v384
    %v386 = vpop.f32.mrb[0].mxu0
    %387 = vmatprep.mubr.f32.mxu0 0.0
    %388 = vmatmul.mubr.f32.gmra.mrb[0].mxu0 %v300
    %v389 = vpop.f32.mrb[0].mxu0
    %v390 = vadd.f32 %v289, %v389
    %v391 = vpop.f32.mrb[0].mxu0
    %392 = vmatprep.mubr.f32.mxu0 0.0
    %393 = vmatmul.mubr.f32.gmra.mrb[0].mxu0 %v303
    %v394 = vpop.f32.mrb[0].mxu0
    %v395 = vadd.f32 %v289, %v394
    %v396 = vpop.f32.mrb[0].mxu0
    %397 = vmatprep.mubr.f32.mxu0 0.0
    %398 = vmatmul.mubr.f32.gmra.mrb[0].mxu0 %v306
    %v399 = vpop.f32.mrb[0].mxu0
    %v400 = vadd.f32 %v289, %v399
    %v401 = vpop.f32.mrb[0].mxu0
    %402 = vdwg.mxu0
    %409 = vrot.lane.b32.xlu0 %v375, 96
    %v410 = vpop.permute.xlu0 %409
    %411 = vrot.lane.b32.xlu0 %v380, 96
    %v412 = vpop.permute.xlu0 %411
    %413 = vrot.lane.b32.xlu0 %v385, 96
    %v414 = vpop.permute.xlu0 %413
    %415 = vrot.lane.b32.xlu0 %v390, 96
    %v416 = vpop.permute.xlu0 %415
    %417 = vrot.lane.b32.xlu0 %v395, 96
    %v418 = vpop.permute.xlu0 %417
    %419 = vrot.lane.b32.xlu0 %v400, 96
    %v420 = vpop.permute.xlu0 %419
    %vm421 = vcmask 64512
    %v422 = vsel %vm421, %v375, 0
    %v424 = vsel %vm421, %v380, 0
    %v426 = vsel %vm421, %v385, 0
    %v428 = vsel %vm421, %v390, 0
    %v430 = vsel %vm421, %v395, 0
    %v432 = vsel %vm421, %v400, 0
    %v434 = vsel %vm421, %v410, 0
    %v436 = vsel %vm421, %v412, 0
    %v438 = vsel %vm421, %v414, 0
    %v440 = vsel %vm421, %v416, 0
    %v442 = vsel %vm421, %v418, 0
    %v444 = vsel %vm421, %v420, 0
    %446 = vmatprep.subr.mxu0 0.0
    %447 = vmatpush1.xpose.msra.mxu0 %v434
    %448 = vmatprep.subr.mxu0 0.0
    %449 = vmatpush1.xpose.msra.mxu0 %v436
    %450 = vmatprep.subr.mxu0 0.0
    %451 = vmatpush1.xpose.msra.mxu0 %v438
    %452 = vmatprep.subr.mxu0 0.0
    %453 = vmatpush1.xpose.msra.mxu0 %v440
    %454 = vmatprep.subr.mxu0 0.0
    %455 = vmatpush1.xpose.msra.mxu0 %v442
    %456 = vmatprep.subr.mxu0 0.0
    %457 = vmatpush1.xpose.msra.mxu0 %v444
    %458 = vmatprep.subr.mxu0 0.0
    %459 = vmatpush1.xpose.msra.mxu0 0.0
    %460 = vmatprep.subr.mxu0 0.0
    %461 = vmatpush1.xpose.msra.mxu0 0.0
    %462 = vmatprep.subr.mxu0 0.0
    %463 = vmatpush1.xpose.msra.mxu0 0.0
    %464 = vmatprep.subr.mxu0 0.0
    %465 = vmatpush1.xpose.msra.mxu0 0.0
    %466 = vmatprep.subr.mxu0 0.0
    %467 = vmatpush1.xpose.msra.mxu0 0.0
    %468 = vmatprep.subr.mxu0 0.0
    %469 = vmatpush1.xpose.msra.mxu0 0.0
    %470 = vmatprep.subr.mxu0 0.0
    %471 = vmatpush1.xpose.msra.mxu0 0.0
    %472 = vmatprep.subr.mxu0 0.0
    %473 = vmatpush1.xpose.msra.mxu0 0.0
    %474 = vmatprep.subr.mxu0 0.0
    %475 = vmatpush1.xpose.msra.mxu0 0.0
    %476 = vmatprep.subr.mxu0 0.0
    %477 = vmatpush1.xpose.msra.mxu0 0.0
    %478 = vmatprep.subr.mxu0 0.0
    %479 = vmatpush1.xpose.msra.mxu0 0.0
    %480 = vmatprep.subr.mxu0 0.0
    %481 = vmatpush1.xpose.msra.mxu0 0.0
    %482 = vmatprep.subr.mxu0 0.0
    %483 = vmatpush1.xpose.msra.mxu0 0.0
    %484 = vmatprep.subr.mxu0 0.0
    %485 = vmatpush1.xpose.msra.mxu0 0.0
    %486 = vmatprep.subr.mxu0 0.0
    %487 = vmatpush1.xpose.msra.mxu0 0.0
    %488 = vmatprep.subr.mxu0 0.0
    %489 = vmatpush1.xpose.msra.mxu0 0.0
    %490 = vmatprep.subr.mxu0 0.0
    %491 = vmatpush1.xpose.msra.mxu0 0.0
    %492 = vmatprep.subr.mxu0 0.0
    %493 = vmatpush1.xpose.msra.mxu0 0.0
    %494 = vmatprep.subr.mxu0 0.0
    %495 = vmatpush1.xpose.msra.mxu0 0.0
    %496 = vmatprep.subr.mxu0 0.0
    %497 = vmatpush1.xpose.msra.mxu0 0.0
    %498 = vmatprep.subr.mxu0 0.0
    %499 = vmatpush1.xpose.msra.mxu0 0.0
    %500 = vmatprep.subr.mxu0 0.0
    %501 = vmatpush1.xpose.msra.mxu0 0.0
    %502 = vmatprep.subr.mxu0 0.0
    %503 = vmatpush1.xpose.msra.mxu0 0.0
    %504 = vmatprep.subr.mxu0 0.0
    %505 = vmatpush1.xpose.msra.mxu0 0.0
    %506 = vmatprep.subr.mxu0 0.0
    %507 = vmatpush1.xpose.msra.mxu0 0.0
    %508 = vmatprep.subr.mxu0 0.0
    %509 = vmatpush1.xpose.msra.mxu0 0.0
    %510 = vmatprep.mubr.f32.mxu0 0.0
    %511 = vmatmul.mubr.f32.gmra.mrb[0].mxu0 %v422
    %v512 = vpop.f32.mrb[0].mxu0
    %v513 = vadd.f32 %v175, %v512
    %v514 = vpop.f32.mrb[0].mxu0
    %515 = vmatprep.mubr.f32.mxu0 0.0
    %516 = vmatmul.mubr.f32.gmra.mrb[0].mxu0 %v424
    %v517 = vpop.f32.mrb[0].mxu0
    %v518 = vadd.f32 %v176, %v517
    %v519 = vpop.f32.mrb[0].mxu0
    %520 = vmatprep.mubr.f32.mxu0 0.0
    %521 = vmatmul.mubr.f32.gmra.mrb[0].mxu0 %v426
    %v522 = vpop.f32.mrb[0].mxu0
    %v523 = vadd.f32 %v177, %v522
    %v524 = vpop.f32.mrb[0].mxu0
    %525 = vmatprep.mubr.f32.mxu0 0.0
    %526 = vmatmul.mubr.f32.gmra.mrb[0].mxu0 %v428
    %v527 = vpop.f32.mrb[0].mxu0
    %v528 = vadd.f32 %v178, %v527
    %v529 = vpop.f32.mrb[0].mxu0
    %530 = vmatprep.mubr.f32.mxu0 0.0
    %531 = vmatmul.mubr.f32.gmra.mrb[0].mxu0 %v430
    %v532 = vpop.f32.mrb[0].mxu0
    %v533 = vadd.f32 %v179, %v532
    %v534 = vpop.f32.mrb[0].mxu0
    %535 = vmatprep.mubr.f32.mxu0 0.0
    %536 = vmatmul.mubr.f32.gmra.mrb[0].mxu0 %v432
    %v537 = vpop.f32.mrb[0].mxu0
    %v538 = vadd.f32 %v180, %v537
    %v539 = vpop.f32.mrb[0].mxu0
    %540 = vdwg.mxu0
    %vm541 = vcmask 392192
    %v542 = vsel %vm541, %v513, -inf
    %543 = vmax.xlane.f32.xlu0 %v542
    %v544 = vpop.xlane.xlu0 %543
    %v545 = vsel %vm541, %v518, -inf
    %546 = vmax.xlane.f32.xlu0 %v545
    %v547 = vpop.xlane.xlu0 %546
    %v548 = vsel %vm541, %v523, -inf
    %549 = vmax.xlane.f32.xlu0 %v548
    %v550 = vpop.xlane.xlu0 %549
    %v551 = vsel %vm541, %v528, -inf
    %552 = vmax.xlane.f32.xlu0 %v551
    %v553 = vpop.xlane.xlu0 %552
    %v554 = vsel %vm541, %v533, -inf
    %555 = vmax.xlane.f32.xlu0 %v554
    %v556 = vpop.xlane.xlu0 %555
    %v557 = vsel %vm541, %v538, -inf
    %558 = vmax.xlane.f32.xlu0 %v557
    %v559 = vpop.xlane.xlu0 %558
    %v560 = vsub.f32 %v513, %v544
    %v561 = vsub.f32 %v518, %v547
    %v562 = vsub.f32 %v523, %v550
    %v563 = vsub.f32 %v528, %v553
    %v564 = vsub.f32 %v533, %v556
    %v565 = vsub.f32 %v538, %v559
    %v566 = vmul.f32 %v560, 1.442695
    %v567 = vpow.pop %v566
    %v568 = vmul.f32 %v561, 1.442695
    %v569 = vpow.pop %v568
    %v570 = vmul.f32 %v562, 1.442695
    %v571 = vpow.pop %v570
    %v572 = vmul.f32 %v563, 1.442695
    %v573 = vpow.pop %v572
    %v574 = vmul.f32 %v564, 1.442695
    %v575 = vpow.pop %v574
    %v576 = vmul.f32 %v565, 1.442695
    %v577 = vpow.pop %v576
    %v578 = vsel %vm541, %v567, 0.0
    %579 = vadd.xlane.f32.xlu0 %v578
    %v580 = vpop.xlane.xlu0 %579
    %v581 = vsel %vm541, %v569, 0.0
    %582 = vadd.xlane.f32.xlu0 %v581
    %v583 = vpop.xlane.xlu0 %582
    %v584 = vsel %vm541, %v571, 0.0
    %585 = vadd.xlane.f32.xlu0 %v584
    %v586 = vpop.xlane.xlu0 %585
    %v587 = vsel %vm541, %v573, 0.0
    %588 = vadd.xlane.f32.xlu0 %v587
    %v589 = vpop.xlane.xlu0 %588
    %v590 = vsel %vm541, %v575, 0.0
    %591 = vadd.xlane.f32.xlu0 %v590
    %v592 = vpop.xlane.xlu0 %591
    %v593 = vsel %vm541, %v577, 0.0
    %594 = vadd.xlane.f32.xlu0 %v593
    %v595 = vpop.xlane.xlu0 %594
    %596 = vrot.lane.b32.xlu0 %v375, 64
    %v597 = vpop.permute.xlu0 %596
    %598 = vrot.lane.b32.xlu0 %v380, 64
    %v599 = vpop.permute.xlu0 %598
    %600 = vrot.lane.b32.xlu0 %v385, 64
    %v601 = vpop.permute.xlu0 %600
    %602 = vrot.lane.b32.xlu0 %v390, 64
    %v603 = vpop.permute.xlu0 %602
    %604 = vrot.lane.b32.xlu0 %v395, 64
    %v605 = vpop.permute.xlu0 %604
    %606 = vrot.lane.b32.xlu0 %v400, 64
    %v607 = vpop.permute.xlu0 %606
    %v615 = vsel %vm541, %v567, 0
    %v618 = vsel %vm541, %v569, 0
    %v621 = vsel %vm541, %v571, 0
    %v624 = vsel %vm541, %v573, 0
    %v627 = vsel %vm541, %v575, 0
    %v630 = vsel %vm541, %v577, 0
    %632 = vmatprep.subr.mxu0 0.0
    %633 = vmatpush1.msra.mxu0 %v597
    %634 = vmatprep.subr.mxu0 0.0
    %635 = vmatpush1.msra.mxu0 %v599
    %636 = vmatprep.subr.mxu0 0.0
    %637 = vmatpush1.msra.mxu0 %v601
    %638 = vmatprep.subr.mxu0 0.0
    %639 = vmatpush1.msra.mxu0 %v603
    %640 = vmatprep.subr.mxu0 0.0
    %641 = vmatpush1.msra.mxu0 %v605
    %642 = vmatprep.subr.mxu0 0.0
    %643 = vmatpush1.msra.mxu0 %v607
    %644 = vmatprep.subr.mxu0 0.0
    %645 = vmatpush1.msra.mxu0 0.0
    %646 = vmatprep.subr.mxu0 0.0
    %647 = vmatpush1.msra.mxu0 0.0
    %648 = vmatprep.subr.mxu0 0.0
    %649 = vmatpush1.msra.mxu0 0.0
    %650 = vmatprep.subr.mxu0 0.0
    %651 = vmatpush1.msra.mxu0 0.0
    %652 = vmatprep.subr.mxu0 0.0
    %653 = vmatpush1.msra.mxu0 0.0
    %654 = vmatprep.subr.mxu0 0.0
    %655 = vmatpush1.msra.mxu0 0.0
    %656 = vmatprep.subr.mxu0 0.0
    %657 = vmatpush1.msra.mxu0 0.0
    %658 = vmatprep.subr.mxu0 0.0
    %659 = vmatpush1.msra.mxu0 0.0
    %660 = vmatprep.subr.mxu0 0.0
    %661 = vmatpush1.msra.mxu0 0.0
    %662 = vmatprep.subr.mxu0 0.0
    %663 = vmatpush1.msra.mxu0 0.0
    %664 = vmatprep.subr.mxu0 0.0
    %665 = vmatpush1.msra.mxu0 0.0
    %666 = vmatprep.subr.mxu0 0.0
    %667 = vmatpush1.msra.mxu0 0.0
    %668 = vmatprep.subr.mxu0 0.0
    %669 = vmatpush1.msra.mxu0 0.0
    %670 = vmatprep.subr.mxu0 0.0
    %671 = vmatpush1.msra.mxu0 0.0
    %672 = vmatprep.subr.mxu0 0.0
    %673 = vmatpush1.msra.mxu0 0.0
    %674 = vmatprep.subr.mxu0 0.0
    %675 = vmatpush1.msra.mxu0 0.0
    %676 = vmatprep.subr.mxu0 0.0
    %677 = vmatpush1.msra.mxu0 0.0
    %678 = vmatprep.subr.mxu0 0.0
    %679 = vmatpush1.msra.mxu0 0.0
    %680 = vmatprep.subr.mxu0 0.0
    %681 = vmatpush1.msra.mxu0 0.0
    %682 = vmatprep.subr.mxu0 0.0
    %683 = vmatpush1.msra.mxu0 0.0
    %684 = vmatprep.subr.mxu0 0.0
    %685 = vmatpush1.msra.mxu0 0.0
    %686 = vmatprep.subr.mxu0 0.0
    %687 = vmatpush1.msra.mxu0 0.0
    %688 = vmatprep.subr.mxu0 0.0
    %689 = vmatpush1.msra.mxu0 0.0
    %690 = vmatprep.subr.mxu0 0.0
    %691 = vmatpush1.msra.mxu0 0.0
    %692 = vmatprep.subr.mxu0 0.0
    %693 = vmatpush1.msra.mxu0 0.0
    %694 = vmatprep.subr.mxu0 0.0
    %695 = vmatpush1.msra.mxu0 0.0
    %696 = vmatprep.mubr.f32.mxu0 0.0
    %697 = vmatmul.mubr.f32.gmra.mrb[0].mxu0 %v615
    %v698 = vpop.f32.mrb[0].mxu0
    %v699 = vadd.f32 0.0, %v698
    %v700 = vpop.f32.mrb[0].mxu0
    %701 = vmatprep.mubr.f32.mxu0 0.0
    %702 = vmatmul.mubr.f32.gmra.mrb[0].mxu0 %v618
    %v703 = vpop.f32.mrb[0].mxu0
    %v704 = vadd.f32 0.0, %v703
    %v705 = vpop.f32.mrb[0].mxu0
    %706 = vmatprep.mubr.f32.mxu0 0.0
    %707 = vmatmul.mubr.f32.gmra.mrb[0].mxu0 %v621
    %v708 = vpop.f32.mrb[0].mxu0
    %v709 = vadd.f32 0.0, %v708
    %v710 = vpop.f32.mrb[0].mxu0
    %711 = vmatprep.mubr.f32.mxu0 0.0
    %712 = vmatmul.mubr.f32.gmra.mrb[0].mxu0 %v624
    %v713 = vpop.f32.mrb[0].mxu0
    %v714 = vadd.f32 0.0, %v713
    %v715 = vpop.f32.mrb[0].mxu0
    %716 = vmatprep.mubr.f32.mxu0 0.0
    %717 = vmatmul.mubr.f32.gmra.mrb[0].mxu0 %v627
    %v718 = vpop.f32.mrb[0].mxu0
    %v719 = vadd.f32 0.0, %v718
    %v720 = vpop.f32.mrb[0].mxu0
    %721 = vmatprep.mubr.f32.mxu0 0.0
    %722 = vmatmul.mubr.f32.gmra.mrb[0].mxu0 %v630
    %v723 = vpop.f32.mrb[0].mxu0
    %v724 = vadd.f32 0.0, %v723
    %v725 = vpop.f32.mrb[0].mxu0
    %726 = vdwg.mxu0
    %v727 = vrcp.pop %v580
    %v728 = vrcp.pop %v583
    %v729 = vrcp.pop %v586
    %v730 = vrcp.pop %v589
    %v731 = vrcp.pop %v592
    %v732 = vrcp.pop %v595
    %v733 = vmul.f32 %v699, %v727
    %v734 = vmul.f32 %v704, %v728
    %v735 = vmul.f32 %v709, %v729
    %v736 = vmul.f32 %v714, %v730
    %v737 = vmul.f32 %v719, %v731
    %v738 = vmul.f32 %v724, %v732
    %739 = vrot.lane.b32.xlu0 %v375, 120
    %v740 = vpop.permute.xlu0 %739
    %741 = vrot.lane.b32.xlu0 %v380, 120
    %v742 = vpop.permute.xlu0 %741
    %743 = vrot.lane.b32.xlu0 %v385, 120
    %v744 = vpop.permute.xlu0 %743
    %745 = vrot.lane.b32.xlu0 %v390, 120
    %v746 = vpop.permute.xlu0 %745
    %747 = vrot.lane.b32.xlu0 %v395, 120
    %v748 = vpop.permute.xlu0 %747
    %749 = vrot.lane.b32.xlu0 %v400, 120
    %v750 = vpop.permute.xlu0 %749
    %751 = vrot.lane.b32.xlu0 %v375, 88
    %v752 = vpop.permute.xlu0 %751
    %753 = vrot.lane.b32.xlu0 %v380, 88
    %v754 = vpop.permute.xlu0 %753
    %755 = vrot.lane.b32.xlu0 %v385, 88
    %v756 = vpop.permute.xlu0 %755
    %757 = vrot.lane.b32.xlu0 %v390, 88
    %v758 = vpop.permute.xlu0 %757
    %759 = vrot.lane.b32.xlu0 %v395, 88
    %v760 = vpop.permute.xlu0 %759
    %761 = vrot.lane.b32.xlu0 %v400, 88
    %v762 = vpop.permute.xlu0 %761
    %v763 = vsel %vm421, %v740, 0
    %v765 = vsel %vm421, %v742, 0
    %v767 = vsel %vm421, %v744, 0
    %v769 = vsel %vm421, %v746, 0
    %v771 = vsel %vm421, %v748, 0
    %v773 = vsel %vm421, %v750, 0
    %v775 = vsel %vm421, %v752, 0
    %v777 = vsel %vm421, %v754, 0
    %v779 = vsel %vm421, %v756, 0
    %v781 = vsel %vm421, %v758, 0
    %v783 = vsel %vm421, %v760, 0
    %v785 = vsel %vm421, %v762, 0
    %787 = vmatprep.subr.mxu0 0.0
    %788 = vmatpush1.xpose.msra.mxu0 %v775
    %789 = vmatprep.subr.mxu0 0.0
    %790 = vmatpush1.xpose.msra.mxu0 %v777
    %791 = vmatprep.subr.mxu0 0.0
    %792 = vmatpush1.xpose.msra.mxu0 %v779
    %793 = vmatprep.subr.mxu0 0.0
    %794 = vmatpush1.xpose.msra.mxu0 %v781
    %795 = vmatprep.subr.mxu0 0.0
    %796 = vmatpush1.xpose.msra.mxu0 %v783
    %797 = vmatprep.subr.mxu0 0.0
    %798 = vmatpush1.xpose.msra.mxu0 %v785
    %799 = vmatprep.subr.mxu0 0.0
    %800 = vmatpush1.xpose.msra.mxu0 0.0
    %801 = vmatprep.subr.mxu0 0.0
    %802 = vmatpush1.xpose.msra.mxu0 0.0
    %803 = vmatprep.subr.mxu0 0.0
    %804 = vmatpush1.xpose.msra.mxu0 0.0
    %805 = vmatprep.subr.mxu0 0.0
    %806 = vmatpush1.xpose.msra.mxu0 0.0
    %807 = vmatprep.subr.mxu0 0.0
    %808 = vmatpush1.xpose.msra.mxu0 0.0
    %809 = vmatprep.subr.mxu0 0.0
    %810 = vmatpush1.xpose.msra.mxu0 0.0
    %811 = vmatprep.subr.mxu0 0.0
    %812 = vmatpush1.xpose.msra.mxu0 0.0
    %813 = vmatprep.subr.mxu0 0.0
    %814 = vmatpush1.xpose.msra.mxu0 0.0
    %815 = vmatprep.subr.mxu0 0.0
    %816 = vmatpush1.xpose.msra.mxu0 0.0
    %817 = vmatprep.subr.mxu0 0.0
    %818 = vmatpush1.xpose.msra.mxu0 0.0
    %819 = vmatprep.subr.mxu0 0.0
    %820 = vmatpush1.xpose.msra.mxu0 0.0
    %821 = vmatprep.subr.mxu0 0.0
    %822 = vmatpush1.xpose.msra.mxu0 0.0
    %823 = vmatprep.subr.mxu0 0.0
    %824 = vmatpush1.xpose.msra.mxu0 0.0
    %825 = vmatprep.subr.mxu0 0.0
    %826 = vmatpush1.xpose.msra.mxu0 0.0
    %827 = vmatprep.subr.mxu0 0.0
    %828 = vmatpush1.xpose.msra.mxu0 0.0
    %829 = vmatprep.subr.mxu0 0.0
    %830 = vmatpush1.xpose.msra.mxu0 0.0
    %831 = vmatprep.subr.mxu0 0.0
    %832 = vmatpush1.xpose.msra.mxu0 0.0
    %833 = vmatprep.subr.mxu0 0.0
    %834 = vmatpush1.xpose.msra.mxu0 0.0
    %835 = vmatprep.subr.mxu0 0.0
    %836 = vmatpush1.xpose.msra.mxu0 0.0
    %837 = vmatprep.subr.mxu0 0.0
    %838 = vmatpush1.xpose.msra.mxu0 0.0
    %839 = vmatprep.subr.mxu0 0.0
    %840 = vmatpush1.xpose.msra.mxu0 0.0
    %841 = vmatprep.subr.mxu0 0.0
    %842 = vmatpush1.xpose.msra.mxu0 0.0
    %843 = vmatprep.subr.mxu0 0.0
    %844 = vmatpush1.xpose.msra.mxu0 0.0
    %845 = vmatprep.subr.mxu0 0.0
    %846 = vmatpush1.xpose.msra.mxu0 0.0
    %847 = vmatprep.subr.mxu0 0.0
    %848 = vmatpush1.xpose.msra.mxu0 0.0
    %849 = vmatprep.subr.mxu0 0.0
    %850 = vmatpush1.xpose.msra.mxu0 0.0
    %851 = vmatprep.mubr.f32.mxu0 0.0
    %852 = vmatmul.mubr.f32.gmra.mrb[0].mxu0 %v763
    %v853 = vpop.f32.mrb[0].mxu0
    %v854 = vadd.f32 %v175, %v853
    %v855 = vpop.f32.mrb[0].mxu0
    %856 = vmatprep.mubr.f32.mxu0 0.0
    %857 = vmatmul.mubr.f32.gmra.mrb[0].mxu0 %v765
    %v858 = vpop.f32.mrb[0].mxu0
    %v859 = vadd.f32 %v176, %v858
    %v860 = vpop.f32.mrb[0].mxu0
    %861 = vmatprep.mubr.f32.mxu0 0.0
    %862 = vmatmul.mubr.f32.gmra.mrb[0].mxu0 %v767
    %v863 = vpop.f32.mrb[0].mxu0
    %v864 = vadd.f32 %v177, %v863
    %v865 = vpop.f32.mrb[0].mxu0
    %866 = vmatprep.mubr.f32.mxu0 0.0
    %867 = vmatmul.mubr.f32.gmra.mrb[0].mxu0 %v769
    %v868 = vpop.f32.mrb[0].mxu0
    %v869 = vadd.f32 %v178, %v868
    %v870 = vpop.f32.mrb[0].mxu0
    %871 = vmatprep.mubr.f32.mxu0 0.0
    %872 = vmatmul.mubr.f32.gmra.mrb[0].mxu0 %v771
    %v873 = vpop.f32.mrb[0].mxu0
    %v874 = vadd.f32 %v179, %v873
    %v875 = vpop.f32.mrb[0].mxu0
    %876 = vmatprep.mubr.f32.mxu0 0.0
    %877 = vmatmul.mubr.f32.gmra.mrb[0].mxu0 %v773
    %v878 = vpop.f32.mrb[0].mxu0
    %v879 = vadd.f32 %v180, %v878
    %v880 = vpop.f32.mrb[0].mxu0
    %881 = vdwg.mxu0
    %v882 = vsel %vm541, %v854, -inf
    %883 = vmax.xlane.f32.xlu0 %v882
    %v884 = vpop.xlane.xlu0 %883
    %v885 = vsel %vm541, %v859, -inf
    %886 = vmax.xlane.f32.xlu0 %v885
    %v887 = vpop.xlane.xlu0 %886
    %v888 = vsel %vm541, %v864, -inf
    %889 = vmax.xlane.f32.xlu0 %v888
    %v890 = vpop.xlane.xlu0 %889
    %v891 = vsel %vm541, %v869, -inf
    %892 = vmax.xlane.f32.xlu0 %v891
    %v893 = vpop.xlane.xlu0 %892
    %v894 = vsel %vm541, %v874, -inf
    %895 = vmax.xlane.f32.xlu0 %v894
    %v896 = vpop.xlane.xlu0 %895
    %v897 = vsel %vm541, %v879, -inf
    %898 = vmax.xlane.f32.xlu0 %v897
    %v899 = vpop.xlane.xlu0 %898
    %v900 = vsub.f32 %v854, %v884
    %v901 = vsub.f32 %v859, %v887
    %v902 = vsub.f32 %v864, %v890
    %v903 = vsub.f32 %v869, %v893
    %v904 = vsub.f32 %v874, %v896
    %v905 = vsub.f32 %v879, %v899
    %v906 = vmul.f32 %v900, 1.442695
    %v907 = vpow.pop %v906
    %v908 = vmul.f32 %v901, 1.442695
    %v909 = vpow.pop %v908
    %v910 = vmul.f32 %v902, 1.442695
    %v911 = vpow.pop %v910
    %v912 = vmul.f32 %v903, 1.442695
    %v913 = vpow.pop %v912
    %v914 = vmul.f32 %v904, 1.442695
    %v915 = vpow.pop %v914
    %v916 = vmul.f32 %v905, 1.442695
    %v917 = vpow.pop %v916
    %v918 = vsel %vm541, %v907, 0.0
    %919 = vadd.xlane.f32.xlu0 %v918
    %v920 = vpop.xlane.xlu0 %919
    %v921 = vsel %vm541, %v909, 0.0
    %922 = vadd.xlane.f32.xlu0 %v921
    %v923 = vpop.xlane.xlu0 %922
    %v924 = vsel %vm541, %v911, 0.0
    %925 = vadd.xlane.f32.xlu0 %v924
    %v926 = vpop.xlane.xlu0 %925
    %v927 = vsel %vm541, %v913, 0.0
    %928 = vadd.xlane.f32.xlu0 %v927
    %v929 = vpop.xlane.xlu0 %928
    %v930 = vsel %vm541, %v915, 0.0
    %931 = vadd.xlane.f32.xlu0 %v930
    %v932 = vpop.xlane.xlu0 %931
    %v933 = vsel %vm541, %v917, 0.0
    %934 = vadd.xlane.f32.xlu0 %v933
    %v935 = vpop.xlane.xlu0 %934
    %936 = vrot.lane.b32.xlu0 %v375, 56
    %v937 = vpop.permute.xlu0 %936
    %938 = vrot.lane.b32.xlu0 %v380, 56
    %v939 = vpop.permute.xlu0 %938
    %940 = vrot.lane.b32.xlu0 %v385, 56
    %v941 = vpop.permute.xlu0 %940
    %942 = vrot.lane.b32.xlu0 %v390, 56
    %v943 = vpop.permute.xlu0 %942
    %944 = vrot.lane.b32.xlu0 %v395, 56
    %v945 = vpop.permute.xlu0 %944
    %946 = vrot.lane.b32.xlu0 %v400, 56
    %v947 = vpop.permute.xlu0 %946
    %v955 = vsel %vm541, %v907, 0
    %v958 = vsel %vm541, %v909, 0
    %v961 = vsel %vm541, %v911, 0
    %v964 = vsel %vm541, %v913, 0
    %v967 = vsel %vm541, %v915, 0
    %v970 = vsel %vm541, %v917, 0
    %972 = vmatprep.subr.mxu0 0.0
    %973 = vmatpush1.msra.mxu0 %v937
    %974 = vmatprep.subr.mxu0 0.0
    %975 = vmatpush1.msra.mxu0 %v939
    %976 = vmatprep.subr.mxu0 0.0
    %977 = vmatpush1.msra.mxu0 %v941
    %978 = vmatprep.subr.mxu0 0.0
    %979 = vmatpush1.msra.mxu0 %v943
    %980 = vmatprep.subr.mxu0 0.0
    %981 = vmatpush1.msra.mxu0 %v945
    %982 = vmatprep.subr.mxu0 0.0
    %983 = vmatpush1.msra.mxu0 %v947
    %984 = vmatprep.subr.mxu0 0.0
    %985 = vmatpush1.msra.mxu0 0.0
    %986 = vmatprep.subr.mxu0 0.0
    %987 = vmatpush1.msra.mxu0 0.0
    %988 = vmatprep.subr.mxu0 0.0
    %989 = vmatpush1.msra.mxu0 0.0
    %990 = vmatprep.subr.mxu0 0.0
    %991 = vmatpush1.msra.mxu0 0.0
    %992 = vmatprep.subr.mxu0 0.0
    %993 = vmatpush1.msra.mxu0 0.0
    %994 = vmatprep.subr.mxu0 0.0
    %995 = vmatpush1.msra.mxu0 0.0
    %996 = vmatprep.subr.mxu0 0.0
    %997 = vmatpush1.msra.mxu0 0.0
    %998 = vmatprep.subr.mxu0 0.0
    %999 = vmatpush1.msra.mxu0 0.0
    %1000 = vmatprep.subr.mxu0 0.0
    %1001 = vmatpush1.msra.mxu0 0.0
    %1002 = vmatprep.subr.mxu0 0.0
    %1003 = vmatpush1.msra.mxu0 0.0
    %1004 = vmatprep.subr.mxu0 0.0
    %1005 = vmatpush1.msra.mxu0 0.0
    %1006 = vmatprep.subr.mxu0 0.0
    %1007 = vmatpush1.msra.mxu0 0.0
    %1008 = vmatprep.subr.mxu0 0.0
    %1009 = vmatpush1.msra.mxu0 0.0
    %1010 = vmatprep.subr.mxu0 0.0
    %1011 = vmatpush1.msra.mxu0 0.0
    %1012 = vmatprep.subr.mxu0 0.0
    %1013 = vmatpush1.msra.mxu0 0.0
    %1014 = vmatprep.subr.mxu0 0.0
    %1015 = vmatpush1.msra.mxu0 0.0
    %1016 = vmatprep.subr.mxu0 0.0
    %1017 = vmatpush1.msra.mxu0 0.0
    %1018 = vmatprep.subr.mxu0 0.0
    %1019 = vmatpush1.msra.mxu0 0.0
    %1020 = vmatprep.subr.mxu0 0.0
    %1021 = vmatpush1.msra.mxu0 0.0
    %1022 = vmatprep.subr.mxu0 0.0
    %1023 = vmatpush1.msra.mxu0 0.0
    %1024 = vmatprep.subr.mxu0 0.0
    %1025 = vmatpush1.msra.mxu0 0.0
    %1026 = vmatprep.subr.mxu0 0.0
    %1027 = vmatpush1.msra.mxu0 0.0
    %1028 = vmatprep.subr.mxu0 0.0
    %1029 = vmatpush1.msra.mxu0 0.0
    %1030 = vmatprep.subr.mxu0 0.0
    %1031 = vmatpush1.msra.mxu0 0.0
    %1032 = vmatprep.subr.mxu0 0.0
    %1033 = vmatpush1.msra.mxu0 0.0
    %1034 = vmatprep.subr.mxu0 0.0
    %1035 = vmatpush1.msra.mxu0 0.0
    %1036 = vmatprep.mubr.f32.mxu0 0.0
    %1037 = vmatmul.mubr.f32.gmra.mrb[0].mxu0 %v955
    %v1038 = vpop.f32.mrb[0].mxu0
    %v1039 = vadd.f32 0.0, %v1038
    %v1040 = vpop.f32.mrb[0].mxu0
    %1041 = vmatprep.mubr.f32.mxu0 0.0
    %1042 = vmatmul.mubr.f32.gmra.mrb[0].mxu0 %v958
    %v1043 = vpop.f32.mrb[0].mxu0
    %v1044 = vadd.f32 0.0, %v1043
    %v1045 = vpop.f32.mrb[0].mxu0
    %1046 = vmatprep.mubr.f32.mxu0 0.0
    %1047 = vmatmul.mubr.f32.gmra.mrb[0].mxu0 %v961
    %v1048 = vpop.f32.mrb[0].mxu0
    %v1049 = vadd.f32 0.0, %v1048
    %v1050 = vpop.f32.mrb[0].mxu0
    %1051 = vmatprep.mubr.f32.mxu0 0.0
    %1052 = vmatmul.mubr.f32.gmra.mrb[0].mxu0 %v964
    %v1053 = vpop.f32.mrb[0].mxu0
    %v1054 = vadd.f32 0.0, %v1053
    %v1055 = vpop.f32.mrb[0].mxu0
    %1056 = vmatprep.mubr.f32.mxu0 0.0
    %1057 = vmatmul.mubr.f32.gmra.mrb[0].mxu0 %v967
    %v1058 = vpop.f32.mrb[0].mxu0
    %v1059 = vadd.f32 0.0, %v1058
    %v1060 = vpop.f32.mrb[0].mxu0
    %1061 = vmatprep.mubr.f32.mxu0 0.0
    %1062 = vmatmul.mubr.f32.gmra.mrb[0].mxu0 %v970
    %v1063 = vpop.f32.mrb[0].mxu0
    %v1064 = vadd.f32 0.0, %v1063
    %v1065 = vpop.f32.mrb[0].mxu0
    %1066 = vdwg.mxu0
    %v1067 = vrcp.pop %v920
    %v1068 = vrcp.pop %v923
    %v1069 = vrcp.pop %v926
    %v1070 = vrcp.pop %v929
    %v1071 = vrcp.pop %v932
    %v1072 = vrcp.pop %v935
    %v1073 = vmul.f32 %v1039, %v1067
    %v1074 = vmul.f32 %v1044, %v1068
    %v1075 = vmul.f32 %v1049, %v1069
    %v1076 = vmul.f32 %v1054, %v1070
    %v1077 = vmul.f32 %v1059, %v1071
    %v1078 = vmul.f32 %v1064, %v1072
    %1079 = vrot.lane.b32.xlu0 %v375, 112
    %v1080 = vpop.permute.xlu0 %1079
    %1081 = vrot.lane.b32.xlu0 %v380, 112
    %v1082 = vpop.permute.xlu0 %1081
    %1083 = vrot.lane.b32.xlu0 %v385, 112
    %v1084 = vpop.permute.xlu0 %1083
    %1085 = vrot.lane.b32.xlu0 %v390, 112
    %v1086 = vpop.permute.xlu0 %1085
    %1087 = vrot.lane.b32.xlu0 %v395, 112
    %v1088 = vpop.permute.xlu0 %1087
    %1089 = vrot.lane.b32.xlu0 %v400, 112
    %v1090 = vpop.permute.xlu0 %1089
    %1091 = vrot.lane.b32.xlu0 %v375, 80
    %v1092 = vpop.permute.xlu0 %1091
    %1093 = vrot.lane.b32.xlu0 %v380, 80
    %v1094 = vpop.permute.xlu0 %1093
    %1095 = vrot.lane.b32.xlu0 %v385, 80
    %v1096 = vpop.permute.xlu0 %1095
    %1097 = vrot.lane.b32.xlu0 %v390, 80
    %v1098 = vpop.permute.xlu0 %1097
    %1099 = vrot.lane.b32.xlu0 %v395, 80
    %v1100 = vpop.permute.xlu0 %1099
    %1101 = vrot.lane.b32.xlu0 %v400, 80
    %v1102 = vpop.permute.xlu0 %1101
    %v1103 = vsel %vm421, %v1080, 0
    %v1105 = vsel %vm421, %v1082, 0
    %v1107 = vsel %vm421, %v1084, 0
    %v1109 = vsel %vm421, %v1086, 0
    %v1111 = vsel %vm421, %v1088, 0
    %v1113 = vsel %vm421, %v1090, 0
    %v1115 = vsel %vm421, %v1092, 0
    %v1117 = vsel %vm421, %v1094, 0
    %v1119 = vsel %vm421, %v1096, 0
    %v1121 = vsel %vm421, %v1098, 0
    %v1123 = vsel %vm421, %v1100, 0
    %v1125 = vsel %vm421, %v1102, 0
    %1127 = vmatprep.subr.mxu0 0.0
    %1128 = vmatpush1.xpose.msra.mxu0 %v1115
    %1129 = vmatprep.subr.mxu0 0.0
    %1130 = vmatpush1.xpose.msra.mxu0 %v1117
    %1131 = vmatprep.subr.mxu0 0.0
    %1132 = vmatpush1.xpose.msra.mxu0 %v1119
    %1133 = vmatprep.subr.mxu0 0.0
    %1134 = vmatpush1.xpose.msra.mxu0 %v1121
    %1135 = vmatprep.subr.mxu0 0.0
    %1136 = vmatpush1.xpose.msra.mxu0 %v1123
    %1137 = vmatprep.subr.mxu0 0.0
    %1138 = vmatpush1.xpose.msra.mxu0 %v1125
    %1139 = vmatprep.subr.mxu0 0.0
    %1140 = vmatpush1.xpose.msra.mxu0 0.0
    %1141 = vmatprep.subr.mxu0 0.0
    %1142 = vmatpush1.xpose.msra.mxu0 0.0
    %1143 = vmatprep.subr.mxu0 0.0
    %1144 = vmatpush1.xpose.msra.mxu0 0.0
    %1145 = vmatprep.subr.mxu0 0.0
    %1146 = vmatpush1.xpose.msra.mxu0 0.0
    %1147 = vmatprep.subr.mxu0 0.0
    %1148 = vmatpush1.xpose.msra.mxu0 0.0
    %1149 = vmatprep.subr.mxu0 0.0
    %1150 = vmatpush1.xpose.msra.mxu0 0.0
    %1151 = vmatprep.subr.mxu0 0.0
    %1152 = vmatpush1.xpose.msra.mxu0 0.0
    %1153 = vmatprep.subr.mxu0 0.0
    %1154 = vmatpush1.xpose.msra.mxu0 0.0
    %1155 = vmatprep.subr.mxu0 0.0
    %1156 = vmatpush1.xpose.msra.mxu0 0.0
    %1157 = vmatprep.subr.mxu0 0.0
    %1158 = vmatpush1.xpose.msra.mxu0 0.0
    %1159 = vmatprep.subr.mxu0 0.0
    %1160 = vmatpush1.xpose.msra.mxu0 0.0
    %1161 = vmatprep.subr.mxu0 0.0
    %1162 = vmatpush1.xpose.msra.mxu0 0.0
    %1163 = vmatprep.subr.mxu0 0.0
    %1164 = vmatpush1.xpose.msra.mxu0 0.0
    %1165 = vmatprep.subr.mxu0 0.0
    %1166 = vmatpush1.xpose.msra.mxu0 0.0
    %1167 = vmatprep.subr.mxu0 0.0
    %1168 = vmatpush1.xpose.msra.mxu0 0.0
    %1169 = vmatprep.subr.mxu0 0.0
    %1170 = vmatpush1.xpose.msra.mxu0 0.0
    %1171 = vmatprep.subr.mxu0 0.0
    %1172 = vmatpush1.xpose.msra.mxu0 0.0
    %1173 = vmatprep.subr.mxu0 0.0
    %1174 = vmatpush1.xpose.msra.mxu0 0.0
    %1175 = vmatprep.subr.mxu0 0.0
    %1176 = vmatpush1.xpose.msra.mxu0 0.0
    %1177 = vmatprep.subr.mxu0 0.0
    %1178 = vmatpush1.xpose.msra.mxu0 0.0
    %1179 = vmatprep.subr.mxu0 0.0
    %1180 = vmatpush1.xpose.msra.mxu0 0.0
    %1181 = vmatprep.subr.mxu0 0.0
    %1182 = vmatpush1.xpose.msra.mxu0 0.0
    %1183 = vmatprep.subr.mxu0 0.0
    %1184 = vmatpush1.xpose.msra.mxu0 0.0
    %1185 = vmatprep.subr.mxu0 0.0
    %1186 = vmatpush1.xpose.msra.mxu0 0.0
    %1187 = vmatprep.subr.mxu0 0.0
    %1188 = vmatpush1.xpose.msra.mxu0 0.0
    %1189 = vmatprep.subr.mxu0 0.0
    %1190 = vmatpush1.xpose.msra.mxu0 0.0
    %1191 = vmatprep.mubr.f32.mxu0 0.0
    %1192 = vmatmul.mubr.f32.gmra.mrb[0].mxu0 %v1103
    %v1193 = vpop.f32.mrb[0].mxu0
    %v1194 = vadd.f32 %v175, %v1193
    %v1195 = vpop.f32.mrb[0].mxu0
    %1196 = vmatprep.mubr.f32.mxu0 0.0
    %1197 = vmatmul.mubr.f32.gmra.mrb[0].mxu0 %v1105
    %v1198 = vpop.f32.mrb[0].mxu0
    %v1199 = vadd.f32 %v176, %v1198
    %v1200 = vpop.f32.mrb[0].mxu0
    %1201 = vmatprep.mubr.f32.mxu0 0.0
    %1202 = vmatmul.mubr.f32.gmra.mrb[0].mxu0 %v1107
    %v1203 = vpop.f32.mrb[0].mxu0
    %v1204 = vadd.f32 %v177, %v1203
    %v1205 = vpop.f32.mrb[0].mxu0
    %1206 = vmatprep.mubr.f32.mxu0 0.0
    %1207 = vmatmul.mubr.f32.gmra.mrb[0].mxu0 %v1109
    %v1208 = vpop.f32.mrb[0].mxu0
    %v1209 = vadd.f32 %v178, %v1208
    %v1210 = vpop.f32.mrb[0].mxu0
    %1211 = vmatprep.mubr.f32.mxu0 0.0
    %1212 = vmatmul.mubr.f32.gmra.mrb[0].mxu0 %v1111
    %v1213 = vpop.f32.mrb[0].mxu0
    %v1214 = vadd.f32 %v179, %v1213
    %v1215 = vpop.f32.mrb[0].mxu0
    %1216 = vmatprep.mubr.f32.mxu0 0.0
    %1217 = vmatmul.mubr.f32.gmra.mrb[0].mxu0 %v1113
    %v1218 = vpop.f32.mrb[0].mxu0
    %v1219 = vadd.f32 %v180, %v1218
    %v1220 = vpop.f32.mrb[0].mxu0
    %1221 = vdwg.mxu0
    %v1222 = vsel %vm541, %v1194, -inf
    %1223 = vmax.xlane.f32.xlu0 %v1222
    %v1224 = vpop.xlane.xlu0 %1223
    %v1225 = vsel %vm541, %v1199, -inf
    %1226 = vmax.xlane.f32.xlu0 %v1225
    %v1227 = vpop.xlane.xlu0 %1226
    %v1228 = vsel %vm541, %v1204, -inf
    %1229 = vmax.xlane.f32.xlu0 %v1228
    %v1230 = vpop.xlane.xlu0 %1229
    %v1231 = vsel %vm541, %v1209, -inf
    %1232 = vmax.xlane.f32.xlu0 %v1231
    %v1233 = vpop.xlane.xlu0 %1232
    %v1234 = vsel %vm541, %v1214, -inf
    %1235 = vmax.xlane.f32.xlu0 %v1234
    %v1236 = vpop.xlane.xlu0 %1235
    %v1237 = vsel %vm541, %v1219, -inf
    %1238 = vmax.xlane.f32.xlu0 %v1237
    %v1239 = vpop.xlane.xlu0 %1238
    %v1240 = vsub.f32 %v1194, %v1224
    %v1241 = vsub.f32 %v1199, %v1227
    %v1242 = vsub.f32 %v1204, %v1230
    %v1243 = vsub.f32 %v1209, %v1233
    %v1244 = vsub.f32 %v1214, %v1236
    %v1245 = vsub.f32 %v1219, %v1239
    %v1246 = vmul.f32 %v1240, 1.442695
    %v1247 = vpow.pop %v1246
    %v1248 = vmul.f32 %v1241, 1.442695
    %v1249 = vpow.pop %v1248
    %v1250 = vmul.f32 %v1242, 1.442695
    %v1251 = vpow.pop %v1250
    %v1252 = vmul.f32 %v1243, 1.442695
    %v1253 = vpow.pop %v1252
    %v1254 = vmul.f32 %v1244, 1.442695
    %v1255 = vpow.pop %v1254
    %v1256 = vmul.f32 %v1245, 1.442695
    %v1257 = vpow.pop %v1256
    %v1258 = vsel %vm541, %v1247, 0.0
    %1259 = vadd.xlane.f32.xlu0 %v1258
    %v1260 = vpop.xlane.xlu0 %1259
    %v1261 = vsel %vm541, %v1249, 0.0
    %1262 = vadd.xlane.f32.xlu0 %v1261
    %v1263 = vpop.xlane.xlu0 %1262
    %v1264 = vsel %vm541, %v1251, 0.0
    %1265 = vadd.xlane.f32.xlu0 %v1264
    %v1266 = vpop.xlane.xlu0 %1265
    %v1267 = vsel %vm541, %v1253, 0.0
    %1268 = vadd.xlane.f32.xlu0 %v1267
    %v1269 = vpop.xlane.xlu0 %1268
    %v1270 = vsel %vm541, %v1255, 0.0
    %1271 = vadd.xlane.f32.xlu0 %v1270
    %v1272 = vpop.xlane.xlu0 %1271
    %v1273 = vsel %vm541, %v1257, 0.0
    %1274 = vadd.xlane.f32.xlu0 %v1273
    %v1275 = vpop.xlane.xlu0 %1274
    %1276 = vrot.lane.b32.xlu0 %v375, 48
    %v1277 = vpop.permute.xlu0 %1276
    %1278 = vrot.lane.b32.xlu0 %v380, 48
    %v1279 = vpop.permute.xlu0 %1278
    %1280 = vrot.lane.b32.xlu0 %v385, 48
    %v1281 = vpop.permute.xlu0 %1280
    %1282 = vrot.lane.b32.xlu0 %v390, 48
    %v1283 = vpop.permute.xlu0 %1282
    %1284 = vrot.lane.b32.xlu0 %v395, 48
    %v1285 = vpop.permute.xlu0 %1284
    %1286 = vrot.lane.b32.xlu0 %v400, 48
    %v1287 = vpop.permute.xlu0 %1286
    %v1295 = vsel %vm541, %v1247, 0
    %v1298 = vsel %vm541, %v1249, 0
    %v1301 = vsel %vm541, %v1251, 0
    %v1304 = vsel %vm541, %v1253, 0
    %v1307 = vsel %vm541, %v1255, 0
    %v1310 = vsel %vm541, %v1257, 0
    %1312 = vmatprep.subr.mxu0 0.0
    %1313 = vmatpush1.msra.mxu0 %v1277
    %1314 = vmatprep.subr.mxu0 0.0
    %1315 = vmatpush1.msra.mxu0 %v1279
    %1316 = vmatprep.subr.mxu0 0.0
    %1317 = vmatpush1.msra.mxu0 %v1281
    %1318 = vmatprep.subr.mxu0 0.0
    %1319 = vmatpush1.msra.mxu0 %v1283
    %1320 = vmatprep.subr.mxu0 0.0
    %1321 = vmatpush1.msra.mxu0 %v1285
    %1322 = vmatprep.subr.mxu0 0.0
    %1323 = vmatpush1.msra.mxu0 %v1287
    %1324 = vmatprep.subr.mxu0 0.0
    %1325 = vmatpush1.msra.mxu0 0.0
    %1326 = vmatprep.subr.mxu0 0.0
    %1327 = vmatpush1.msra.mxu0 0.0
    %1328 = vmatprep.subr.mxu0 0.0
    %1329 = vmatpush1.msra.mxu0 0.0
    %1330 = vmatprep.subr.mxu0 0.0
    %1331 = vmatpush1.msra.mxu0 0.0
    %1332 = vmatprep.subr.mxu0 0.0
    %1333 = vmatpush1.msra.mxu0 0.0
    %1334 = vmatprep.subr.mxu0 0.0
    %1335 = vmatpush1.msra.mxu0 0.0
    %1336 = vmatprep.subr.mxu0 0.0
    %1337 = vmatpush1.msra.mxu0 0.0
    %1338 = vmatprep.subr.mxu0 0.0
    %1339 = vmatpush1.msra.mxu0 0.0
    %1340 = vmatprep.subr.mxu0 0.0
    %1341 = vmatpush1.msra.mxu0 0.0
    %1342 = vmatprep.subr.mxu0 0.0
    %1343 = vmatpush1.msra.mxu0 0.0
    %1344 = vmatprep.subr.mxu0 0.0
    %1345 = vmatpush1.msra.mxu0 0.0
    %1346 = vmatprep.subr.mxu0 0.0
    %1347 = vmatpush1.msra.mxu0 0.0
    %1348 = vmatprep.subr.mxu0 0.0
    %1349 = vmatpush1.msra.mxu0 0.0
    %1350 = vmatprep.subr.mxu0 0.0
    %1351 = vmatpush1.msra.mxu0 0.0
    %1352 = vmatprep.subr.mxu0 0.0
    %1353 = vmatpush1.msra.mxu0 0.0
    %1354 = vmatprep.subr.mxu0 0.0
    %1355 = vmatpush1.msra.mxu0 0.0
    %1356 = vmatprep.subr.mxu0 0.0
    %1357 = vmatpush1.msra.mxu0 0.0
    %1358 = vmatprep.subr.mxu0 0.0
    %1359 = vmatpush1.msra.mxu0 0.0
    %1360 = vmatprep.subr.mxu0 0.0
    %1361 = vmatpush1.msra.mxu0 0.0
    %1362 = vmatprep.subr.mxu0 0.0
    %1363 = vmatpush1.msra.mxu0 0.0
    %1364 = vmatprep.subr.mxu0 0.0
    %1365 = vmatpush1.msra.mxu0 0.0
    %1366 = vmatprep.subr.mxu0 0.0
    %1367 = vmatpush1.msra.mxu0 0.0
    %1368 = vmatprep.subr.mxu0 0.0
    %1369 = vmatpush1.msra.mxu0 0.0
    %1370 = vmatprep.subr.mxu0 0.0
    %1371 = vmatpush1.msra.mxu0 0.0
    %1372 = vmatprep.subr.mxu0 0.0
    %1373 = vmatpush1.msra.mxu0 0.0
    %1374 = vmatprep.subr.mxu0 0.0
    %1375 = vmatpush1.msra.mxu0 0.0
    %1376 = vmatprep.mubr.f32.mxu0 0.0
    %1377 = vmatmul.mubr.f32.gmra.mrb[0].mxu0 %v1295
    %v1378 = vpop.f32.mrb[0].mxu0
    %v1379 = vadd.f32 0.0, %v1378
    %v1380 = vpop.f32.mrb[0].mxu0
    %1381 = vmatprep.mubr.f32.mxu0 0.0
    %1382 = vmatmul.mubr.f32.gmra.mrb[0].mxu0 %v1298
    %v1383 = vpop.f32.mrb[0].mxu0
    %v1384 = vadd.f32 0.0, %v1383
    %v1385 = vpop.f32.mrb[0].mxu0
    %1386 = vmatprep.mubr.f32.mxu0 0.0
    %1387 = vmatmul.mubr.f32.gmra.mrb[0].mxu0 %v1301
    %v1388 = vpop.f32.mrb[0].mxu0
    %v1389 = vadd.f32 0.0, %v1388
    %v1390 = vpop.f32.mrb[0].mxu0
    %1391 = vmatprep.mubr.f32.mxu0 0.0
    %1392 = vmatmul.mubr.f32.gmra.mrb[0].mxu0 %v1304
    %v1393 = vpop.f32.mrb[0].mxu0
    %v1394 = vadd.f32 0.0, %v1393
    %v1395 = vpop.f32.mrb[0].mxu0
    %1396 = vmatprep.mubr.f32.mxu0 0.0
    %1397 = vmatmul.mubr.f32.gmra.mrb[0].mxu0 %v1307
    %v1398 = vpop.f32.mrb[0].mxu0
    %v1399 = vadd.f32 0.0, %v1398
    %v1400 = vpop.f32.mrb[0].mxu0
    %1401 = vmatprep.mubr.f32.mxu0 0.0
    %1402 = vmatmul.mubr.f32.gmra.mrb[0].mxu0 %v1310
    %v1403 = vpop.f32.mrb[0].mxu0
    %v1404 = vadd.f32 0.0, %v1403
    %v1405 = vpop.f32.mrb[0].mxu0
    %1406 = vdwg.mxu0
    %v1407 = vrcp.pop %v1260
    %v1408 = vrcp.pop %v1263
    %v1409 = vrcp.pop %v1266
    %v1410 = vrcp.pop %v1269
    %v1411 = vrcp.pop %v1272
    %v1412 = vrcp.pop %v1275
    %v1413 = vmul.f32 %v1379, %v1407
    %v1414 = vmul.f32 %v1384, %v1408
    %v1415 = vmul.f32 %v1389, %v1409
    %v1416 = vmul.f32 %v1394, %v1410
    %v1417 = vmul.f32 %v1399, %v1411
    %v1418 = vmul.f32 %v1404, %v1412
    %1419 = vrot.lane.b32.xlu0 %v375, 104
    %v1420 = vpop.permute.xlu0 %1419
    %1421 = vrot.lane.b32.xlu0 %v380, 104
    %v1422 = vpop.permute.xlu0 %1421
    %1423 = vrot.lane.b32.xlu0 %v385, 104
    %v1424 = vpop.permute.xlu0 %1423
    %1425 = vrot.lane.b32.xlu0 %v390, 104
    %v1426 = vpop.permute.xlu0 %1425
    %1427 = vrot.lane.b32.xlu0 %v395, 104
    %v1428 = vpop.permute.xlu0 %1427
    %1429 = vrot.lane.b32.xlu0 %v400, 104
    %v1430 = vpop.permute.xlu0 %1429
    %1431 = vrot.lane.b32.xlu0 %v375, 72
    %v1432 = vpop.permute.xlu0 %1431
    %1433 = vrot.lane.b32.xlu0 %v380, 72
    %v1434 = vpop.permute.xlu0 %1433
    %1435 = vrot.lane.b32.xlu0 %v385, 72
    %v1436 = vpop.permute.xlu0 %1435
    %1437 = vrot.lane.b32.xlu0 %v390, 72
    %v1438 = vpop.permute.xlu0 %1437
    %1439 = vrot.lane.b32.xlu0 %v395, 72
    %v1440 = vpop.permute.xlu0 %1439
    %1441 = vrot.lane.b32.xlu0 %v400, 72
    %v1442 = vpop.permute.xlu0 %1441
    %v1443 = vsel %vm421, %v1420, 0
    %v1445 = vsel %vm421, %v1422, 0
    %v1447 = vsel %vm421, %v1424, 0
    %v1449 = vsel %vm421, %v1426, 0
    %v1451 = vsel %vm421, %v1428, 0
    %v1453 = vsel %vm421, %v1430, 0
    %v1455 = vsel %vm421, %v1432, 0
    %v1457 = vsel %vm421, %v1434, 0
    %v1459 = vsel %vm421, %v1436, 0
    %v1461 = vsel %vm421, %v1438, 0
    %v1463 = vsel %vm421, %v1440, 0
    %v1465 = vsel %vm421, %v1442, 0
    %1467 = vmatprep.subr.mxu0 0.0
    %1468 = vmatpush1.xpose.msra.mxu0 %v1455
    %1469 = vmatprep.subr.mxu0 0.0
    %1470 = vmatpush1.xpose.msra.mxu0 %v1457
    %1471 = vmatprep.subr.mxu0 0.0
    %1472 = vmatpush1.xpose.msra.mxu0 %v1459
    %1473 = vmatprep.subr.mxu0 0.0
    %1474 = vmatpush1.xpose.msra.mxu0 %v1461
    %1475 = vmatprep.subr.mxu0 0.0
    %1476 = vmatpush1.xpose.msra.mxu0 %v1463
    %1477 = vmatprep.subr.mxu0 0.0
    %1478 = vmatpush1.xpose.msra.mxu0 %v1465
    %1479 = vmatprep.subr.mxu0 0.0
    %1480 = vmatpush1.xpose.msra.mxu0 0.0
    %1481 = vmatprep.subr.mxu0 0.0
    %1482 = vmatpush1.xpose.msra.mxu0 0.0
    %1483 = vmatprep.subr.mxu0 0.0
    %1484 = vmatpush1.xpose.msra.mxu0 0.0
    %1485 = vmatprep.subr.mxu0 0.0
    %1486 = vmatpush1.xpose.msra.mxu0 0.0
    %1487 = vmatprep.subr.mxu0 0.0
    %1488 = vmatpush1.xpose.msra.mxu0 0.0
    %1489 = vmatprep.subr.mxu0 0.0
    %1490 = vmatpush1.xpose.msra.mxu0 0.0
    %1491 = vmatprep.subr.mxu0 0.0
    %1492 = vmatpush1.xpose.msra.mxu0 0.0
    %1493 = vmatprep.subr.mxu0 0.0
    %1494 = vmatpush1.xpose.msra.mxu0 0.0
    %1495 = vmatprep.subr.mxu0 0.0
    %1496 = vmatpush1.xpose.msra.mxu0 0.0
    %1497 = vmatprep.subr.mxu0 0.0
    %1498 = vmatpush1.xpose.msra.mxu0 0.0
    %1499 = vmatprep.subr.mxu0 0.0
    %1500 = vmatpush1.xpose.msra.mxu0 0.0
    %1501 = vmatprep.subr.mxu0 0.0
    %1502 = vmatpush1.xpose.msra.mxu0 0.0
    %1503 = vmatprep.subr.mxu0 0.0
    %1504 = vmatpush1.xpose.msra.mxu0 0.0
    %1505 = vmatprep.subr.mxu0 0.0
    %1506 = vmatpush1.xpose.msra.mxu0 0.0
    %1507 = vmatprep.subr.mxu0 0.0
    %1508 = vmatpush1.xpose.msra.mxu0 0.0
    %1509 = vmatprep.subr.mxu0 0.0
    %1510 = vmatpush1.xpose.msra.mxu0 0.0
    %1511 = vmatprep.subr.mxu0 0.0
    %1512 = vmatpush1.xpose.msra.mxu0 0.0
    %1513 = vmatprep.subr.mxu0 0.0
    %1514 = vmatpush1.xpose.msra.mxu0 0.0
    %1515 = vmatprep.subr.mxu0 0.0
    %1516 = vmatpush1.xpose.msra.mxu0 0.0
    %1517 = vmatprep.subr.mxu0 0.0
    %1518 = vmatpush1.xpose.msra.mxu0 0.0
    %1519 = vmatprep.subr.mxu0 0.0
    %1520 = vmatpush1.xpose.msra.mxu0 0.0
    %1521 = vmatprep.subr.mxu0 0.0
    %1522 = vmatpush1.xpose.msra.mxu0 0.0
    %1523 = vmatprep.subr.mxu0 0.0
    %1524 = vmatpush1.xpose.msra.mxu0 0.0
    %1525 = vmatprep.subr.mxu0 0.0
    %1526 = vmatpush1.xpose.msra.mxu0 0.0
    %1527 = vmatprep.subr.mxu0 0.0
    %1528 = vmatpush1.xpose.msra.mxu0 0.0
    %1529 = vmatprep.subr.mxu0 0.0
    %1530 = vmatpush1.xpose.msra.mxu0 0.0
    %1531 = vmatprep.mubr.f32.mxu0 0.0
    %1532 = vmatmul.mubr.f32.gmra.mrb[0].mxu0 %v1443
    %v1533 = vpop.f32.mrb[0].mxu0
    %v1534 = vadd.f32 %v175, %v1533
    %v1535 = vpop.f32.mrb[0].mxu0
    %1536 = vmatprep.mubr.f32.mxu0 0.0
    %1537 = vmatmul.mubr.f32.gmra.mrb[0].mxu0 %v1445
    %v1538 = vpop.f32.mrb[0].mxu0
    %v1539 = vadd.f32 %v176, %v1538
    %v1540 = vpop.f32.mrb[0].mxu0
    %1541 = vmatprep.mubr.f32.mxu0 0.0
    %1542 = vmatmul.mubr.f32.gmra.mrb[0].mxu0 %v1447
    %v1543 = vpop.f32.mrb[0].mxu0
    %v1544 = vadd.f32 %v177, %v1543
    %v1545 = vpop.f32.mrb[0].mxu0
    %1546 = vmatprep.mubr.f32.mxu0 0.0
    %1547 = vmatmul.mubr.f32.gmra.mrb[0].mxu0 %v1449
    %v1548 = vpop.f32.mrb[0].mxu0
    %v1549 = vadd.f32 %v178, %v1548
    %v1550 = vpop.f32.mrb[0].mxu0
    %1551 = vmatprep.mubr.f32.mxu0 0.0
    %1552 = vmatmul.mubr.f32.gmra.mrb[0].mxu0 %v1451
    %v1553 = vpop.f32.mrb[0].mxu0
    %v1554 = vadd.f32 %v179, %v1553
    %v1555 = vpop.f32.mrb[0].mxu0
    %1556 = vmatprep.mubr.f32.mxu0 0.0
    %1557 = vmatmul.mubr.f32.gmra.mrb[0].mxu0 %v1453
    %v1558 = vpop.f32.mrb[0].mxu0
    %v1559 = vadd.f32 %v180, %v1558
    %v1560 = vpop.f32.mrb[0].mxu0
    %1561 = vdwg.mxu0
    %v1562 = vsel %vm541, %v1534, -inf
    %1563 = vmax.xlane.f32.xlu0 %v1562
    %v1564 = vpop.xlane.xlu0 %1563
    %v1565 = vsel %vm541, %v1539, -inf
    %1566 = vmax.xlane.f32.xlu0 %v1565
    %v1567 = vpop.xlane.xlu0 %1566
    %v1568 = vsel %vm541, %v1544, -inf
    %1569 = vmax.xlane.f32.xlu0 %v1568
    %v1570 = vpop.xlane.xlu0 %1569
    %v1571 = vsel %vm541, %v1549, -inf
    %1572 = vmax.xlane.f32.xlu0 %v1571
    %v1573 = vpop.xlane.xlu0 %1572
    %v1574 = vsel %vm541, %v1554, -inf
    %1575 = vmax.xlane.f32.xlu0 %v1574
    %v1576 = vpop.xlane.xlu0 %1575
    %v1577 = vsel %vm541, %v1559, -inf
    %1578 = vmax.xlane.f32.xlu0 %v1577
    %v1579 = vpop.xlane.xlu0 %1578
    %v1580 = vsub.f32 %v1534, %v1564
    %v1581 = vsub.f32 %v1539, %v1567
    %v1582 = vsub.f32 %v1544, %v1570
    %v1583 = vsub.f32 %v1549, %v1573
    %v1584 = vsub.f32 %v1554, %v1576
    %v1585 = vsub.f32 %v1559, %v1579
    %v1586 = vmul.f32 %v1580, 1.442695
    %v1587 = vpow.pop %v1586
    %v1588 = vmul.f32 %v1581, 1.442695
    %v1589 = vpow.pop %v1588
    %v1590 = vmul.f32 %v1582, 1.442695
    %v1591 = vpow.pop %v1590
    %v1592 = vmul.f32 %v1583, 1.442695
    %v1593 = vpow.pop %v1592
    %v1594 = vmul.f32 %v1584, 1.442695
    %v1595 = vpow.pop %v1594
    %v1596 = vmul.f32 %v1585, 1.442695
    %v1597 = vpow.pop %v1596
    %v1598 = vsel %vm541, %v1587, 0.0
    %1599 = vadd.xlane.f32.xlu0 %v1598
    %v1600 = vpop.xlane.xlu0 %1599
    %v1601 = vsel %vm541, %v1589, 0.0
    %1602 = vadd.xlane.f32.xlu0 %v1601
    %v1603 = vpop.xlane.xlu0 %1602
    %v1604 = vsel %vm541, %v1591, 0.0
    %1605 = vadd.xlane.f32.xlu0 %v1604
    %v1606 = vpop.xlane.xlu0 %1605
    %v1607 = vsel %vm541, %v1593, 0.0
    %1608 = vadd.xlane.f32.xlu0 %v1607
    %v1609 = vpop.xlane.xlu0 %1608
    %v1610 = vsel %vm541, %v1595, 0.0
    %1611 = vadd.xlane.f32.xlu0 %v1610
    %v1612 = vpop.xlane.xlu0 %1611
    %v1613 = vsel %vm541, %v1597, 0.0
    %1614 = vadd.xlane.f32.xlu0 %v1613
    %v1615 = vpop.xlane.xlu0 %1614
    %1616 = vrot.lane.b32.xlu0 %v375, 40
    %v1617 = vpop.permute.xlu0 %1616
    %1618 = vrot.lane.b32.xlu0 %v380, 40
    %v1619 = vpop.permute.xlu0 %1618
    %1620 = vrot.lane.b32.xlu0 %v385, 40
    %v1621 = vpop.permute.xlu0 %1620
    %1622 = vrot.lane.b32.xlu0 %v390, 40
    %v1623 = vpop.permute.xlu0 %1622
    %1624 = vrot.lane.b32.xlu0 %v395, 40
    %v1625 = vpop.permute.xlu0 %1624
    %1626 = vrot.lane.b32.xlu0 %v400, 40
    %v1627 = vpop.permute.xlu0 %1626
    %v1635 = vsel %vm541, %v1587, 0
    %v1638 = vsel %vm541, %v1589, 0
    %v1641 = vsel %vm541, %v1591, 0
    %v1644 = vsel %vm541, %v1593, 0
    %v1647 = vsel %vm541, %v1595, 0
    %v1650 = vsel %vm541, %v1597, 0
    %1652 = vmatprep.subr.mxu0 0.0
    %1653 = vmatpush1.msra.mxu0 %v1617
    %1654 = vmatprep.subr.mxu0 0.0
    %1655 = vmatpush1.msra.mxu0 %v1619
    %1656 = vmatprep.subr.mxu0 0.0
    %1657 = vmatpush1.msra.mxu0 %v1621
    %1658 = vmatprep.subr.mxu0 0.0
    %1659 = vmatpush1.msra.mxu0 %v1623
    %1660 = vmatprep.subr.mxu0 0.0
    %1661 = vmatpush1.msra.mxu0 %v1625
    %1662 = vmatprep.subr.mxu0 0.0
    %1663 = vmatpush1.msra.mxu0 %v1627
    %1664 = vmatprep.subr.mxu0 0.0
    %1665 = vmatpush1.msra.mxu0 0.0
    %1666 = vmatprep.subr.mxu0 0.0
    %1667 = vmatpush1.msra.mxu0 0.0
    %1668 = vmatprep.subr.mxu0 0.0
    %1669 = vmatpush1.msra.mxu0 0.0
    %1670 = vmatprep.subr.mxu0 0.0
    %1671 = vmatpush1.msra.mxu0 0.0
    %1672 = vmatprep.subr.mxu0 0.0
    %1673 = vmatpush1.msra.mxu0 0.0
    %1674 = vmatprep.subr.mxu0 0.0
    %1675 = vmatpush1.msra.mxu0 0.0
    %1676 = vmatprep.subr.mxu0 0.0
    %1677 = vmatpush1.msra.mxu0 0.0
    %1678 = vmatprep.subr.mxu0 0.0
    %1679 = vmatpush1.msra.mxu0 0.0
    %1680 = vmatprep.subr.mxu0 0.0
    %1681 = vmatpush1.msra.mxu0 0.0
    %1682 = vmatprep.subr.mxu0 0.0
    %1683 = vmatpush1.msra.mxu0 0.0
    %1684 = vmatprep.subr.mxu0 0.0
    %1685 = vmatpush1.msra.mxu0 0.0
    %1686 = vmatprep.subr.mxu0 0.0
    %1687 = vmatpush1.msra.mxu0 0.0
    %1688 = vmatprep.subr.mxu0 0.0
    %1689 = vmatpush1.msra.mxu0 0.0
    %1690 = vmatprep.subr.mxu0 0.0
    %1691 = vmatpush1.msra.mxu0 0.0
    %1692 = vmatprep.subr.mxu0 0.0
    %1693 = vmatpush1.msra.mxu0 0.0
    %1694 = vmatprep.subr.mxu0 0.0
    %1695 = vmatpush1.msra.mxu0 0.0
    %1696 = vmatprep.subr.mxu0 0.0
    %1697 = vmatpush1.msra.mxu0 0.0
    %1698 = vmatprep.subr.mxu0 0.0
    %1699 = vmatpush1.msra.mxu0 0.0
    %1700 = vmatprep.subr.mxu0 0.0
    %1701 = vmatpush1.msra.mxu0 0.0
    %1702 = vmatprep.subr.mxu0 0.0
    %1703 = vmatpush1.msra.mxu0 0.0
    %1704 = vmatprep.subr.mxu0 0.0
    %1705 = vmatpush1.msra.mxu0 0.0
    %1706 = vmatprep.subr.mxu0 0.0
    %1707 = vmatpush1.msra.mxu0 0.0
    %1708 = vmatprep.subr.mxu0 0.0
    %1709 = vmatpush1.msra.mxu0 0.0
    %1710 = vmatprep.subr.mxu0 0.0
    %1711 = vmatpush1.msra.mxu0 0.0
    %1712 = vmatprep.subr.mxu0 0.0
    %1713 = vmatpush1.msra.mxu0 0.0
    %1714 = vmatprep.subr.mxu0 0.0
    %1715 = vmatpush1.msra.mxu0 0.0
    %1716 = vmatprep.mubr.f32.mxu0 0.0
    %1717 = vmatmul.mubr.f32.gmra.mrb[0].mxu0 %v1635
    %v1718 = vpop.f32.mrb[0].mxu0
    %v1719 = vadd.f32 0.0, %v1718
    %v1720 = vpop.f32.mrb[0].mxu0
    %1721 = vmatprep.mubr.f32.mxu0 0.0
    %1722 = vmatmul.mubr.f32.gmra.mrb[0].mxu0 %v1638
    %v1723 = vpop.f32.mrb[0].mxu0
    %v1724 = vadd.f32 0.0, %v1723
    %v1725 = vpop.f32.mrb[0].mxu0
    %1726 = vmatprep.mubr.f32.mxu0 0.0
    %1727 = vmatmul.mubr.f32.gmra.mrb[0].mxu0 %v1641
    %v1728 = vpop.f32.mrb[0].mxu0
    %v1729 = vadd.f32 0.0, %v1728
    %v1730 = vpop.f32.mrb[0].mxu0
    %1731 = vmatprep.mubr.f32.mxu0 0.0
    %1732 = vmatmul.mubr.f32.gmra.mrb[0].mxu0 %v1644
    %v1733 = vpop.f32.mrb[0].mxu0
    %v1734 = vadd.f32 0.0, %v1733
    %v1735 = vpop.f32.mrb[0].mxu0
    %1736 = vmatprep.mubr.f32.mxu0 0.0
    %1737 = vmatmul.mubr.f32.gmra.mrb[0].mxu0 %v1647
    %v1738 = vpop.f32.mrb[0].mxu0
    %v1739 = vadd.f32 0.0, %v1738
    %v1740 = vpop.f32.mrb[0].mxu0
    %1741 = vmatprep.mubr.f32.mxu0 0.0
    %1742 = vmatmul.mubr.f32.gmra.mrb[0].mxu0 %v1650
    %v1743 = vpop.f32.mrb[0].mxu0
    %v1744 = vadd.f32 0.0, %v1743
    %v1745 = vpop.f32.mrb[0].mxu0
    %1746 = vdwg.mxu0
    %v1747 = vrcp.pop %v1600
    %v1748 = vrcp.pop %v1603
    %v1749 = vrcp.pop %v1606
    %v1750 = vrcp.pop %v1609
    %v1751 = vrcp.pop %v1612
    %v1752 = vrcp.pop %v1615
    %v1753 = vmul.f32 %v1719, %v1747
    %v1754 = vmul.f32 %v1724, %v1748
    %v1755 = vmul.f32 %v1729, %v1749
    %v1756 = vmul.f32 %v1734, %v1750
    %v1757 = vmul.f32 %v1739, %v1751
    %v1758 = vmul.f32 %v1744, %v1752
    %1765 = vrot.lane.b32.xlu0 %v1073, 8
    %v1766 = vpop.permute.xlu0 %1765
    %1767 = vrot.lane.b32.xlu0 %v1074, 8
    %v1768 = vpop.permute.xlu0 %1767
    %1769 = vrot.lane.b32.xlu0 %v1075, 8
    %v1770 = vpop.permute.xlu0 %1769
    %1771 = vrot.lane.b32.xlu0 %v1076, 8
    %v1772 = vpop.permute.xlu0 %1771
    %1773 = vrot.lane.b32.xlu0 %v1077, 8
    %v1774 = vpop.permute.xlu0 %1773
    %1775 = vrot.lane.b32.xlu0 %v1078, 8
    %v1776 = vpop.permute.xlu0 %1775
    %1789 = vrot.lane.b32.xlu0 %v1413, 16
    %v1790 = vpop.permute.xlu0 %1789
    %1791 = vrot.lane.b32.xlu0 %v1414, 16
    %v1792 = vpop.permute.xlu0 %1791
    %1793 = vrot.lane.b32.xlu0 %v1415, 16
    %v1794 = vpop.permute.xlu0 %1793
    %1795 = vrot.lane.b32.xlu0 %v1416, 16
    %v1796 = vpop.permute.xlu0 %1795
    %1797 = vrot.lane.b32.xlu0 %v1417, 16
    %v1798 = vpop.permute.xlu0 %1797
    %1799 = vrot.lane.b32.xlu0 %v1418, 16
    %v1800 = vpop.permute.xlu0 %1799
    %1813 = vrot.lane.b32.xlu0 %v1753, 24
    %v1814 = vpop.permute.xlu0 %1813
    %1815 = vrot.lane.b32.xlu0 %v1754, 24
    %v1816 = vpop.permute.xlu0 %1815
    %1817 = vrot.lane.b32.xlu0 %v1755, 24
    %v1818 = vpop.permute.xlu0 %1817
    %1819 = vrot.lane.b32.xlu0 %v1756, 24
    %v1820 = vpop.permute.xlu0 %1819
    %1821 = vrot.lane.b32.xlu0 %v1757, 24
    %v1822 = vpop.permute.xlu0 %1821
    %1823 = vrot.lane.b32.xlu0 %v1758, 24
    %v1824 = vpop.permute.xlu0 %1823
    %v1831 = vsel %vm421, %v733, %v1766
    %v1832 = vsel %vm421, %v734, %v1768
    %v1833 = vsel %vm421, %v735, %v1770
    %v1834 = vsel %vm421, %v736, %v1772
    %v1835 = vsel %vm421, %v737, %v1774
    %v1836 = vsel %vm421, %v738, %v1776
    %vm1837 = vcmask 130048
    %v1838 = vsel %vm1837, %v1831, %v1790
    %v1839 = vsel %vm1837, %v1832, %v1792
    %v1840 = vsel %vm1837, %v1833, %v1794
    %v1841 = vsel %vm1837, %v1834, %v1796
    %v1842 = vsel %vm1837, %v1835, %v1798
    %v1843 = vsel %vm1837, %v1836, %v1800
    %vm1844 = vcmask 195584
    %v1845 = vsel %vm1844, %v1838, %v1814
    %v1846 = vsel %vm1844, %v1839, %v1816
    %v1847 = vsel %vm1844, %v1840, %v1818
    %v1848 = vsel %vm1844, %v1841, %v1820
    %v1849 = vsel %vm1844, %v1842, %v1822
    %v1850 = vsel %vm1844, %v1843, %v1824
    %v1851 = vld [vmem:[%s5] sm:$0xff]
    %v1852 = vld [vmem:[%s5 + $0x8] sm:$0xff]
    %v1853 = vld [vmem:[%s5 + $0x10] sm:$0xff]
    %v1854 = vld [vmem:[%s5 + $0x18] sm:$0xff]
    %v1856 = vsel %vm182, %v1845, 0
    %v1859 = vsel %vm182, %v1846, 0
    %v1862 = vsel %vm182, %v1847, 0
    %v1865 = vsel %vm182, %v1848, 0
    %v1868 = vsel %vm182, %v1849, 0
    %v1871 = vsel %vm182, %v1850, 0
    %1873 = vmatprep.subr.mxu0 0.0
    %1874 = vmatpush1.msra.mxu0 %v1851
    %1875 = vmatprep.subr.mxu0 0.0
    %1876 = vmatpush1.msra.mxu0 %v1852
    %1877 = vmatprep.subr.mxu0 0.0
    %1878 = vmatpush1.msra.mxu0 %v1853
    %1879 = vmatprep.subr.mxu0 0.0
    %1880 = vmatpush1.msra.mxu0 %v1854
    %1881 = vmatprep.subr.mxu0 0.0
    %1882 = vmatpush1.msra.mxu0 0.0
    %1883 = vmatprep.subr.mxu0 0.0
    %1884 = vmatpush1.msra.mxu0 0.0
    %1885 = vmatprep.subr.mxu0 0.0
    %1886 = vmatpush1.msra.mxu0 0.0
    %1887 = vmatprep.subr.mxu0 0.0
    %1888 = vmatpush1.msra.mxu0 0.0
    %1889 = vmatprep.subr.mxu0 0.0
    %1890 = vmatpush1.msra.mxu0 0.0
    %1891 = vmatprep.subr.mxu0 0.0
    %1892 = vmatpush1.msra.mxu0 0.0
    %1893 = vmatprep.subr.mxu0 0.0
    %1894 = vmatpush1.msra.mxu0 0.0
    %1895 = vmatprep.subr.mxu0 0.0
    %1896 = vmatpush1.msra.mxu0 0.0
    %1897 = vmatprep.subr.mxu0 0.0
    %1898 = vmatpush1.msra.mxu0 0.0
    %1899 = vmatprep.subr.mxu0 0.0
    %1900 = vmatpush1.msra.mxu0 0.0
    %1901 = vmatprep.subr.mxu0 0.0
    %1902 = vmatpush1.msra.mxu0 0.0
    %1903 = vmatprep.subr.mxu0 0.0
    %1904 = vmatpush1.msra.mxu0 0.0
    %1905 = vmatprep.subr.mxu0 0.0
    %1906 = vmatpush1.msra.mxu0 0.0
    %1907 = vmatprep.subr.mxu0 0.0
    %1908 = vmatpush1.msra.mxu0 0.0
    %1909 = vmatprep.subr.mxu0 0.0
    %1910 = vmatpush1.msra.mxu0 0.0
    %1911 = vmatprep.subr.mxu0 0.0
    %1912 = vmatpush1.msra.mxu0 0.0
    %1913 = vmatprep.subr.mxu0 0.0
    %1914 = vmatpush1.msra.mxu0 0.0
    %1915 = vmatprep.subr.mxu0 0.0
    %1916 = vmatpush1.msra.mxu0 0.0
    %1917 = vmatprep.subr.mxu0 0.0
    %1918 = vmatpush1.msra.mxu0 0.0
    %1919 = vmatprep.subr.mxu0 0.0
    %1920 = vmatpush1.msra.mxu0 0.0
    %1921 = vmatprep.subr.mxu0 0.0
    %1922 = vmatpush1.msra.mxu0 0.0
    %1923 = vmatprep.subr.mxu0 0.0
    %1924 = vmatpush1.msra.mxu0 0.0
    %1925 = vmatprep.subr.mxu0 0.0
    %1926 = vmatpush1.msra.mxu0 0.0
    %1927 = vmatprep.subr.mxu0 0.0
    %1928 = vmatpush1.msra.mxu0 0.0
    %1929 = vmatprep.subr.mxu0 0.0
    %1930 = vmatpush1.msra.mxu0 0.0
    %1931 = vmatprep.subr.mxu0 0.0
    %1932 = vmatpush1.msra.mxu0 0.0
    %1933 = vmatprep.subr.mxu0 0.0
    %1934 = vmatpush1.msra.mxu0 0.0
    %1935 = vmatprep.subr.mxu0 0.0
    %1936 = vmatpush1.msra.mxu0 0.0
    %1937 = vmatprep.mubr.f32.mxu0 0.0
    %1938 = vmatmul.mubr.f32.gmra.mrb[0].mxu0 %v1856
    %v1939 = vpop.f32.mrb[0].mxu0
    %v1940 = vadd.f32 0.0, %v1939
    %v1941 = vpop.f32.mrb[0].mxu0
    %1942 = vmatprep.mubr.f32.mxu0 0.0
    %1943 = vmatmul.mubr.f32.gmra.mrb[0].mxu0 %v1859
    %v1944 = vpop.f32.mrb[0].mxu0
    %v1945 = vadd.f32 0.0, %v1944
    %v1946 = vpop.f32.mrb[0].mxu0
    %1947 = vmatprep.mubr.f32.mxu0 0.0
    %1948 = vmatmul.mubr.f32.gmra.mrb[0].mxu0 %v1862
    %v1949 = vpop.f32.mrb[0].mxu0
    %v1950 = vadd.f32 0.0, %v1949
    %v1951 = vpop.f32.mrb[0].mxu0
    %1952 = vmatprep.mubr.f32.mxu0 0.0
    %1953 = vmatmul.mubr.f32.gmra.mrb[0].mxu0 %v1865
    %v1954 = vpop.f32.mrb[0].mxu0
    %v1955 = vadd.f32 0.0, %v1954
    %v1956 = vpop.f32.mrb[0].mxu0
    %1957 = vmatprep.mubr.f32.mxu0 0.0
    %1958 = vmatmul.mubr.f32.gmra.mrb[0].mxu0 %v1868
    %v1959 = vpop.f32.mrb[0].mxu0
    %v1960 = vadd.f32 0.0, %v1959
    %v1961 = vpop.f32.mrb[0].mxu0
    %1962 = vmatprep.mubr.f32.mxu0 0.0
    %1963 = vmatmul.mubr.f32.gmra.mrb[0].mxu0 %v1871
    %v1964 = vpop.f32.mrb[0].mxu0
    %v1965 = vadd.f32 0.0, %v1964
    %v1966 = vpop.f32.mrb[0].mxu0
    %1967 = vdwg.mxu0
    %v1968 = vadd.f32 %v147, %v1940
    %v1969 = vadd.f32 %v152, %v1945
    %v1970 = vadd.f32 %v157, %v1950
    %v1971 = vadd.f32 %v162, %v1955
    %v1972 = vadd.f32 %v167, %v1960
    %v1973 = vadd.f32 %v172, %v1965
    %v1974 = vlaneseq
    %v1975 = vshrl.u32 %v1974, 7
    %v1976 = vsub.s32 5, %v1975
    %v1977 = vrot.slane %v181, %v1976
    %v1978 = vadd.f32 %v1968, %v1977
    %v1979 = vadd.f32 %v1969, %v1977
    %v1980 = vadd.f32 %v1970, %v1977
    %v1981 = vadd.f32 %v1971, %v1977
    %v1982 = vadd.f32 %v1972, %v1977
    %v1983 = vadd.f32 %v1973, %v1977
    %v1984 = vsel %vm182, %v1978, 0.0
    %1985 = vadd.xlane.f32.xlu0 %v1984
    %v1986 = vpop.xlane.xlu0 %1985
    %v1987 = vsel %vm182, %v1979, 0.0
    %1988 = vadd.xlane.f32.xlu0 %v1987
    %v1989 = vpop.xlane.xlu0 %1988
    %v1990 = vsel %vm182, %v1980, 0.0
    %1991 = vadd.xlane.f32.xlu0 %v1990
    %v1992 = vpop.xlane.xlu0 %1991
    %v1993 = vsel %vm182, %v1981, 0.0
    %1994 = vadd.xlane.f32.xlu0 %v1993
    %v1995 = vpop.xlane.xlu0 %1994
    %v1996 = vsel %vm182, %v1982, 0.0
    %1997 = vadd.xlane.f32.xlu0 %v1996
    %v1998 = vpop.xlane.xlu0 %1997
    %v1999 = vsel %vm182, %v1983, 0.0
    %2000 = vadd.xlane.f32.xlu0 %v1999
    %v2001 = vpop.xlane.xlu0 %2000
    %v2002 = vmul.f32 %v1986, %v201
    %v2003 = vmul.f32 %v1989, %v201
    %v2004 = vmul.f32 %v1992, %v201
    %v2005 = vmul.f32 %v1995, %v201
    %v2006 = vmul.f32 %v1998, %v201
    %v2007 = vmul.f32 %v2001, %v201
    %v2008 = vsub.f32 %v1978, %v2002
    %v2009 = vsub.f32 %v1979, %v2003
    %v2010 = vsub.f32 %v1980, %v2004
    %v2011 = vsub.f32 %v1981, %v2005
    %v2012 = vsub.f32 %v1982, %v2006
    %v2013 = vsub.f32 %v1983, %v2007
    %v2014 = vmul.f32 %v2008, %v2008
    %v2015 = vmul.f32 %v2009, %v2009
    %v2016 = vmul.f32 %v2010, %v2010
    %v2017 = vmul.f32 %v2011, %v2011
    %v2018 = vmul.f32 %v2012, %v2012
    %v2019 = vmul.f32 %v2013, %v2013
    %v2020 = vsel %vm182, %v2014, 0.0
    %2021 = vadd.xlane.f32.xlu0 %v2020
    %v2022 = vpop.xlane.xlu0 %2021
    %v2023 = vsel %vm182, %v2015, 0.0
    %2024 = vadd.xlane.f32.xlu0 %v2023
    %v2025 = vpop.xlane.xlu0 %2024
    %v2026 = vsel %vm182, %v2016, 0.0
    %2027 = vadd.xlane.f32.xlu0 %v2026
    %v2028 = vpop.xlane.xlu0 %2027
    %v2029 = vsel %vm182, %v2017, 0.0
    %2030 = vadd.xlane.f32.xlu0 %v2029
    %v2031 = vpop.xlane.xlu0 %2030
    %v2032 = vsel %vm182, %v2018, 0.0
    %2033 = vadd.xlane.f32.xlu0 %v2032
    %v2034 = vpop.xlane.xlu0 %2033
    %v2035 = vsel %vm182, %v2019, 0.0
    %2036 = vadd.xlane.f32.xlu0 %v2035
    %v2037 = vpop.xlane.xlu0 %2036
    %v2038 = vmul.f32 %v2022, %v201
    %v2039 = vmul.f32 %v2025, %v201
    %v2040 = vmul.f32 %v2028, %v201
    %v2041 = vmul.f32 %v2031, %v201
    %v2042 = vmul.f32 %v2034, %v201
    %v2043 = vmul.f32 %v2037, %v201
    %v2044 = vadd.f32 %v2038, 1e-05
    %v2045 = vadd.f32 %v2039, 1e-05
    %v2046 = vadd.f32 %v2040, 1e-05
    %v2047 = vadd.f32 %v2041, 1e-05
    %v2048 = vadd.f32 %v2042, 1e-05
    %v2049 = vadd.f32 %v2043, 1e-05
    %v2050 = vrsqrt.pop %v2044
    %v2051 = vrsqrt.pop %v2045
    %v2052 = vrsqrt.pop %v2046
    %v2053 = vrsqrt.pop %v2047
    %v2054 = vrsqrt.pop %v2048
    %v2055 = vrsqrt.pop %v2049
    %v2056 = vmul.f32 %v2008, %v2050
    %v2057 = vmul.f32 %v2009, %v2051
    %v2058 = vmul.f32 %v2010, %v2052
    %v2059 = vmul.f32 %v2011, %v2053
    %v2060 = vmul.f32 %v2012, %v2054
    %v2061 = vmul.f32 %v2013, %v2055
    %v2062 = vlaneseq
    %v2063 = vshrl.u32 %v2062, 7
    %v2064 = vsub.s32 2, %v2063
    %v2065 = vrot.slane %v181, %v2064
    %v2066 = vmul.f32 %v2056, %v2065
    %v2067 = vmul.f32 %v2057, %v2065
    %v2068 = vmul.f32 %v2058, %v2065
    %v2069 = vmul.f32 %v2059, %v2065
    %v2070 = vmul.f32 %v2060, %v2065
    %v2071 = vmul.f32 %v2061, %v2065
    %v2072 = vlaneseq
    %v2073 = vshrl.u32 %v2072, 7
    %v2074 = vsub.s32 3, %v2073
    %v2075 = vrot.slane %v181, %v2074
    %v2076 = vadd.f32 %v2066, %v2075
    %v2077 = vadd.f32 %v2067, %v2075
    %v2078 = vadd.f32 %v2068, %v2075
    %v2079 = vadd.f32 %v2069, %v2075
    %v2080 = vadd.f32 %v2070, %v2075
    %v2081 = vadd.f32 %v2071, %v2075
    %v2082 = vld [vmem:[%s6] sm:$0xff]
    %v2083 = vld [vmem:[%s6 + $0x8] sm:$0xff]
    %v2084 = vld [vmem:[%s6 + $0x10] sm:$0xff]
    %v2085 = vld [vmem:[%s6 + $0x18] sm:$0xff]
    %v2086 = vlaneseq
    %v2087 = vshrl.u32 %v2086, 7
    %v2088 = vsub.s32 6, %v2087
    %v2089 = vrot.slane %v181, %v2088
    %v2091 = vsel %vm182, %v2076, 0
    %v2094 = vsel %vm182, %v2077, 0
    %v2097 = vsel %vm182, %v2078, 0
    %v2100 = vsel %vm182, %v2079, 0
    %v2103 = vsel %vm182, %v2080, 0
    %v2106 = vsel %vm182, %v2081, 0
    %2108 = vmatprep.subr.mxu0 0.0
    %2109 = vmatpush1.msra.mxu0 %v2082
    %2110 = vmatprep.subr.mxu0 0.0
    %2111 = vmatpush1.msra.mxu0 %v2083
    %2112 = vmatprep.subr.mxu0 0.0
    %2113 = vmatpush1.msra.mxu0 %v2084
    %2114 = vmatprep.subr.mxu0 0.0
    %2115 = vmatpush1.msra.mxu0 %v2085
    %2116 = vmatprep.subr.mxu0 0.0
    %2117 = vmatpush1.msra.mxu0 0.0
    %2118 = vmatprep.subr.mxu0 0.0
    %2119 = vmatpush1.msra.mxu0 0.0
    %2120 = vmatprep.subr.mxu0 0.0
    %2121 = vmatpush1.msra.mxu0 0.0
    %2122 = vmatprep.subr.mxu0 0.0
    %2123 = vmatpush1.msra.mxu0 0.0
    %2124 = vmatprep.subr.mxu0 0.0
    %2125 = vmatpush1.msra.mxu0 0.0
    %2126 = vmatprep.subr.mxu0 0.0
    %2127 = vmatpush1.msra.mxu0 0.0
    %2128 = vmatprep.subr.mxu0 0.0
    %2129 = vmatpush1.msra.mxu0 0.0
    %2130 = vmatprep.subr.mxu0 0.0
    %2131 = vmatpush1.msra.mxu0 0.0
    %2132 = vmatprep.subr.mxu0 0.0
    %2133 = vmatpush1.msra.mxu0 0.0
    %2134 = vmatprep.subr.mxu0 0.0
    %2135 = vmatpush1.msra.mxu0 0.0
    %2136 = vmatprep.subr.mxu0 0.0
    %2137 = vmatpush1.msra.mxu0 0.0
    %2138 = vmatprep.subr.mxu0 0.0
    %2139 = vmatpush1.msra.mxu0 0.0
    %2140 = vmatprep.subr.mxu0 0.0
    %2141 = vmatpush1.msra.mxu0 0.0
    %2142 = vmatprep.subr.mxu0 0.0
    %2143 = vmatpush1.msra.mxu0 0.0
    %2144 = vmatprep.subr.mxu0 0.0
    %2145 = vmatpush1.msra.mxu0 0.0
    %2146 = vmatprep.subr.mxu0 0.0
    %2147 = vmatpush1.msra.mxu0 0.0
    %2148 = vmatprep.subr.mxu0 0.0
    %2149 = vmatpush1.msra.mxu0 0.0
    %2150 = vmatprep.subr.mxu0 0.0
    %2151 = vmatpush1.msra.mxu0 0.0
    %2152 = vmatprep.subr.mxu0 0.0
    %2153 = vmatpush1.msra.mxu0 0.0
    %2154 = vmatprep.subr.mxu0 0.0
    %2155 = vmatpush1.msra.mxu0 0.0
    %2156 = vmatprep.subr.mxu0 0.0
    %2157 = vmatpush1.msra.mxu0 0.0
    %2158 = vmatprep.subr.mxu0 0.0
    %2159 = vmatpush1.msra.mxu0 0.0
    %2160 = vmatprep.subr.mxu0 0.0
    %2161 = vmatpush1.msra.mxu0 0.0
    %2162 = vmatprep.subr.mxu0 0.0
    %2163 = vmatpush1.msra.mxu0 0.0
    %2164 = vmatprep.subr.mxu0 0.0
    %2165 = vmatpush1.msra.mxu0 0.0
    %2166 = vmatprep.subr.mxu0 0.0
    %2167 = vmatpush1.msra.mxu0 0.0
    %2168 = vmatprep.subr.mxu0 0.0
    %2169 = vmatpush1.msra.mxu0 0.0
    %2170 = vmatprep.subr.mxu0 0.0
    %2171 = vmatpush1.msra.mxu0 0.0
    %2172 = vmatprep.mubr.f32.mxu0 0.0
    %2173 = vmatmul.mubr.f32.gmra.mrb[0].mxu0 %v2091
    %v2174 = vpop.f32.mrb[0].mxu0
    %v2175 = vadd.f32 %v2089, %v2174
    %v2176 = vpop.f32.mrb[0].mxu0
    %2177 = vmatprep.mubr.f32.mxu0 0.0
    %2178 = vmatmul.mubr.f32.gmra.mrb[0].mxu0 %v2094
    %v2179 = vpop.f32.mrb[0].mxu0
    %v2180 = vadd.f32 %v2089, %v2179
    %v2181 = vpop.f32.mrb[0].mxu0
    %2182 = vmatprep.mubr.f32.mxu0 0.0
    %2183 = vmatmul.mubr.f32.gmra.mrb[0].mxu0 %v2097
    %v2184 = vpop.f32.mrb[0].mxu0
    %v2185 = vadd.f32 %v2089, %v2184
    %v2186 = vpop.f32.mrb[0].mxu0
    %2187 = vmatprep.mubr.f32.mxu0 0.0
    %2188 = vmatmul.mubr.f32.gmra.mrb[0].mxu0 %v2100
    %v2189 = vpop.f32.mrb[0].mxu0
    %v2190 = vadd.f32 %v2089, %v2189
    %v2191 = vpop.f32.mrb[0].mxu0
    %2192 = vmatprep.mubr.f32.mxu0 0.0
    %2193 = vmatmul.mubr.f32.gmra.mrb[0].mxu0 %v2103
    %v2194 = vpop.f32.mrb[0].mxu0
    %v2195 = vadd.f32 %v2089, %v2194
    %v2196 = vpop.f32.mrb[0].mxu0
    %2197 = vmatprep.mubr.f32.mxu0 0.0
    %2198 = vmatmul.mubr.f32.gmra.mrb[0].mxu0 %v2106
    %v2199 = vpop.f32.mrb[0].mxu0
    %v2200 = vadd.f32 %v2089, %v2199
    %v2201 = vpop.f32.mrb[0].mxu0
    %2202 = vdwg.mxu0
    %v2203 = vmul.f32 %v2175, 0.5
    %v2204 = vmul.f32 %v2180, 0.5
    %v2205 = vmul.f32 %v2185, 0.5
    %v2206 = vmul.f32 %v2190, 0.5
    %v2207 = vmul.f32 %v2195, 0.5
    %v2208 = vmul.f32 %v2200, 0.5
    %v2209 = vmul.f32 %v2175, 0.70710677
    %v2210 = vmul.f32 %v2180, 0.70710677
    %v2211 = vmul.f32 %v2185, 0.70710677
    %v2212 = vmul.f32 %v2190, 0.70710677
    %v2213 = vmul.f32 %v2195, 0.70710677
    %v2214 = vmul.f32 %v2200, 0.70710677
    %v2215 = verf.f32.pop %v2209
    %v2216 = verf.f32.pop %v2210
    %v2217 = verf.f32.pop %v2211
    %v2218 = verf.f32.pop %v2212
    %v2219 = verf.f32.pop %v2213
    %v2220 = verf.f32.pop %v2214
    %v2221 = vadd.f32 %v2215, 1.0
    %v2222 = vadd.f32 %v2216, 1.0
    %v2223 = vadd.f32 %v2217, 1.0
    %v2224 = vadd.f32 %v2218, 1.0
    %v2225 = vadd.f32 %v2219, 1.0
    %v2226 = vadd.f32 %v2220, 1.0
    %v2227 = vmul.f32 %v2203, %v2221
    %v2228 = vmul.f32 %v2204, %v2222
    %v2229 = vmul.f32 %v2205, %v2223
    %v2230 = vmul.f32 %v2206, %v2224
    %v2231 = vmul.f32 %v2207, %v2225
    %v2232 = vmul.f32 %v2208, %v2226
    %v2233 = vld [vmem:[%s7] sm:$0xff]
    %v2234 = vld [vmem:[%s7 + $0x8] sm:$0xff]
    %v2235 = vld [vmem:[%s7 + $0x10] sm:$0xff]
    %v2236 = vld [vmem:[%s7 + $0x18] sm:$0xff]
    %v2237 = vld [vmem:[%s7 + $0x20] sm:$0xff]
    %v2238 = vld [vmem:[%s7 + $0x28] sm:$0xff]
    %v2239 = vld [vmem:[%s7 + $0x30] sm:$0xff]
    %v2240 = vld [vmem:[%s7 + $0x38] sm:$0xff]
    %vm2241 = vcmask 523264
    %v2243 = vsel %vm2241, %v2227, 0
    %v2246 = vsel %vm2241, %v2228, 0
    %v2249 = vsel %vm2241, %v2229, 0
    %v2252 = vsel %vm2241, %v2230, 0
    %v2255 = vsel %vm2241, %v2231, 0
    %v2258 = vsel %vm2241, %v2232, 0
    %2260 = vmatprep.subr.mxu0 0.0
    %2261 = vmatpush1.msra.mxu0 %v2233
    %2262 = vmatprep.subr.mxu0 0.0
    %2263 = vmatpush1.msra.mxu0 %v2234
    %2264 = vmatprep.subr.mxu0 0.0
    %2265 = vmatpush1.msra.mxu0 %v2235
    %2266 = vmatprep.subr.mxu0 0.0
    %2267 = vmatpush1.msra.mxu0 %v2236
    %2268 = vmatprep.subr.mxu0 0.0
    %2269 = vmatpush1.msra.mxu0 %v2237
    %2270 = vmatprep.subr.mxu0 0.0
    %2271 = vmatpush1.msra.mxu0 %v2238
    %2272 = vmatprep.subr.mxu0 0.0
    %2273 = vmatpush1.msra.mxu0 %v2239
    %2274 = vmatprep.subr.mxu0 0.0
    %2275 = vmatpush1.msra.mxu0 %v2240
    %2276 = vmatprep.subr.mxu0 0.0
    %2277 = vmatpush1.msra.mxu0 0.0
    %2278 = vmatprep.subr.mxu0 0.0
    %2279 = vmatpush1.msra.mxu0 0.0
    %2280 = vmatprep.subr.mxu0 0.0
    %2281 = vmatpush1.msra.mxu0 0.0
    %2282 = vmatprep.subr.mxu0 0.0
    %2283 = vmatpush1.msra.mxu0 0.0
    %2284 = vmatprep.subr.mxu0 0.0
    %2285 = vmatpush1.msra.mxu0 0.0
    %2286 = vmatprep.subr.mxu0 0.0
    %2287 = vmatpush1.msra.mxu0 0.0
    %2288 = vmatprep.subr.mxu0 0.0
    %2289 = vmatpush1.msra.mxu0 0.0
    %2290 = vmatprep.subr.mxu0 0.0
    %2291 = vmatpush1.msra.mxu0 0.0
    %2292 = vmatprep.subr.mxu0 0.0
    %2293 = vmatpush1.msra.mxu0 0.0
    %2294 = vmatprep.subr.mxu0 0.0
    %2295 = vmatpush1.msra.mxu0 0.0
    %2296 = vmatprep.subr.mxu0 0.0
    %2297 = vmatpush1.msra.mxu0 0.0
    %2298 = vmatprep.subr.mxu0 0.0
    %2299 = vmatpush1.msra.mxu0 0.0
    %2300 = vmatprep.subr.mxu0 0.0
    %2301 = vmatpush1.msra.mxu0 0.0
    %2302 = vmatprep.subr.mxu0 0.0
    %2303 = vmatpush1.msra.mxu0 0.0
    %2304 = vmatprep.subr.mxu0 0.0
    %2305 = vmatpush1.msra.mxu0 0.0
    %2306 = vmatprep.subr.mxu0 0.0
    %2307 = vmatpush1.msra.mxu0 0.0
    %2308 = vmatprep.subr.mxu0 0.0
    %2309 = vmatpush1.msra.mxu0 0.0
    %2310 = vmatprep.subr.mxu0 0.0
    %2311 = vmatpush1.msra.mxu0 0.0
    %2312 = vmatprep.subr.mxu0 0.0
    %2313 = vmatpush1.msra.mxu0 0.0
    %2314 = vmatprep.subr.mxu0 0.0
    %2315 = vmatpush1.msra.mxu0 0.0
    %2316 = vmatprep.subr.mxu0 0.0
    %2317 = vmatpush1.msra.mxu0 0.0
    %2318 = vmatprep.subr.mxu0 0.0
    %2319 = vmatpush1.msra.mxu0 0.0
    %2320 = vmatprep.subr.mxu0 0.0
    %2321 = vmatpush1.msra.mxu0 0.0
    %2322 = vmatprep.subr.mxu0 0.0
    %2323 = vmatpush1.msra.mxu0 0.0
    %2324 = vmatprep.mubr.f32.mxu0 0.0
    %2325 = vmatmul.mubr.f32.gmra.mrb[0].mxu0 %v2243
    %v2326 = vpop.f32.mrb[0].mxu0
    %v2327 = vadd.f32 0.0, %v2326
    %v2328 = vpop.f32.mrb[0].mxu0
    %2329 = vmatprep.mubr.f32.mxu0 0.0
    %2330 = vmatmul.mubr.f32.gmra.mrb[0].mxu0 %v2246
    %v2331 = vpop.f32.mrb[0].mxu0
    %v2332 = vadd.f32 0.0, %v2331
    %v2333 = vpop.f32.mrb[0].mxu0
    %2334 = vmatprep.mubr.f32.mxu0 0.0
    %2335 = vmatmul.mubr.f32.gmra.mrb[0].mxu0 %v2249
    %v2336 = vpop.f32.mrb[0].mxu0
    %v2337 = vadd.f32 0.0, %v2336
    %v2338 = vpop.f32.mrb[0].mxu0
    %2339 = vmatprep.mubr.f32.mxu0 0.0
    %2340 = vmatmul.mubr.f32.gmra.mrb[0].mxu0 %v2252
    %v2341 = vpop.f32.mrb[0].mxu0
    %v2342 = vadd.f32 0.0, %v2341
    %v2343 = vpop.f32.mrb[0].mxu0
    %2344 = vmatprep.mubr.f32.mxu0 0.0
    %2345 = vmatmul.mubr.f32.gmra.mrb[0].mxu0 %v2255
    %v2346 = vpop.f32.mrb[0].mxu0
    %v2347 = vadd.f32 0.0, %v2346
    %v2348 = vpop.f32.mrb[0].mxu0
    %2349 = vmatprep.mubr.f32.mxu0 0.0
    %2350 = vmatmul.mubr.f32.gmra.mrb[0].mxu0 %v2258
    %v2351 = vpop.f32.mrb[0].mxu0
    %v2352 = vadd.f32 0.0, %v2351
    %v2353 = vpop.f32.mrb[0].mxu0
    %2354 = vdwg.mxu0
    %v2355 = vadd.f32 %v1978, %v2327
    %v2356 = vadd.f32 %v1979, %v2332
    %v2357 = vadd.f32 %v1980, %v2337
    %v2358 = vadd.f32 %v1981, %v2342
    %v2359 = vadd.f32 %v1982, %v2347
    %v2360 = vadd.f32 %v1983, %v2352
    %v2361 = vlaneseq
    %v2362 = vshrl.u32 %v2361, 7
    %v2363 = vsub.s32 7, %v2362
    %v2364 = vrot.slane %v181, %v2363
    %v2365 = vadd.f32 %v2355, %v2364
    %v2366 = vadd.f32 %v2356, %v2364
    %v2367 = vadd.f32 %v2357, %v2364
    %v2368 = vadd.f32 %v2358, %v2364
    %v2369 = vadd.f32 %v2359, %v2364
    %v2370 = vadd.f32 %v2360, %v2364
    %s2371 = scalar_lea.vmem %s8, 8
    %v2372 = vld [vmem:[%s2371] sm:$0xff]
    %v2373 = vsel %vm182, %v2365, 0.0
    %2374 = vadd.xlane.f32.xlu0 %v2373
    %v2375 = vpop.xlane.xlu0 %2374
    %v2376 = vsel %vm182, %v2366, 0.0
    %2377 = vadd.xlane.f32.xlu0 %v2376
    %v2378 = vpop.xlane.xlu0 %2377
    %v2379 = vsel %vm182, %v2367, 0.0
    %2380 = vadd.xlane.f32.xlu0 %v2379
    %v2381 = vpop.xlane.xlu0 %2380
    %v2382 = vsel %vm182, %v2368, 0.0
    %2383 = vadd.xlane.f32.xlu0 %v2382
    %v2384 = vpop.xlane.xlu0 %2383
    %v2385 = vsel %vm182, %v2369, 0.0
    %2386 = vadd.xlane.f32.xlu0 %v2385
    %v2387 = vpop.xlane.xlu0 %2386
    %v2388 = vsel %vm182, %v2370, 0.0
    %2389 = vadd.xlane.f32.xlu0 %v2388
    %v2390 = vpop.xlane.xlu0 %2389
    %v2391 = vmul.f32 %v2375, %v201
    %v2392 = vmul.f32 %v2378, %v201
    %v2393 = vmul.f32 %v2381, %v201
    %v2394 = vmul.f32 %v2384, %v201
    %v2395 = vmul.f32 %v2387, %v201
    %v2396 = vmul.f32 %v2390, %v201
    %v2397 = vsub.f32 %v2365, %v2391
    %v2398 = vsub.f32 %v2366, %v2392
    %v2399 = vsub.f32 %v2367, %v2393
    %v2400 = vsub.f32 %v2368, %v2394
    %v2401 = vsub.f32 %v2369, %v2395
    %v2402 = vsub.f32 %v2370, %v2396
    %v2403 = vmul.f32 %v2397, %v2397
    %v2404 = vmul.f32 %v2398, %v2398
    %v2405 = vmul.f32 %v2399, %v2399
    %v2406 = vmul.f32 %v2400, %v2400
    %v2407 = vmul.f32 %v2401, %v2401
    %v2408 = vmul.f32 %v2402, %v2402
    %v2409 = vsel %vm182, %v2403, 0.0
    %2410 = vadd.xlane.f32.xlu0 %v2409
    %v2411 = vpop.xlane.xlu0 %2410
    %v2412 = vsel %vm182, %v2404, 0.0
    %2413 = vadd.xlane.f32.xlu0 %v2412
    %v2414 = vpop.xlane.xlu0 %2413
    %v2415 = vsel %vm182, %v2405, 0.0
    %2416 = vadd.xlane.f32.xlu0 %v2415
    %v2417 = vpop.xlane.xlu0 %2416
    %v2418 = vsel %vm182, %v2406, 0.0
    %2419 = vadd.xlane.f32.xlu0 %v2418
    %v2420 = vpop.xlane.xlu0 %2419
    %v2421 = vsel %vm182, %v2407, 0.0
    %2422 = vadd.xlane.f32.xlu0 %v2421
    %v2423 = vpop.xlane.xlu0 %2422
    %v2424 = vsel %vm182, %v2408, 0.0
    %2425 = vadd.xlane.f32.xlu0 %v2424
    %v2426 = vpop.xlane.xlu0 %2425
    %v2427 = vmul.f32 %v2411, %v201
    %v2428 = vmul.f32 %v2414, %v201
    %v2429 = vmul.f32 %v2417, %v201
    %v2430 = vmul.f32 %v2420, %v201
    %v2431 = vmul.f32 %v2423, %v201
    %v2432 = vmul.f32 %v2426, %v201
    %v2433 = vadd.f32 %v2427, 1e-05
    %v2434 = vadd.f32 %v2428, 1e-05
    %v2435 = vadd.f32 %v2429, 1e-05
    %v2436 = vadd.f32 %v2430, 1e-05
    %v2437 = vadd.f32 %v2431, 1e-05
    %v2438 = vadd.f32 %v2432, 1e-05
    %v2439 = vrsqrt.pop %v2433
    %v2440 = vrsqrt.pop %v2434
    %v2441 = vrsqrt.pop %v2435
    %v2442 = vrsqrt.pop %v2436
    %v2443 = vrsqrt.pop %v2437
    %v2444 = vrsqrt.pop %v2438
    %v2445 = vmul.f32 %v2397, %v2439
    %v2446 = vmul.f32 %v2398, %v2440
    %v2447 = vmul.f32 %v2399, %v2441
    %v2448 = vmul.f32 %v2400, %v2442
    %v2449 = vmul.f32 %v2401, %v2443
    %v2450 = vmul.f32 %v2402, %v2444
    %v2451 = vlaneseq
    %v2452 = vshrl.u32 %v2451, 7
    %v2453 = vsub.s32 0, %v2452
    %v2454 = vrot.slane %v2372, %v2453
    %v2455 = vmul.f32 %v2445, %v2454
    %v2456 = vmul.f32 %v2446, %v2454
    %v2457 = vmul.f32 %v2447, %v2454
    %v2458 = vmul.f32 %v2448, %v2454
    %v2459 = vmul.f32 %v2449, %v2454
    %v2460 = vmul.f32 %v2450, %v2454
    %v2461 = vlaneseq
    %v2462 = vshrl.u32 %v2461, 7
    %v2463 = vsub.s32 1, %v2462
    %v2464 = vrot.slane %v2372, %v2463
    %v2465 = vadd.f32 %v2455, %v2464
    %v2466 = vadd.f32 %v2456, %v2464
    %v2467 = vadd.f32 %v2457, %v2464
    %v2468 = vadd.f32 %v2458, %v2464
    %v2469 = vadd.f32 %v2459, %v2464
    %v2470 = vadd.f32 %v2460, %v2464
    %s2471 = scalar_lea.vmem %s4, 32
    %v2472 = vld [vmem:[%s2471] sm:$0xff]
    %v2473 = vld [vmem:[%s2471 + $0x8] sm:$0xff]
    %v2474 = vld [vmem:[%s2471 + $0x10] sm:$0xff]
    %v2475 = vld [vmem:[%s2471 + $0x18] sm:$0xff]
    %v2476 = vlaneseq
    %v2477 = vshrl.u32 %v2476, 7
    %v2478 = vsub.s32 4, %v2477
    %v2479 = vrot.slane %v2372, %v2478
    %v2481 = vsel %vm182, %v2465, 0
    %v2484 = vsel %vm182, %v2466, 0
    %v2487 = vsel %vm182, %v2467, 0
    %v2490 = vsel %vm182, %v2468, 0
    %v2493 = vsel %vm182, %v2469, 0
    %v2496 = vsel %vm182, %v2470, 0
    %2498 = vmatprep.subr.mxu0 0.0
    %2499 = vmatpush1.msra.mxu0 %v2472
    %2500 = vmatprep.subr.mxu0 0.0
    %2501 = vmatpush1.msra.mxu0 %v2473
    %2502 = vmatprep.subr.mxu0 0.0
    %2503 = vmatpush1.msra.mxu0 %v2474
    %2504 = vmatprep.subr.mxu0 0.0
    %2505 = vmatpush1.msra.mxu0 %v2475
    %2506 = vmatprep.subr.mxu0 0.0
    %2507 = vmatpush1.msra.mxu0 0.0
    %2508 = vmatprep.subr.mxu0 0.0
    %2509 = vmatpush1.msra.mxu0 0.0
    %2510 = vmatprep.subr.mxu0 0.0
    %2511 = vmatpush1.msra.mxu0 0.0
    %2512 = vmatprep.subr.mxu0 0.0
    %2513 = vmatpush1.msra.mxu0 0.0
    %2514 = vmatprep.subr.mxu0 0.0
    %2515 = vmatpush1.msra.mxu0 0.0
    %2516 = vmatprep.subr.mxu0 0.0
    %2517 = vmatpush1.msra.mxu0 0.0
    %2518 = vmatprep.subr.mxu0 0.0
    %2519 = vmatpush1.msra.mxu0 0.0
    %2520 = vmatprep.subr.mxu0 0.0
    %2521 = vmatpush1.msra.mxu0 0.0
    %2522 = vmatprep.subr.mxu0 0.0
    %2523 = vmatpush1.msra.mxu0 0.0
    %2524 = vmatprep.subr.mxu0 0.0
    %2525 = vmatpush1.msra.mxu0 0.0
    %2526 = vmatprep.subr.mxu0 0.0
    %2527 = vmatpush1.msra.mxu0 0.0
    %2528 = vmatprep.subr.mxu0 0.0
    %2529 = vmatpush1.msra.mxu0 0.0
    %2530 = vmatprep.subr.mxu0 0.0
    %2531 = vmatpush1.msra.mxu0 0.0
    %2532 = vmatprep.subr.mxu0 0.0
    %2533 = vmatpush1.msra.mxu0 0.0
    %2534 = vmatprep.subr.mxu0 0.0
    %2535 = vmatpush1.msra.mxu0 0.0
    %2536 = vmatprep.subr.mxu0 0.0
    %2537 = vmatpush1.msra.mxu0 0.0
    %2538 = vmatprep.subr.mxu0 0.0
    %2539 = vmatpush1.msra.mxu0 0.0
    %2540 = vmatprep.subr.mxu0 0.0
    %2541 = vmatpush1.msra.mxu0 0.0
    %2542 = vmatprep.subr.mxu0 0.0
    %2543 = vmatpush1.msra.mxu0 0.0
    %2544 = vmatprep.subr.mxu0 0.0
    %2545 = vmatpush1.msra.mxu0 0.0
    %2546 = vmatprep.subr.mxu0 0.0
    %2547 = vmatpush1.msra.mxu0 0.0
    %2548 = vmatprep.subr.mxu0 0.0
    %2549 = vmatpush1.msra.mxu0 0.0
    %2550 = vmatprep.subr.mxu0 0.0
    %2551 = vmatpush1.msra.mxu0 0.0
    %2552 = vmatprep.subr.mxu0 0.0
    %2553 = vmatpush1.msra.mxu0 0.0
    %2554 = vmatprep.subr.mxu0 0.0
    %2555 = vmatpush1.msra.mxu0 0.0
    %2556 = vmatprep.subr.mxu0 0.0
    %2557 = vmatpush1.msra.mxu0 0.0
    %2558 = vmatprep.subr.mxu0 0.0
    %2559 = vmatpush1.msra.mxu0 0.0
    %2560 = vmatprep.subr.mxu0 0.0
    %2561 = vmatpush1.msra.mxu0 0.0
    %2562 = vmatprep.mubr.f32.mxu0 0.0
    %2563 = vmatmul.mubr.f32.gmra.mrb[0].mxu0 %v2481
    %v2564 = vpop.f32.mrb[0].mxu0
    %v2565 = vadd.f32 %v2479, %v2564
    %v2566 = vpop.f32.mrb[0].mxu0
    %2567 = vmatprep.mubr.f32.mxu0 0.0
    %2568 = vmatmul.mubr.f32.gmra.mrb[0].mxu0 %v2484
    %v2569 = vpop.f32.mrb[0].mxu0
    %v2570 = vadd.f32 %v2479, %v2569
    %v2571 = vpop.f32.mrb[0].mxu0
    %2572 = vmatprep.mubr.f32.mxu0 0.0
    %2573 = vmatmul.mubr.f32.gmra.mrb[0].mxu0 %v2487
    %v2574 = vpop.f32.mrb[0].mxu0
    %v2575 = vadd.f32 %v2479, %v2574
    %v2576 = vpop.f32.mrb[0].mxu0
    %2577 = vmatprep.mubr.f32.mxu0 0.0
    %2578 = vmatmul.mubr.f32.gmra.mrb[0].mxu0 %v2490
    %v2579 = vpop.f32.mrb[0].mxu0
    %v2580 = vadd.f32 %v2479, %v2579
    %v2581 = vpop.f32.mrb[0].mxu0
    %2582 = vmatprep.mubr.f32.mxu0 0.0
    %2583 = vmatmul.mubr.f32.gmra.mrb[0].mxu0 %v2493
    %v2584 = vpop.f32.mrb[0].mxu0
    %v2585 = vadd.f32 %v2479, %v2584
    %v2586 = vpop.f32.mrb[0].mxu0
    %2587 = vmatprep.mubr.f32.mxu0 0.0
    %2588 = vmatmul.mubr.f32.gmra.mrb[0].mxu0 %v2496
    %v2589 = vpop.f32.mrb[0].mxu0
    %v2590 = vadd.f32 %v2479, %v2589
    %v2591 = vpop.f32.mrb[0].mxu0
    %2592 = vdwg.mxu0
    %2599 = vrot.lane.b32.xlu0 %v2565, 96
    %v2600 = vpop.permute.xlu0 %2599
    %2601 = vrot.lane.b32.xlu0 %v2570, 96
    %v2602 = vpop.permute.xlu0 %2601
    %2603 = vrot.lane.b32.xlu0 %v2575, 96
    %v2604 = vpop.permute.xlu0 %2603
    %2605 = vrot.lane.b32.xlu0 %v2580, 96
    %v2606 = vpop.permute.xlu0 %2605
    %2607 = vrot.lane.b32.xlu0 %v2585, 96
    %v2608 = vpop.permute.xlu0 %2607
    %2609 = vrot.lane.b32.xlu0 %v2590, 96
    %v2610 = vpop.permute.xlu0 %2609
    %v2611 = vsel %vm421, %v2565, 0
    %v2613 = vsel %vm421, %v2570, 0
    %v2615 = vsel %vm421, %v2575, 0
    %v2617 = vsel %vm421, %v2580, 0
    %v2619 = vsel %vm421, %v2585, 0
    %v2621 = vsel %vm421, %v2590, 0
    %v2623 = vsel %vm421, %v2600, 0
    %v2625 = vsel %vm421, %v2602, 0
    %v2627 = vsel %vm421, %v2604, 0
    %v2629 = vsel %vm421, %v2606, 0
    %v2631 = vsel %vm421, %v2608, 0
    %v2633 = vsel %vm421, %v2610, 0
    %2635 = vmatprep.subr.mxu0 0.0
    %2636 = vmatpush1.xpose.msra.mxu0 %v2623
    %2637 = vmatprep.subr.mxu0 0.0
    %2638 = vmatpush1.xpose.msra.mxu0 %v2625
    %2639 = vmatprep.subr.mxu0 0.0
    %2640 = vmatpush1.xpose.msra.mxu0 %v2627
    %2641 = vmatprep.subr.mxu0 0.0
    %2642 = vmatpush1.xpose.msra.mxu0 %v2629
    %2643 = vmatprep.subr.mxu0 0.0
    %2644 = vmatpush1.xpose.msra.mxu0 %v2631
    %2645 = vmatprep.subr.mxu0 0.0
    %2646 = vmatpush1.xpose.msra.mxu0 %v2633
    %2647 = vmatprep.subr.mxu0 0.0
    %2648 = vmatpush1.xpose.msra.mxu0 0.0
    %2649 = vmatprep.subr.mxu0 0.0
    %2650 = vmatpush1.xpose.msra.mxu0 0.0
    %2651 = vmatprep.subr.mxu0 0.0
    %2652 = vmatpush1.xpose.msra.mxu0 0.0
    %2653 = vmatprep.subr.mxu0 0.0
    %2654 = vmatpush1.xpose.msra.mxu0 0.0
    %2655 = vmatprep.subr.mxu0 0.0
    %2656 = vmatpush1.xpose.msra.mxu0 0.0
    %2657 = vmatprep.subr.mxu0 0.0
    %2658 = vmatpush1.xpose.msra.mxu0 0.0
    %2659 = vmatprep.subr.mxu0 0.0
    %2660 = vmatpush1.xpose.msra.mxu0 0.0
    %2661 = vmatprep.subr.mxu0 0.0
    %2662 = vmatpush1.xpose.msra.mxu0 0.0
    %2663 = vmatprep.subr.mxu0 0.0
    %2664 = vmatpush1.xpose.msra.mxu0 0.0
    %2665 = vmatprep.subr.mxu0 0.0
    %2666 = vmatpush1.xpose.msra.mxu0 0.0
    %2667 = vmatprep.subr.mxu0 0.0
    %2668 = vmatpush1.xpose.msra.mxu0 0.0
    %2669 = vmatprep.subr.mxu0 0.0
    %2670 = vmatpush1.xpose.msra.mxu0 0.0
    %2671 = vmatprep.subr.mxu0 0.0
    %2672 = vmatpush1.xpose.msra.mxu0 0.0
    %2673 = vmatprep.subr.mxu0 0.0
    %2674 = vmatpush1.xpose.msra.mxu0 0.0
    %2675 = vmatprep.subr.mxu0 0.0
    %2676 = vmatpush1.xpose.msra.mxu0 0.0
    %2677 = vmatprep.subr.mxu0 0.0
    %2678 = vmatpush1.xpose.msra.mxu0 0.0
    %2679 = vmatprep.subr.mxu0 0.0
    %2680 = vmatpush1.xpose.msra.mxu0 0.0
    %2681 = vmatprep.subr.mxu0 0.0
    %2682 = vmatpush1.xpose.msra.mxu0 0.0
    %2683 = vmatprep.subr.mxu0 0.0
    %2684 = vmatpush1.xpose.msra.mxu0 0.0
    %2685 = vmatprep.subr.mxu0 0.0
    %2686 = vmatpush1.xpose.msra.mxu0 0.0
    %2687 = vmatprep.subr.mxu0 0.0
    %2688 = vmatpush1.xpose.msra.mxu0 0.0
    %2689 = vmatprep.subr.mxu0 0.0
    %2690 = vmatpush1.xpose.msra.mxu0 0.0
    %2691 = vmatprep.subr.mxu0 0.0
    %2692 = vmatpush1.xpose.msra.mxu0 0.0
    %2693 = vmatprep.subr.mxu0 0.0
    %2694 = vmatpush1.xpose.msra.mxu0 0.0
    %2695 = vmatprep.subr.mxu0 0.0
    %2696 = vmatpush1.xpose.msra.mxu0 0.0
    %2697 = vmatprep.subr.mxu0 0.0
    %2698 = vmatpush1.xpose.msra.mxu0 0.0
    %2699 = vmatprep.mubr.f32.mxu0 0.0
    %2700 = vmatmul.mubr.f32.gmra.mrb[0].mxu0 %v2611
    %v2701 = vpop.f32.mrb[0].mxu0
    %v2702 = vadd.f32 %v175, %v2701
    %v2703 = vpop.f32.mrb[0].mxu0
    %2704 = vmatprep.mubr.f32.mxu0 0.0
    %2705 = vmatmul.mubr.f32.gmra.mrb[0].mxu0 %v2613
    %v2706 = vpop.f32.mrb[0].mxu0
    %v2707 = vadd.f32 %v176, %v2706
    %v2708 = vpop.f32.mrb[0].mxu0
    %2709 = vmatprep.mubr.f32.mxu0 0.0
    %2710 = vmatmul.mubr.f32.gmra.mrb[0].mxu0 %v2615
    %v2711 = vpop.f32.mrb[0].mxu0
    %v2712 = vadd.f32 %v177, %v2711
    %v2713 = vpop.f32.mrb[0].mxu0
    %2714 = vmatprep.mubr.f32.mxu0 0.0
    %2715 = vmatmul.mubr.f32.gmra.mrb[0].mxu0 %v2617
    %v2716 = vpop.f32.mrb[0].mxu0
    %v2717 = vadd.f32 %v178, %v2716
    %v2718 = vpop.f32.mrb[0].mxu0
    %2719 = vmatprep.mubr.f32.mxu0 0.0
    %2720 = vmatmul.mubr.f32.gmra.mrb[0].mxu0 %v2619
    %v2721 = vpop.f32.mrb[0].mxu0
    %v2722 = vadd.f32 %v179, %v2721
    %v2723 = vpop.f32.mrb[0].mxu0
    %2724 = vmatprep.mubr.f32.mxu0 0.0
    %2725 = vmatmul.mubr.f32.gmra.mrb[0].mxu0 %v2621
    %v2726 = vpop.f32.mrb[0].mxu0
    %v2727 = vadd.f32 %v180, %v2726
    %v2728 = vpop.f32.mrb[0].mxu0
    %2729 = vdwg.mxu0
    %v2730 = vsel %vm541, %v2702, -inf
    %2731 = vmax.xlane.f32.xlu0 %v2730
    %v2732 = vpop.xlane.xlu0 %2731
    %v2733 = vsel %vm541, %v2707, -inf
    %2734 = vmax.xlane.f32.xlu0 %v2733
    %v2735 = vpop.xlane.xlu0 %2734
    %v2736 = vsel %vm541, %v2712, -inf
    %2737 = vmax.xlane.f32.xlu0 %v2736
    %v2738 = vpop.xlane.xlu0 %2737
    %v2739 = vsel %vm541, %v2717, -inf
    %2740 = vmax.xlane.f32.xlu0 %v2739
    %v2741 = vpop.xlane.xlu0 %2740
    %v2742 = vsel %vm541, %v2722, -inf
    %2743 = vmax.xlane.f32.xlu0 %v2742
    %v2744 = vpop.xlane.xlu0 %2743
    %v2745 = vsel %vm541, %v2727, -inf
    %2746 = vmax.xlane.f32.xlu0 %v2745
    %v2747 = vpop.xlane.xlu0 %2746
    %v2748 = vsub.f32 %v2702, %v2732
    %v2749 = vsub.f32 %v2707, %v2735
    %v2750 = vsub.f32 %v2712, %v2738
    %v2751 = vsub.f32 %v2717, %v2741
    %v2752 = vsub.f32 %v2722, %v2744
    %v2753 = vsub.f32 %v2727, %v2747
    %v2754 = vmul.f32 %v2748, 1.442695
    %v2755 = vpow.pop %v2754
    %v2756 = vmul.f32 %v2749, 1.442695
    %v2757 = vpow.pop %v2756
    %v2758 = vmul.f32 %v2750, 1.442695
    %v2759 = vpow.pop %v2758
    %v2760 = vmul.f32 %v2751, 1.442695
    %v2761 = vpow.pop %v2760
    %v2762 = vmul.f32 %v2752, 1.442695
    %v2763 = vpow.pop %v2762
    %v2764 = vmul.f32 %v2753, 1.442695
    %v2765 = vpow.pop %v2764
    %v2766 = vsel %vm541, %v2755, 0.0
    %2767 = vadd.xlane.f32.xlu0 %v2766
    %v2768 = vpop.xlane.xlu0 %2767
    %v2769 = vsel %vm541, %v2757, 0.0
    %2770 = vadd.xlane.f32.xlu0 %v2769
    %v2771 = vpop.xlane.xlu0 %2770
    %v2772 = vsel %vm541, %v2759, 0.0
    %2773 = vadd.xlane.f32.xlu0 %v2772
    %v2774 = vpop.xlane.xlu0 %2773
    %v2775 = vsel %vm541, %v2761, 0.0
    %2776 = vadd.xlane.f32.xlu0 %v2775
    %v2777 = vpop.xlane.xlu0 %2776
    %v2778 = vsel %vm541, %v2763, 0.0
    %2779 = vadd.xlane.f32.xlu0 %v2778
    %v2780 = vpop.xlane.xlu0 %2779
    %v2781 = vsel %vm541, %v2765, 0.0
    %2782 = vadd.xlane.f32.xlu0 %v2781
    %v2783 = vpop.xlane.xlu0 %2782
    %2784 = vrot.lane.b32.xlu0 %v2565, 64
    %v2785 = vpop.permute.xlu0 %2784
    %2786 = vrot.lane.b32.xlu0 %v2570, 64
    %v2787 = vpop.permute.xlu0 %2786
    %2788 = vrot.lane.b32.xlu0 %v2575, 64
    %v2789 = vpop.permute.xlu0 %2788
    %2790 = vrot.lane.b32.xlu0 %v2580, 64
    %v2791 = vpop.permute.xlu0 %2790
    %2792 = vrot.lane.b32.xlu0 %v2585, 64
    %v2793 = vpop.permute.xlu0 %2792
    %2794 = vrot.lane.b32.xlu0 %v2590, 64
    %v2795 = vpop.permute.xlu0 %2794
    %v2803 = vsel %vm541, %v2755, 0
    %v2806 = vsel %vm541, %v2757, 0
    %v2809 = vsel %vm541, %v2759, 0
    %v2812 = vsel %vm541, %v2761, 0
    %v2815 = vsel %vm541, %v2763, 0
    %v2818 = vsel %vm541, %v2765, 0
    %2820 = vmatprep.subr.mxu0 0.0
    %2821 = vmatpush1.msra.mxu0 %v2785
    %2822 = vmatprep.subr.mxu0 0.0
    %2823 = vmatpush1.msra.mxu0 %v2787
    %2824 = vmatprep.subr.mxu0 0.0
    %2825 = vmatpush1.msra.mxu0 %v2789
    %2826 = vmatprep.subr.mxu0 0.0
    %2827 = vmatpush1.msra.mxu0 %v2791
    %2828 = vmatprep.subr.mxu0 0.0
    %2829 = vmatpush1.msra.mxu0 %v2793
    %2830 = vmatprep.subr.mxu0 0.0
    %2831 = vmatpush1.msra.mxu0 %v2795
    %2832 = vmatprep.subr.mxu0 0.0
    %2833 = vmatpush1.msra.mxu0 0.0
    %2834 = vmatprep.subr.mxu0 0.0
    %2835 = vmatpush1.msra.mxu0 0.0
    %2836 = vmatprep.subr.mxu0 0.0
    %2837 = vmatpush1.msra.mxu0 0.0
    %2838 = vmatprep.subr.mxu0 0.0
    %2839 = vmatpush1.msra.mxu0 0.0
    %2840 = vmatprep.subr.mxu0 0.0
    %2841 = vmatpush1.msra.mxu0 0.0
    %2842 = vmatprep.subr.mxu0 0.0
    %2843 = vmatpush1.msra.mxu0 0.0
    %2844 = vmatprep.subr.mxu0 0.0
    %2845 = vmatpush1.msra.mxu0 0.0
    %2846 = vmatprep.subr.mxu0 0.0
    %2847 = vmatpush1.msra.mxu0 0.0
    %2848 = vmatprep.subr.mxu0 0.0
    %2849 = vmatpush1.msra.mxu0 0.0
    %2850 = vmatprep.subr.mxu0 0.0
    %2851 = vmatpush1.msra.mxu0 0.0
    %2852 = vmatprep.subr.mxu0 0.0
    %2853 = vmatpush1.msra.mxu0 0.0
    %2854 = vmatprep.subr.mxu0 0.0
    %2855 = vmatpush1.msra.mxu0 0.0
    %2856 = vmatprep.subr.mxu0 0.0
    %2857 = vmatpush1.msra.mxu0 0.0
    %2858 = vmatprep.subr.mxu0 0.0
    %2859 = vmatpush1.msra.mxu0 0.0
    %2860 = vmatprep.subr.mxu0 0.0
    %2861 = vmatpush1.msra.mxu0 0.0
    %2862 = vmatprep.subr.mxu0 0.0
    %2863 = vmatpush1.msra.mxu0 0.0
    %2864 = vmatprep.subr.mxu0 0.0
    %2865 = vmatpush1.msra.mxu0 0.0
    %2866 = vmatprep.subr.mxu0 0.0
    %2867 = vmatpush1.msra.mxu0 0.0
    %2868 = vmatprep.subr.mxu0 0.0
    %2869 = vmatpush1.msra.mxu0 0.0
    %2870 = vmatprep.subr.mxu0 0.0
    %2871 = vmatpush1.msra.mxu0 0.0
    %2872 = vmatprep.subr.mxu0 0.0
    %2873 = vmatpush1.msra.mxu0 0.0
    %2874 = vmatprep.subr.mxu0 0.0
    %2875 = vmatpush1.msra.mxu0 0.0
    %2876 = vmatprep.subr.mxu0 0.0
    %2877 = vmatpush1.msra.mxu0 0.0
    %2878 = vmatprep.subr.mxu0 0.0
    %2879 = vmatpush1.msra.mxu0 0.0
    %2880 = vmatprep.subr.mxu0 0.0
    %2881 = vmatpush1.msra.mxu0 0.0
    %2882 = vmatprep.subr.mxu0 0.0
    %2883 = vmatpush1.msra.mxu0 0.0
    %2884 = vmatprep.mubr.f32.mxu0 0.0
    %2885 = vmatmul.mubr.f32.gmra.mrb[0].mxu0 %v2803
    %v2886 = vpop.f32.mrb[0].mxu0
    %v2887 = vadd.f32 0.0, %v2886
    %v2888 = vpop.f32.mrb[0].mxu0
    %2889 = vmatprep.mubr.f32.mxu0 0.0
    %2890 = vmatmul.mubr.f32.gmra.mrb[0].mxu0 %v2806
    %v2891 = vpop.f32.mrb[0].mxu0
    %v2892 = vadd.f32 0.0, %v2891
    %v2893 = vpop.f32.mrb[0].mxu0
    %2894 = vmatprep.mubr.f32.mxu0 0.0
    %2895 = vmatmul.mubr.f32.gmra.mrb[0].mxu0 %v2809
    %v2896 = vpop.f32.mrb[0].mxu0
    %v2897 = vadd.f32 0.0, %v2896
    %v2898 = vpop.f32.mrb[0].mxu0
    %2899 = vmatprep.mubr.f32.mxu0 0.0
    %2900 = vmatmul.mubr.f32.gmra.mrb[0].mxu0 %v2812
    %v2901 = vpop.f32.mrb[0].mxu0
    %v2902 = vadd.f32 0.0, %v2901
    %v2903 = vpop.f32.mrb[0].mxu0
    %2904 = vmatprep.mubr.f32.mxu0 0.0
    %2905 = vmatmul.mubr.f32.gmra.mrb[0].mxu0 %v2815
    %v2906 = vpop.f32.mrb[0].mxu0
    %v2907 = vadd.f32 0.0, %v2906
    %v2908 = vpop.f32.mrb[0].mxu0
    %2909 = vmatprep.mubr.f32.mxu0 0.0
    %2910 = vmatmul.mubr.f32.gmra.mrb[0].mxu0 %v2818
    %v2911 = vpop.f32.mrb[0].mxu0
    %v2912 = vadd.f32 0.0, %v2911
    %v2913 = vpop.f32.mrb[0].mxu0
    %2914 = vdwg.mxu0
    %v2915 = vrcp.pop %v2768
    %v2916 = vrcp.pop %v2771
    %v2917 = vrcp.pop %v2774
    %v2918 = vrcp.pop %v2777
    %v2919 = vrcp.pop %v2780
    %v2920 = vrcp.pop %v2783
    %v2921 = vmul.f32 %v2887, %v2915
    %v2922 = vmul.f32 %v2892, %v2916
    %v2923 = vmul.f32 %v2897, %v2917
    %v2924 = vmul.f32 %v2902, %v2918
    %v2925 = vmul.f32 %v2907, %v2919
    %v2926 = vmul.f32 %v2912, %v2920
    %2927 = vrot.lane.b32.xlu0 %v2565, 120
    %v2928 = vpop.permute.xlu0 %2927
    %2929 = vrot.lane.b32.xlu0 %v2570, 120
    %v2930 = vpop.permute.xlu0 %2929
    %2931 = vrot.lane.b32.xlu0 %v2575, 120
    %v2932 = vpop.permute.xlu0 %2931
    %2933 = vrot.lane.b32.xlu0 %v2580, 120
    %v2934 = vpop.permute.xlu0 %2933
    %2935 = vrot.lane.b32.xlu0 %v2585, 120
    %v2936 = vpop.permute.xlu0 %2935
    %2937 = vrot.lane.b32.xlu0 %v2590, 120
    %v2938 = vpop.permute.xlu0 %2937
    %2939 = vrot.lane.b32.xlu0 %v2565, 88
    %v2940 = vpop.permute.xlu0 %2939
    %2941 = vrot.lane.b32.xlu0 %v2570, 88
    %v2942 = vpop.permute.xlu0 %2941
    %2943 = vrot.lane.b32.xlu0 %v2575, 88
    %v2944 = vpop.permute.xlu0 %2943
    %2945 = vrot.lane.b32.xlu0 %v2580, 88
    %v2946 = vpop.permute.xlu0 %2945
    %2947 = vrot.lane.b32.xlu0 %v2585, 88
    %v2948 = vpop.permute.xlu0 %2947
    %2949 = vrot.lane.b32.xlu0 %v2590, 88
    %v2950 = vpop.permute.xlu0 %2949
    %v2951 = vsel %vm421, %v2928, 0
    %v2953 = vsel %vm421, %v2930, 0
    %v2955 = vsel %vm421, %v2932, 0
    %v2957 = vsel %vm421, %v2934, 0
    %v2959 = vsel %vm421, %v2936, 0
    %v2961 = vsel %vm421, %v2938, 0
    %v2963 = vsel %vm421, %v2940, 0
    %v2965 = vsel %vm421, %v2942, 0
    %v2967 = vsel %vm421, %v2944, 0
    %v2969 = vsel %vm421, %v2946, 0
    %v2971 = vsel %vm421, %v2948, 0
    %v2973 = vsel %vm421, %v2950, 0
    %2975 = vmatprep.subr.mxu0 0.0
    %2976 = vmatpush1.xpose.msra.mxu0 %v2963
    %2977 = vmatprep.subr.mxu0 0.0
    %2978 = vmatpush1.xpose.msra.mxu0 %v2965
    %2979 = vmatprep.subr.mxu0 0.0
    %2980 = vmatpush1.xpose.msra.mxu0 %v2967
    %2981 = vmatprep.subr.mxu0 0.0
    %2982 = vmatpush1.xpose.msra.mxu0 %v2969
    %2983 = vmatprep.subr.mxu0 0.0
    %2984 = vmatpush1.xpose.msra.mxu0 %v2971
    %2985 = vmatprep.subr.mxu0 0.0
    %2986 = vmatpush1.xpose.msra.mxu0 %v2973
    %2987 = vmatprep.subr.mxu0 0.0
    %2988 = vmatpush1.xpose.msra.mxu0 0.0
    %2989 = vmatprep.subr.mxu0 0.0
    %2990 = vmatpush1.xpose.msra.mxu0 0.0
    %2991 = vmatprep.subr.mxu0 0.0
    %2992 = vmatpush1.xpose.msra.mxu0 0.0
    %2993 = vmatprep.subr.mxu0 0.0
    %2994 = vmatpush1.xpose.msra.mxu0 0.0
    %2995 = vmatprep.subr.mxu0 0.0
    %2996 = vmatpush1.xpose.msra.mxu0 0.0
    %2997 = vmatprep.subr.mxu0 0.0
    %2998 = vmatpush1.xpose.msra.mxu0 0.0
    %2999 = vmatprep.subr.mxu0 0.0
    %3000 = vmatpush1.xpose.msra.mxu0 0.0
    %3001 = vmatprep.subr.mxu0 0.0
    %3002 = vmatpush1.xpose.msra.mxu0 0.0
    %3003 = vmatprep.subr.mxu0 0.0
    %3004 = vmatpush1.xpose.msra.mxu0 0.0
    %3005 = vmatprep.subr.mxu0 0.0
    %3006 = vmatpush1.xpose.msra.mxu0 0.0
    %3007 = vmatprep.subr.mxu0 0.0
    %3008 = vmatpush1.xpose.msra.mxu0 0.0
    %3009 = vmatprep.subr.mxu0 0.0
    %3010 = vmatpush1.xpose.msra.mxu0 0.0
    %3011 = vmatprep.subr.mxu0 0.0
    %3012 = vmatpush1.xpose.msra.mxu0 0.0
    %3013 = vmatprep.subr.mxu0 0.0
    %3014 = vmatpush1.xpose.msra.mxu0 0.0
    %3015 = vmatprep.subr.mxu0 0.0
    %3016 = vmatpush1.xpose.msra.mxu0 0.0
    %3017 = vmatprep.subr.mxu0 0.0
    %3018 = vmatpush1.xpose.msra.mxu0 0.0
    %3019 = vmatprep.subr.mxu0 0.0
    %3020 = vmatpush1.xpose.msra.mxu0 0.0
    %3021 = vmatprep.subr.mxu0 0.0
    %3022 = vmatpush1.xpose.msra.mxu0 0.0
    %3023 = vmatprep.subr.mxu0 0.0
    %3024 = vmatpush1.xpose.msra.mxu0 0.0
    %3025 = vmatprep.subr.mxu0 0.0
    %3026 = vmatpush1.xpose.msra.mxu0 0.0
    %3027 = vmatprep.subr.mxu0 0.0
    %3028 = vmatpush1.xpose.msra.mxu0 0.0
    %3029 = vmatprep.subr.mxu0 0.0
    %3030 = vmatpush1.xpose.msra.mxu0 0.0
    %3031 = vmatprep.subr.mxu0 0.0
    %3032 = vmatpush1.xpose.msra.mxu0 0.0
    %3033 = vmatprep.subr.mxu0 0.0
    %3034 = vmatpush1.xpose.msra.mxu0 0.0
    %3035 = vmatprep.subr.mxu0 0.0
    %3036 = vmatpush1.xpose.msra.mxu0 0.0
    %3037 = vmatprep.subr.mxu0 0.0
    %3038 = vmatpush1.xpose.msra.mxu0 0.0
    %3039 = vmatprep.mubr.f32.mxu0 0.0
    %3040 = vmatmul.mubr.f32.gmra.mrb[0].mxu0 %v2951
    %v3041 = vpop.f32.mrb[0].mxu0
    %v3042 = vadd.f32 %v175, %v3041
    %v3043 = vpop.f32.mrb[0].mxu0
    %3044 = vmatprep.mubr.f32.mxu0 0.0
    %3045 = vmatmul.mubr.f32.gmra.mrb[0].mxu0 %v2953
    %v3046 = vpop.f32.mrb[0].mxu0
    %v3047 = vadd.f32 %v176, %v3046
    %v3048 = vpop.f32.mrb[0].mxu0
    %3049 = vmatprep.mubr.f32.mxu0 0.0
    %3050 = vmatmul.mubr.f32.gmra.mrb[0].mxu0 %v2955
    %v3051 = vpop.f32.mrb[0].mxu0
    %v3052 = vadd.f32 %v177, %v3051
    %v3053 = vpop.f32.mrb[0].mxu0
    %3054 = vmatprep.mubr.f32.mxu0 0.0
    %3055 = vmatmul.mubr.f32.gmra.mrb[0].mxu0 %v2957
    %v3056 = vpop.f32.mrb[0].mxu0
    %v3057 = vadd.f32 %v178, %v3056
    %v3058 = vpop.f32.mrb[0].mxu0
    %3059 = vmatprep.mubr.f32.mxu0 0.0
    %3060 = vmatmul.mubr.f32.gmra.mrb[0].mxu0 %v2959
    %v3061 = vpop.f32.mrb[0].mxu0
    %v3062 = vadd.f32 %v179, %v3061
    %v3063 = vpop.f32.mrb[0].mxu0
    %3064 = vmatprep.mubr.f32.mxu0 0.0
    %3065 = vmatmul.mubr.f32.gmra.mrb[0].mxu0 %v2961
    %v3066 = vpop.f32.mrb[0].mxu0
    %v3067 = vadd.f32 %v180, %v3066
    %v3068 = vpop.f32.mrb[0].mxu0
    %3069 = vdwg.mxu0
    %v3070 = vsel %vm541, %v3042, -inf
    %3071 = vmax.xlane.f32.xlu0 %v3070
    %v3072 = vpop.xlane.xlu0 %3071
    %v3073 = vsel %vm541, %v3047, -inf
    %3074 = vmax.xlane.f32.xlu0 %v3073
    %v3075 = vpop.xlane.xlu0 %3074
    %v3076 = vsel %vm541, %v3052, -inf
    %3077 = vmax.xlane.f32.xlu0 %v3076
    %v3078 = vpop.xlane.xlu0 %3077
    %v3079 = vsel %vm541, %v3057, -inf
    %3080 = vmax.xlane.f32.xlu0 %v3079
    %v3081 = vpop.xlane.xlu0 %3080
    %v3082 = vsel %vm541, %v3062, -inf
    %3083 = vmax.xlane.f32.xlu0 %v3082
    %v3084 = vpop.xlane.xlu0 %3083
    %v3085 = vsel %vm541, %v3067, -inf
    %3086 = vmax.xlane.f32.xlu0 %v3085
    %v3087 = vpop.xlane.xlu0 %3086
    %v3088 = vsub.f32 %v3042, %v3072
    %v3089 = vsub.f32 %v3047, %v3075
    %v3090 = vsub.f32 %v3052, %v3078
    %v3091 = vsub.f32 %v3057, %v3081
    %v3092 = vsub.f32 %v3062, %v3084
    %v3093 = vsub.f32 %v3067, %v3087
    %v3094 = vmul.f32 %v3088, 1.442695
    %v3095 = vpow.pop %v3094
    %v3096 = vmul.f32 %v3089, 1.442695
    %v3097 = vpow.pop %v3096
    %v3098 = vmul.f32 %v3090, 1.442695
    %v3099 = vpow.pop %v3098
    %v3100 = vmul.f32 %v3091, 1.442695
    %v3101 = vpow.pop %v3100
    %v3102 = vmul.f32 %v3092, 1.442695
    %v3103 = vpow.pop %v3102
    %v3104 = vmul.f32 %v3093, 1.442695
    %v3105 = vpow.pop %v3104
    %v3106 = vsel %vm541, %v3095, 0.0
    %3107 = vadd.xlane.f32.xlu0 %v3106
    %v3108 = vpop.xlane.xlu0 %3107
    %v3109 = vsel %vm541, %v3097, 0.0
    %3110 = vadd.xlane.f32.xlu0 %v3109
    %v3111 = vpop.xlane.xlu0 %3110
    %v3112 = vsel %vm541, %v3099, 0.0
    %3113 = vadd.xlane.f32.xlu0 %v3112
    %v3114 = vpop.xlane.xlu0 %3113
    %v3115 = vsel %vm541, %v3101, 0.0
    %3116 = vadd.xlane.f32.xlu0 %v3115
    %v3117 = vpop.xlane.xlu0 %3116
    %v3118 = vsel %vm541, %v3103, 0.0
    %3119 = vadd.xlane.f32.xlu0 %v3118
    %v3120 = vpop.xlane.xlu0 %3119
    %v3121 = vsel %vm541, %v3105, 0.0
    %3122 = vadd.xlane.f32.xlu0 %v3121
    %v3123 = vpop.xlane.xlu0 %3122
    %3124 = vrot.lane.b32.xlu0 %v2565, 56
    %v3125 = vpop.permute.xlu0 %3124
    %3126 = vrot.lane.b32.xlu0 %v2570, 56
    %v3127 = vpop.permute.xlu0 %3126
    %3128 = vrot.lane.b32.xlu0 %v2575, 56
    %v3129 = vpop.permute.xlu0 %3128
    %3130 = vrot.lane.b32.xlu0 %v2580, 56
    %v3131 = vpop.permute.xlu0 %3130
    %3132 = vrot.lane.b32.xlu0 %v2585, 56
    %v3133 = vpop.permute.xlu0 %3132
    %3134 = vrot.lane.b32.xlu0 %v2590, 56
    %v3135 = vpop.permute.xlu0 %3134
    %v3143 = vsel %vm541, %v3095, 0
    %v3146 = vsel %vm541, %v3097, 0
    %v3149 = vsel %vm541, %v3099, 0
    %v3152 = vsel %vm541, %v3101, 0
    %v3155 = vsel %vm541, %v3103, 0
    %v3158 = vsel %vm541, %v3105, 0
    %3160 = vmatprep.subr.mxu0 0.0
    %3161 = vmatpush1.msra.mxu0 %v3125
    %3162 = vmatprep.subr.mxu0 0.0
    %3163 = vmatpush1.msra.mxu0 %v3127
    %3164 = vmatprep.subr.mxu0 0.0
    %3165 = vmatpush1.msra.mxu0 %v3129
    %3166 = vmatprep.subr.mxu0 0.0
    %3167 = vmatpush1.msra.mxu0 %v3131
    %3168 = vmatprep.subr.mxu0 0.0
    %3169 = vmatpush1.msra.mxu0 %v3133
    %3170 = vmatprep.subr.mxu0 0.0
    %3171 = vmatpush1.msra.mxu0 %v3135
    %3172 = vmatprep.subr.mxu0 0.0
    %3173 = vmatpush1.msra.mxu0 0.0
    %3174 = vmatprep.subr.mxu0 0.0
    %3175 = vmatpush1.msra.mxu0 0.0
    %3176 = vmatprep.subr.mxu0 0.0
    %3177 = vmatpush1.msra.mxu0 0.0
    %3178 = vmatprep.subr.mxu0 0.0
    %3179 = vmatpush1.msra.mxu0 0.0
    %3180 = vmatprep.subr.mxu0 0.0
    %3181 = vmatpush1.msra.mxu0 0.0
    %3182 = vmatprep.subr.mxu0 0.0
    %3183 = vmatpush1.msra.mxu0 0.0
    %3184 = vmatprep.subr.mxu0 0.0
    %3185 = vmatpush1.msra.mxu0 0.0
    %3186 = vmatprep.subr.mxu0 0.0
    %3187 = vmatpush1.msra.mxu0 0.0
    %3188 = vmatprep.subr.mxu0 0.0
    %3189 = vmatpush1.msra.mxu0 0.0
    %3190 = vmatprep.subr.mxu0 0.0
    %3191 = vmatpush1.msra.mxu0 0.0
    %3192 = vmatprep.subr.mxu0 0.0
    %3193 = vmatpush1.msra.mxu0 0.0
    %3194 = vmatprep.subr.mxu0 0.0
    %3195 = vmatpush1.msra.mxu0 0.0
    %3196 = vmatprep.subr.mxu0 0.0
    %3197 = vmatpush1.msra.mxu0 0.0
    %3198 = vmatprep.subr.mxu0 0.0
    %3199 = vmatpush1.msra.mxu0 0.0
    %3200 = vmatprep.subr.mxu0 0.0
    %3201 = vmatpush1.msra.mxu0 0.0
    %3202 = vmatprep.subr.mxu0 0.0
    %3203 = vmatpush1.msra.mxu0 0.0
    %3204 = vmatprep.subr.mxu0 0.0
    %3205 = vmatpush1.msra.mxu0 0.0
    %3206 = vmatprep.subr.mxu0 0.0
    %3207 = vmatpush1.msra.mxu0 0.0
    %3208 = vmatprep.subr.mxu0 0.0
    %3209 = vmatpush1.msra.mxu0 0.0
    %3210 = vmatprep.subr.mxu0 0.0
    %3211 = vmatpush1.msra.mxu0 0.0
    %3212 = vmatprep.subr.mxu0 0.0
    %3213 = vmatpush1.msra.mxu0 0.0
    %3214 = vmatprep.subr.mxu0 0.0
    %3215 = vmatpush1.msra.mxu0 0.0
    %3216 = vmatprep.subr.mxu0 0.0
    %3217 = vmatpush1.msra.mxu0 0.0
    %3218 = vmatprep.subr.mxu0 0.0
    %3219 = vmatpush1.msra.mxu0 0.0
    %3220 = vmatprep.subr.mxu0 0.0
    %3221 = vmatpush1.msra.mxu0 0.0
    %3222 = vmatprep.subr.mxu0 0.0
    %3223 = vmatpush1.msra.mxu0 0.0
    %3224 = vmatprep.mubr.f32.mxu0 0.0
    %3225 = vmatmul.mubr.f32.gmra.mrb[0].mxu0 %v3143
    %v3226 = vpop.f32.mrb[0].mxu0
    %v3227 = vadd.f32 0.0, %v3226
    %v3228 = vpop.f32.mrb[0].mxu0
    %3229 = vmatprep.mubr.f32.mxu0 0.0
    %3230 = vmatmul.mubr.f32.gmra.mrb[0].mxu0 %v3146
    %v3231 = vpop.f32.mrb[0].mxu0
    %v3232 = vadd.f32 0.0, %v3231
    %v3233 = vpop.f32.mrb[0].mxu0
    %3234 = vmatprep.mubr.f32.mxu0 0.0
    %3235 = vmatmul.mubr.f32.gmra.mrb[0].mxu0 %v3149
    %v3236 = vpop.f32.mrb[0].mxu0
    %v3237 = vadd.f32 0.0, %v3236
    %v3238 = vpop.f32.mrb[0].mxu0
    %3239 = vmatprep.mubr.f32.mxu0 0.0
    %3240 = vmatmul.mubr.f32.gmra.mrb[0].mxu0 %v3152
    %v3241 = vpop.f32.mrb[0].mxu0
    %v3242 = vadd.f32 0.0, %v3241
    %v3243 = vpop.f32.mrb[0].mxu0
    %3244 = vmatprep.mubr.f32.mxu0 0.0
    %3245 = vmatmul.mubr.f32.gmra.mrb[0].mxu0 %v3155
    %v3246 = vpop.f32.mrb[0].mxu0
    %v3247 = vadd.f32 0.0, %v3246
    %v3248 = vpop.f32.mrb[0].mxu0
    %3249 = vmatprep.mubr.f32.mxu0 0.0
    %3250 = vmatmul.mubr.f32.gmra.mrb[0].mxu0 %v3158
    %v3251 = vpop.f32.mrb[0].mxu0
    %v3252 = vadd.f32 0.0, %v3251
    %v3253 = vpop.f32.mrb[0].mxu0
    %3254 = vdwg.mxu0
    %v3255 = vrcp.pop %v3108
    %v3256 = vrcp.pop %v3111
    %v3257 = vrcp.pop %v3114
    %v3258 = vrcp.pop %v3117
    %v3259 = vrcp.pop %v3120
    %v3260 = vrcp.pop %v3123
    %v3261 = vmul.f32 %v3227, %v3255
    %v3262 = vmul.f32 %v3232, %v3256
    %v3263 = vmul.f32 %v3237, %v3257
    %v3264 = vmul.f32 %v3242, %v3258
    %v3265 = vmul.f32 %v3247, %v3259
    %v3266 = vmul.f32 %v3252, %v3260
    %3267 = vrot.lane.b32.xlu0 %v2565, 112
    %v3268 = vpop.permute.xlu0 %3267
    %3269 = vrot.lane.b32.xlu0 %v2570, 112
    %v3270 = vpop.permute.xlu0 %3269
    %3271 = vrot.lane.b32.xlu0 %v2575, 112
    %v3272 = vpop.permute.xlu0 %3271
    %3273 = vrot.lane.b32.xlu0 %v2580, 112
    %v3274 = vpop.permute.xlu0 %3273
    %3275 = vrot.lane.b32.xlu0 %v2585, 112
    %v3276 = vpop.permute.xlu0 %3275
    %3277 = vrot.lane.b32.xlu0 %v2590, 112
    %v3278 = vpop.permute.xlu0 %3277
    %3279 = vrot.lane.b32.xlu0 %v2565, 80
    %v3280 = vpop.permute.xlu0 %3279
    %3281 = vrot.lane.b32.xlu0 %v2570, 80
    %v3282 = vpop.permute.xlu0 %3281
    %3283 = vrot.lane.b32.xlu0 %v2575, 80
    %v3284 = vpop.permute.xlu0 %3283
    %3285 = vrot.lane.b32.xlu0 %v2580, 80
    %v3286 = vpop.permute.xlu0 %3285
    %3287 = vrot.lane.b32.xlu0 %v2585, 80
    %v3288 = vpop.permute.xlu0 %3287
    %3289 = vrot.lane.b32.xlu0 %v2590, 80
    %v3290 = vpop.permute.xlu0 %3289
    %v3291 = vsel %vm421, %v3268, 0
    %v3293 = vsel %vm421, %v3270, 0
    %v3295 = vsel %vm421, %v3272, 0
    %v3297 = vsel %vm421, %v3274, 0
    %v3299 = vsel %vm421, %v3276, 0
    %v3301 = vsel %vm421, %v3278, 0
    %v3303 = vsel %vm421, %v3280, 0
    %v3305 = vsel %vm421, %v3282, 0
    %v3307 = vsel %vm421, %v3284, 0
    %v3309 = vsel %vm421, %v3286, 0
    %v3311 = vsel %vm421, %v3288, 0
    %v3313 = vsel %vm421, %v3290, 0
    %3315 = vmatprep.subr.mxu0 0.0
    %3316 = vmatpush1.xpose.msra.mxu0 %v3303
    %3317 = vmatprep.subr.mxu0 0.0
    %3318 = vmatpush1.xpose.msra.mxu0 %v3305
    %3319 = vmatprep.subr.mxu0 0.0
    %3320 = vmatpush1.xpose.msra.mxu0 %v3307
    %3321 = vmatprep.subr.mxu0 0.0
    %3322 = vmatpush1.xpose.msra.mxu0 %v3309
    %3323 = vmatprep.subr.mxu0 0.0
    %3324 = vmatpush1.xpose.msra.mxu0 %v3311
    %3325 = vmatprep.subr.mxu0 0.0
    %3326 = vmatpush1.xpose.msra.mxu0 %v3313
    %3327 = vmatprep.subr.mxu0 0.0
    %3328 = vmatpush1.xpose.msra.mxu0 0.0
    %3329 = vmatprep.subr.mxu0 0.0
    %3330 = vmatpush1.xpose.msra.mxu0 0.0
    %3331 = vmatprep.subr.mxu0 0.0
    %3332 = vmatpush1.xpose.msra.mxu0 0.0
    %3333 = vmatprep.subr.mxu0 0.0
    %3334 = vmatpush1.xpose.msra.mxu0 0.0
    %3335 = vmatprep.subr.mxu0 0.0
    %3336 = vmatpush1.xpose.msra.mxu0 0.0
    %3337 = vmatprep.subr.mxu0 0.0
    %3338 = vmatpush1.xpose.msra.mxu0 0.0
    %3339 = vmatprep.subr.mxu0 0.0
    %3340 = vmatpush1.xpose.msra.mxu0 0.0
    %3341 = vmatprep.subr.mxu0 0.0
    %3342 = vmatpush1.xpose.msra.mxu0 0.0
    %3343 = vmatprep.subr.mxu0 0.0
    %3344 = vmatpush1.xpose.msra.mxu0 0.0
    %3345 = vmatprep.subr.mxu0 0.0
    %3346 = vmatpush1.xpose.msra.mxu0 0.0
    %3347 = vmatprep.subr.mxu0 0.0
    %3348 = vmatpush1.xpose.msra.mxu0 0.0
    %3349 = vmatprep.subr.mxu0 0.0
    %3350 = vmatpush1.xpose.msra.mxu0 0.0
    %3351 = vmatprep.subr.mxu0 0.0
    %3352 = vmatpush1.xpose.msra.mxu0 0.0
    %3353 = vmatprep.subr.mxu0 0.0
    %3354 = vmatpush1.xpose.msra.mxu0 0.0
    %3355 = vmatprep.subr.mxu0 0.0
    %3356 = vmatpush1.xpose.msra.mxu0 0.0
    %3357 = vmatprep.subr.mxu0 0.0
    %3358 = vmatpush1.xpose.msra.mxu0 0.0
    %3359 = vmatprep.subr.mxu0 0.0
    %3360 = vmatpush1.xpose.msra.mxu0 0.0
    %3361 = vmatprep.subr.mxu0 0.0
    %3362 = vmatpush1.xpose.msra.mxu0 0.0
    %3363 = vmatprep.subr.mxu0 0.0
    %3364 = vmatpush1.xpose.msra.mxu0 0.0
    %3365 = vmatprep.subr.mxu0 0.0
    %3366 = vmatpush1.xpose.msra.mxu0 0.0
    %3367 = vmatprep.subr.mxu0 0.0
    %3368 = vmatpush1.xpose.msra.mxu0 0.0
    %3369 = vmatprep.subr.mxu0 0.0
    %3370 = vmatpush1.xpose.msra.mxu0 0.0
    %3371 = vmatprep.subr.mxu0 0.0
    %3372 = vmatpush1.xpose.msra.mxu0 0.0
    %3373 = vmatprep.subr.mxu0 0.0
    %3374 = vmatpush1.xpose.msra.mxu0 0.0
    %3375 = vmatprep.subr.mxu0 0.0
    %3376 = vmatpush1.xpose.msra.mxu0 0.0
    %3377 = vmatprep.subr.mxu0 0.0
    %3378 = vmatpush1.xpose.msra.mxu0 0.0
    %3379 = vmatprep.mubr.f32.mxu0 0.0
    %3380 = vmatmul.mubr.f32.gmra.mrb[0].mxu0 %v3291
    %v3381 = vpop.f32.mrb[0].mxu0
    %v3382 = vadd.f32 %v175, %v3381
    %v3383 = vpop.f32.mrb[0].mxu0
    %3384 = vmatprep.mubr.f32.mxu0 0.0
    %3385 = vmatmul.mubr.f32.gmra.mrb[0].mxu0 %v3293
    %v3386 = vpop.f32.mrb[0].mxu0
    %v3387 = vadd.f32 %v176, %v3386
    %v3388 = vpop.f32.mrb[0].mxu0
    %3389 = vmatprep.mubr.f32.mxu0 0.0
    %3390 = vmatmul.mubr.f32.gmra.mrb[0].mxu0 %v3295
    %v3391 = vpop.f32.mrb[0].mxu0
    %v3392 = vadd.f32 %v177, %v3391
    %v3393 = vpop.f32.mrb[0].mxu0
    %3394 = vmatprep.mubr.f32.mxu0 0.0
    %3395 = vmatmul.mubr.f32.gmra.mrb[0].mxu0 %v3297
    %v3396 = vpop.f32.mrb[0].mxu0
    %v3397 = vadd.f32 %v178, %v3396
    %v3398 = vpop.f32.mrb[0].mxu0
    %3399 = vmatprep.mubr.f32.mxu0 0.0
    %3400 = vmatmul.mubr.f32.gmra.mrb[0].mxu0 %v3299
    %v3401 = vpop.f32.mrb[0].mxu0
    %v3402 = vadd.f32 %v179, %v3401
    %v3403 = vpop.f32.mrb[0].mxu0
    %3404 = vmatprep.mubr.f32.mxu0 0.0
    %3405 = vmatmul.mubr.f32.gmra.mrb[0].mxu0 %v3301
    %v3406 = vpop.f32.mrb[0].mxu0
    %v3407 = vadd.f32 %v180, %v3406
    %v3408 = vpop.f32.mrb[0].mxu0
    %3409 = vdwg.mxu0
    %v3410 = vsel %vm541, %v3382, -inf
    %3411 = vmax.xlane.f32.xlu0 %v3410
    %v3412 = vpop.xlane.xlu0 %3411
    %v3413 = vsel %vm541, %v3387, -inf
    %3414 = vmax.xlane.f32.xlu0 %v3413
    %v3415 = vpop.xlane.xlu0 %3414
    %v3416 = vsel %vm541, %v3392, -inf
    %3417 = vmax.xlane.f32.xlu0 %v3416
    %v3418 = vpop.xlane.xlu0 %3417
    %v3419 = vsel %vm541, %v3397, -inf
    %3420 = vmax.xlane.f32.xlu0 %v3419
    %v3421 = vpop.xlane.xlu0 %3420
    %v3422 = vsel %vm541, %v3402, -inf
    %3423 = vmax.xlane.f32.xlu0 %v3422
    %v3424 = vpop.xlane.xlu0 %3423
    %v3425 = vsel %vm541, %v3407, -inf
    %3426 = vmax.xlane.f32.xlu0 %v3425
    %v3427 = vpop.xlane.xlu0 %3426
    %v3428 = vsub.f32 %v3382, %v3412
    %v3429 = vsub.f32 %v3387, %v3415
    %v3430 = vsub.f32 %v3392, %v3418
    %v3431 = vsub.f32 %v3397, %v3421
    %v3432 = vsub.f32 %v3402, %v3424
    %v3433 = vsub.f32 %v3407, %v3427
    %v3434 = vmul.f32 %v3428, 1.442695
    %v3435 = vpow.pop %v3434
    %v3436 = vmul.f32 %v3429, 1.442695
    %v3437 = vpow.pop %v3436
    %v3438 = vmul.f32 %v3430, 1.442695
    %v3439 = vpow.pop %v3438
    %v3440 = vmul.f32 %v3431, 1.442695
    %v3441 = vpow.pop %v3440
    %v3442 = vmul.f32 %v3432, 1.442695
    %v3443 = vpow.pop %v3442
    %v3444 = vmul.f32 %v3433, 1.442695
    %v3445 = vpow.pop %v3444
    %v3446 = vsel %vm541, %v3435, 0.0
    %3447 = vadd.xlane.f32.xlu0 %v3446
    %v3448 = vpop.xlane.xlu0 %3447
    %v3449 = vsel %vm541, %v3437, 0.0
    %3450 = vadd.xlane.f32.xlu0 %v3449
    %v3451 = vpop.xlane.xlu0 %3450
    %v3452 = vsel %vm541, %v3439, 0.0
    %3453 = vadd.xlane.f32.xlu0 %v3452
    %v3454 = vpop.xlane.xlu0 %3453
    %v3455 = vsel %vm541, %v3441, 0.0
    %3456 = vadd.xlane.f32.xlu0 %v3455
    %v3457 = vpop.xlane.xlu0 %3456
    %v3458 = vsel %vm541, %v3443, 0.0
    %3459 = vadd.xlane.f32.xlu0 %v3458
    %v3460 = vpop.xlane.xlu0 %3459
    %v3461 = vsel %vm541, %v3445, 0.0
    %3462 = vadd.xlane.f32.xlu0 %v3461
    %v3463 = vpop.xlane.xlu0 %3462
    %3464 = vrot.lane.b32.xlu0 %v2565, 48
    %v3465 = vpop.permute.xlu0 %3464
    %3466 = vrot.lane.b32.xlu0 %v2570, 48
    %v3467 = vpop.permute.xlu0 %3466
    %3468 = vrot.lane.b32.xlu0 %v2575, 48
    %v3469 = vpop.permute.xlu0 %3468
    %3470 = vrot.lane.b32.xlu0 %v2580, 48
    %v3471 = vpop.permute.xlu0 %3470
    %3472 = vrot.lane.b32.xlu0 %v2585, 48
    %v3473 = vpop.permute.xlu0 %3472
    %3474 = vrot.lane.b32.xlu0 %v2590, 48
    %v3475 = vpop.permute.xlu0 %3474
    %v3483 = vsel %vm541, %v3435, 0
    %v3486 = vsel %vm541, %v3437, 0
    %v3489 = vsel %vm541, %v3439, 0
    %v3492 = vsel %vm541, %v3441, 0
    %v3495 = vsel %vm541, %v3443, 0
    %v3498 = vsel %vm541, %v3445, 0
    %3500 = vmatprep.subr.mxu0 0.0
    %3501 = vmatpush1.msra.mxu0 %v3465
    %3502 = vmatprep.subr.mxu0 0.0
    %3503 = vmatpush1.msra.mxu0 %v3467
    %3504 = vmatprep.subr.mxu0 0.0
    %3505 = vmatpush1.msra.mxu0 %v3469
    %3506 = vmatprep.subr.mxu0 0.0
    %3507 = vmatpush1.msra.mxu0 %v3471
    %3508 = vmatprep.subr.mxu0 0.0
    %3509 = vmatpush1.msra.mxu0 %v3473
    %3510 = vmatprep.subr.mxu0 0.0
    %3511 = vmatpush1.msra.mxu0 %v3475
    %3512 = vmatprep.subr.mxu0 0.0
    %3513 = vmatpush1.msra.mxu0 0.0
    %3514 = vmatprep.subr.mxu0 0.0
    %3515 = vmatpush1.msra.mxu0 0.0
    %3516 = vmatprep.subr.mxu0 0.0
    %3517 = vmatpush1.msra.mxu0 0.0
    %3518 = vmatprep.subr.mxu0 0.0
    %3519 = vmatpush1.msra.mxu0 0.0
    %3520 = vmatprep.subr.mxu0 0.0
    %3521 = vmatpush1.msra.mxu0 0.0
    %3522 = vmatprep.subr.mxu0 0.0
    %3523 = vmatpush1.msra.mxu0 0.0
    %3524 = vmatprep.subr.mxu0 0.0
    %3525 = vmatpush1.msra.mxu0 0.0
    %3526 = vmatprep.subr.mxu0 0.0
    %3527 = vmatpush1.msra.mxu0 0.0
    %3528 = vmatprep.subr.mxu0 0.0
    %3529 = vmatpush1.msra.mxu0 0.0
    %3530 = vmatprep.subr.mxu0 0.0
    %3531 = vmatpush1.msra.mxu0 0.0
    %3532 = vmatprep.subr.mxu0 0.0
    %3533 = vmatpush1.msra.mxu0 0.0
    %3534 = vmatprep.subr.mxu0 0.0
    %3535 = vmatpush1.msra.mxu0 0.0
    %3536 = vmatprep.subr.mxu0 0.0
    %3537 = vmatpush1.msra.mxu0 0.0
    %3538 = vmatprep.subr.mxu0 0.0
    %3539 = vmatpush1.msra.mxu0 0.0
    %3540 = vmatprep.subr.mxu0 0.0
    %3541 = vmatpush1.msra.mxu0 0.0
    %3542 = vmatprep.subr.mxu0 0.0
    %3543 = vmatpush1.msra.mxu0 0.0
    %3544 = vmatprep.subr.mxu0 0.0
    %3545 = vmatpush1.msra.mxu0 0.0
    %3546 = vmatprep.subr.mxu0 0.0
    %3547 = vmatpush1.msra.mxu0 0.0
    %3548 = vmatprep.subr.mxu0 0.0
    %3549 = vmatpush1.msra.mxu0 0.0
    %3550 = vmatprep.subr.mxu0 0.0
    %3551 = vmatpush1.msra.mxu0 0.0
    %3552 = vmatprep.subr.mxu0 0.0
    %3553 = vmatpush1.msra.mxu0 0.0
    %3554 = vmatprep.subr.mxu0 0.0
    %3555 = vmatpush1.msra.mxu0 0.0
    %3556 = vmatprep.subr.mxu0 0.0
    %3557 = vmatpush1.msra.mxu0 0.0
    %3558 = vmatprep.subr.mxu0 0.0
    %3559 = vmatpush1.msra.mxu0 0.0
    %3560 = vmatprep.subr.mxu0 0.0
    %3561 = vmatpush1.msra.mxu0 0.0
    %3562 = vmatprep.subr.mxu0 0.0
    %3563 = vmatpush1.msra.mxu0 0.0
    %3564 = vmatprep.mubr.f32.mxu0 0.0
    %3565 = vmatmul.mubr.f32.gmra.mrb[0].mxu0 %v3483
    %v3566 = vpop.f32.mrb[0].mxu0
    %v3567 = vadd.f32 0.0, %v3566
    %v3568 = vpop.f32.mrb[0].mxu0
    %3569 = vmatprep.mubr.f32.mxu0 0.0
    %3570 = vmatmul.mubr.f32.gmra.mrb[0].mxu0 %v3486
    %v3571 = vpop.f32.mrb[0].mxu0
    %v3572 = vadd.f32 0.0, %v3571
    %v3573 = vpop.f32.mrb[0].mxu0
    %3574 = vmatprep.mubr.f32.mxu0 0.0
    %3575 = vmatmul.mubr.f32.gmra.mrb[0].mxu0 %v3489
    %v3576 = vpop.f32.mrb[0].mxu0
    %v3577 = vadd.f32 0.0, %v3576
    %v3578 = vpop.f32.mrb[0].mxu0
    %3579 = vmatprep.mubr.f32.mxu0 0.0
    %3580 = vmatmul.mubr.f32.gmra.mrb[0].mxu0 %v3492
    %v3581 = vpop.f32.mrb[0].mxu0
    %v3582 = vadd.f32 0.0, %v3581
    %v3583 = vpop.f32.mrb[0].mxu0
    %3584 = vmatprep.mubr.f32.mxu0 0.0
    %3585 = vmatmul.mubr.f32.gmra.mrb[0].mxu0 %v3495
    %v3586 = vpop.f32.mrb[0].mxu0
    %v3587 = vadd.f32 0.0, %v3586
    %v3588 = vpop.f32.mrb[0].mxu0
    %3589 = vmatprep.mubr.f32.mxu0 0.0
    %3590 = vmatmul.mubr.f32.gmra.mrb[0].mxu0 %v3498
    %v3591 = vpop.f32.mrb[0].mxu0
    %v3592 = vadd.f32 0.0, %v3591
    %v3593 = vpop.f32.mrb[0].mxu0
    %3594 = vdwg.mxu0
    %v3595 = vrcp.pop %v3448
    %v3596 = vrcp.pop %v3451
    %v3597 = vrcp.pop %v3454
    %v3598 = vrcp.pop %v3457
    %v3599 = vrcp.pop %v3460
    %v3600 = vrcp.pop %v3463
    %v3601 = vmul.f32 %v3567, %v3595
    %v3602 = vmul.f32 %v3572, %v3596
    %v3603 = vmul.f32 %v3577, %v3597
    %v3604 = vmul.f32 %v3582, %v3598
    %v3605 = vmul.f32 %v3587, %v3599
    %v3606 = vmul.f32 %v3592, %v3600
    %3607 = vrot.lane.b32.xlu0 %v2565, 104
    %v3608 = vpop.permute.xlu0 %3607
    %3609 = vrot.lane.b32.xlu0 %v2570, 104
    %v3610 = vpop.permute.xlu0 %3609
    %3611 = vrot.lane.b32.xlu0 %v2575, 104
    %v3612 = vpop.permute.xlu0 %3611
    %3613 = vrot.lane.b32.xlu0 %v2580, 104
    %v3614 = vpop.permute.xlu0 %3613
    %3615 = vrot.lane.b32.xlu0 %v2585, 104
    %v3616 = vpop.permute.xlu0 %3615
    %3617 = vrot.lane.b32.xlu0 %v2590, 104
    %v3618 = vpop.permute.xlu0 %3617
    %3619 = vrot.lane.b32.xlu0 %v2565, 72
    %v3620 = vpop.permute.xlu0 %3619
    %3621 = vrot.lane.b32.xlu0 %v2570, 72
    %v3622 = vpop.permute.xlu0 %3621
    %3623 = vrot.lane.b32.xlu0 %v2575, 72
    %v3624 = vpop.permute.xlu0 %3623
    %3625 = vrot.lane.b32.xlu0 %v2580, 72
    %v3626 = vpop.permute.xlu0 %3625
    %3627 = vrot.lane.b32.xlu0 %v2585, 72
    %v3628 = vpop.permute.xlu0 %3627
    %3629 = vrot.lane.b32.xlu0 %v2590, 72
    %v3630 = vpop.permute.xlu0 %3629
    %v3631 = vsel %vm421, %v3608, 0
    %v3633 = vsel %vm421, %v3610, 0
    %v3635 = vsel %vm421, %v3612, 0
    %v3637 = vsel %vm421, %v3614, 0
    %v3639 = vsel %vm421, %v3616, 0
    %v3641 = vsel %vm421, %v3618, 0
    %v3643 = vsel %vm421, %v3620, 0
    %v3645 = vsel %vm421, %v3622, 0
    %v3647 = vsel %vm421, %v3624, 0
    %v3649 = vsel %vm421, %v3626, 0
    %v3651 = vsel %vm421, %v3628, 0
    %v3653 = vsel %vm421, %v3630, 0
    %3655 = vmatprep.subr.mxu0 0.0
    %3656 = vmatpush1.xpose.msra.mxu0 %v3643
    %3657 = vmatprep.subr.mxu0 0.0
    %3658 = vmatpush1.xpose.msra.mxu0 %v3645
    %3659 = vmatprep.subr.mxu0 0.0
    %3660 = vmatpush1.xpose.msra.mxu0 %v3647
    %3661 = vmatprep.subr.mxu0 0.0
    %3662 = vmatpush1.xpose.msra.mxu0 %v3649
    %3663 = vmatprep.subr.mxu0 0.0
    %3664 = vmatpush1.xpose.msra.mxu0 %v3651
    %3665 = vmatprep.subr.mxu0 0.0
    %3666 = vmatpush1.xpose.msra.mxu0 %v3653
    %3667 = vmatprep.subr.mxu0 0.0
    %3668 = vmatpush1.xpose.msra.mxu0 0.0
    %3669 = vmatprep.subr.mxu0 0.0
    %3670 = vmatpush1.xpose.msra.mxu0 0.0
    %3671 = vmatprep.subr.mxu0 0.0
    %3672 = vmatpush1.xpose.msra.mxu0 0.0
    %3673 = vmatprep.subr.mxu0 0.0
    %3674 = vmatpush1.xpose.msra.mxu0 0.0
    %3675 = vmatprep.subr.mxu0 0.0
    %3676 = vmatpush1.xpose.msra.mxu0 0.0
    %3677 = vmatprep.subr.mxu0 0.0
    %3678 = vmatpush1.xpose.msra.mxu0 0.0
    %3679 = vmatprep.subr.mxu0 0.0
    %3680 = vmatpush1.xpose.msra.mxu0 0.0
    %3681 = vmatprep.subr.mxu0 0.0
    %3682 = vmatpush1.xpose.msra.mxu0 0.0
    %3683 = vmatprep.subr.mxu0 0.0
    %3684 = vmatpush1.xpose.msra.mxu0 0.0
    %3685 = vmatprep.subr.mxu0 0.0
    %3686 = vmatpush1.xpose.msra.mxu0 0.0
    %3687 = vmatprep.subr.mxu0 0.0
    %3688 = vmatpush1.xpose.msra.mxu0 0.0
    %3689 = vmatprep.subr.mxu0 0.0
    %3690 = vmatpush1.xpose.msra.mxu0 0.0
    %3691 = vmatprep.subr.mxu0 0.0
    %3692 = vmatpush1.xpose.msra.mxu0 0.0
    %3693 = vmatprep.subr.mxu0 0.0
    %3694 = vmatpush1.xpose.msra.mxu0 0.0
    %3695 = vmatprep.subr.mxu0 0.0
    %3696 = vmatpush1.xpose.msra.mxu0 0.0
    %3697 = vmatprep.subr.mxu0 0.0
    %3698 = vmatpush1.xpose.msra.mxu0 0.0
    %3699 = vmatprep.subr.mxu0 0.0
    %3700 = vmatpush1.xpose.msra.mxu0 0.0
    %3701 = vmatprep.subr.mxu0 0.0
    %3702 = vmatpush1.xpose.msra.mxu0 0.0
    %3703 = vmatprep.subr.mxu0 0.0
    %3704 = vmatpush1.xpose.msra.mxu0 0.0
    %3705 = vmatprep.subr.mxu0 0.0
    %3706 = vmatpush1.xpose.msra.mxu0 0.0
    %3707 = vmatprep.subr.mxu0 0.0
    %3708 = vmatpush1.xpose.msra.mxu0 0.0
    %3709 = vmatprep.subr.mxu0 0.0
    %3710 = vmatpush1.xpose.msra.mxu0 0.0
    %3711 = vmatprep.subr.mxu0 0.0
    %3712 = vmatpush1.xpose.msra.mxu0 0.0
    %3713 = vmatprep.subr.mxu0 0.0
    %3714 = vmatpush1.xpose.msra.mxu0 0.0
    %3715 = vmatprep.subr.mxu0 0.0
    %3716 = vmatpush1.xpose.msra.mxu0 0.0
    %3717 = vmatprep.subr.mxu0 0.0
    %3718 = vmatpush1.xpose.msra.mxu0 0.0
    %3719 = vmatprep.mubr.f32.mxu0 0.0
    %3720 = vmatmul.mubr.f32.gmra.mrb[0].mxu0 %v3631
    %v3721 = vpop.f32.mrb[0].mxu0
    %v3722 = vadd.f32 %v175, %v3721
    %v3723 = vpop.f32.mrb[0].mxu0
    %3724 = vmatprep.mubr.f32.mxu0 0.0
    %3725 = vmatmul.mubr.f32.gmra.mrb[0].mxu0 %v3633
    %v3726 = vpop.f32.mrb[0].mxu0
    %v3727 = vadd.f32 %v176, %v3726
    %v3728 = vpop.f32.mrb[0].mxu0
    %3729 = vmatprep.mubr.f32.mxu0 0.0
    %3730 = vmatmul.mubr.f32.gmra.mrb[0].mxu0 %v3635
    %v3731 = vpop.f32.mrb[0].mxu0
    %v3732 = vadd.f32 %v177, %v3731
    %v3733 = vpop.f32.mrb[0].mxu0
    %3734 = vmatprep.mubr.f32.mxu0 0.0
    %3735 = vmatmul.mubr.f32.gmra.mrb[0].mxu0 %v3637
    %v3736 = vpop.f32.mrb[0].mxu0
    %v3737 = vadd.f32 %v178, %v3736
    %v3738 = vpop.f32.mrb[0].mxu0
    %3739 = vmatprep.mubr.f32.mxu0 0.0
    %3740 = vmatmul.mubr.f32.gmra.mrb[0].mxu0 %v3639
    %v3741 = vpop.f32.mrb[0].mxu0
    %v3742 = vadd.f32 %v179, %v3741
    %v3743 = vpop.f32.mrb[0].mxu0
    %3744 = vmatprep.mubr.f32.mxu0 0.0
    %3745 = vmatmul.mubr.f32.gmra.mrb[0].mxu0 %v3641
    %v3746 = vpop.f32.mrb[0].mxu0
    %v3747 = vadd.f32 %v180, %v3746
    %v3748 = vpop.f32.mrb[0].mxu0
    %3749 = vdwg.mxu0
    %v3750 = vsel %vm541, %v3722, -inf
    %3751 = vmax.xlane.f32.xlu0 %v3750
    %v3752 = vpop.xlane.xlu0 %3751
    %v3753 = vsel %vm541, %v3727, -inf
    %3754 = vmax.xlane.f32.xlu0 %v3753
    %v3755 = vpop.xlane.xlu0 %3754
    %v3756 = vsel %vm541, %v3732, -inf
    %3757 = vmax.xlane.f32.xlu0 %v3756
    %v3758 = vpop.xlane.xlu0 %3757
    %v3759 = vsel %vm541, %v3737, -inf
    %3760 = vmax.xlane.f32.xlu0 %v3759
    %v3761 = vpop.xlane.xlu0 %3760
    %v3762 = vsel %vm541, %v3742, -inf
    %3763 = vmax.xlane.f32.xlu0 %v3762
    %v3764 = vpop.xlane.xlu0 %3763
    %v3765 = vsel %vm541, %v3747, -inf
    %3766 = vmax.xlane.f32.xlu0 %v3765
    %v3767 = vpop.xlane.xlu0 %3766
    %v3768 = vsub.f32 %v3722, %v3752
    %v3769 = vsub.f32 %v3727, %v3755
    %v3770 = vsub.f32 %v3732, %v3758
    %v3771 = vsub.f32 %v3737, %v3761
    %v3772 = vsub.f32 %v3742, %v3764
    %v3773 = vsub.f32 %v3747, %v3767
    %v3774 = vmul.f32 %v3768, 1.442695
    %v3775 = vpow.pop %v3774
    %v3776 = vmul.f32 %v3769, 1.442695
    %v3777 = vpow.pop %v3776
    %v3778 = vmul.f32 %v3770, 1.442695
    %v3779 = vpow.pop %v3778
    %v3780 = vmul.f32 %v3771, 1.442695
    %v3781 = vpow.pop %v3780
    %v3782 = vmul.f32 %v3772, 1.442695
    %v3783 = vpow.pop %v3782
    %v3784 = vmul.f32 %v3773, 1.442695
    %v3785 = vpow.pop %v3784
    %v3786 = vsel %vm541, %v3775, 0.0
    %3787 = vadd.xlane.f32.xlu0 %v3786
    %v3788 = vpop.xlane.xlu0 %3787
    %v3789 = vsel %vm541, %v3777, 0.0
    %3790 = vadd.xlane.f32.xlu0 %v3789
    %v3791 = vpop.xlane.xlu0 %3790
    %v3792 = vsel %vm541, %v3779, 0.0
    %3793 = vadd.xlane.f32.xlu0 %v3792
    %v3794 = vpop.xlane.xlu0 %3793
    %v3795 = vsel %vm541, %v3781, 0.0
    %3796 = vadd.xlane.f32.xlu0 %v3795
    %v3797 = vpop.xlane.xlu0 %3796
    %v3798 = vsel %vm541, %v3783, 0.0
    %3799 = vadd.xlane.f32.xlu0 %v3798
    %v3800 = vpop.xlane.xlu0 %3799
    %v3801 = vsel %vm541, %v3785, 0.0
    %3802 = vadd.xlane.f32.xlu0 %v3801
    %v3803 = vpop.xlane.xlu0 %3802
    %3804 = vrot.lane.b32.xlu0 %v2565, 40
    %v3805 = vpop.permute.xlu0 %3804
    %3806 = vrot.lane.b32.xlu0 %v2570, 40
    %v3807 = vpop.permute.xlu0 %3806
    %3808 = vrot.lane.b32.xlu0 %v2575, 40
    %v3809 = vpop.permute.xlu0 %3808
    %3810 = vrot.lane.b32.xlu0 %v2580, 40
    %v3811 = vpop.permute.xlu0 %3810
    %3812 = vrot.lane.b32.xlu0 %v2585, 40
    %v3813 = vpop.permute.xlu0 %3812
    %3814 = vrot.lane.b32.xlu0 %v2590, 40
    %v3815 = vpop.permute.xlu0 %3814
    %v3823 = vsel %vm541, %v3775, 0
    %v3826 = vsel %vm541, %v3777, 0
    %v3829 = vsel %vm541, %v3779, 0
    %v3832 = vsel %vm541, %v3781, 0
    %v3835 = vsel %vm541, %v3783, 0
    %v3838 = vsel %vm541, %v3785, 0
    %3840 = vmatprep.subr.mxu0 0.0
    %3841 = vmatpush1.msra.mxu0 %v3805
    %3842 = vmatprep.subr.mxu0 0.0
    %3843 = vmatpush1.msra.mxu0 %v3807
    %3844 = vmatprep.subr.mxu0 0.0
    %3845 = vmatpush1.msra.mxu0 %v3809
    %3846 = vmatprep.subr.mxu0 0.0
    %3847 = vmatpush1.msra.mxu0 %v3811
    %3848 = vmatprep.subr.mxu0 0.0
    %3849 = vmatpush1.msra.mxu0 %v3813
    %3850 = vmatprep.subr.mxu0 0.0
    %3851 = vmatpush1.msra.mxu0 %v3815
    %3852 = vmatprep.subr.mxu0 0.0
    %3853 = vmatpush1.msra.mxu0 0.0
    %3854 = vmatprep.subr.mxu0 0.0
    %3855 = vmatpush1.msra.mxu0 0.0
    %3856 = vmatprep.subr.mxu0 0.0
    %3857 = vmatpush1.msra.mxu0 0.0
    %3858 = vmatprep.subr.mxu0 0.0
    %3859 = vmatpush1.msra.mxu0 0.0
    %3860 = vmatprep.subr.mxu0 0.0
    %3861 = vmatpush1.msra.mxu0 0.0
    %3862 = vmatprep.subr.mxu0 0.0
    %3863 = vmatpush1.msra.mxu0 0.0
    %3864 = vmatprep.subr.mxu0 0.0
    %3865 = vmatpush1.msra.mxu0 0.0
    %3866 = vmatprep.subr.mxu0 0.0
    %3867 = vmatpush1.msra.mxu0 0.0
    %3868 = vmatprep.subr.mxu0 0.0
    %3869 = vmatpush1.msra.mxu0 0.0
    %3870 = vmatprep.subr.mxu0 0.0
    %3871 = vmatpush1.msra.mxu0 0.0
    %3872 = vmatprep.subr.mxu0 0.0
    %3873 = vmatpush1.msra.mxu0 0.0
    %3874 = vmatprep.subr.mxu0 0.0
    %3875 = vmatpush1.msra.mxu0 0.0
    %3876 = vmatprep.subr.mxu0 0.0
    %3877 = vmatpush1.msra.mxu0 0.0
    %3878 = vmatprep.subr.mxu0 0.0
    %3879 = vmatpush1.msra.mxu0 0.0
    %3880 = vmatprep.subr.mxu0 0.0
    %3881 = vmatpush1.msra.mxu0 0.0
    %3882 = vmatprep.subr.mxu0 0.0
    %3883 = vmatpush1.msra.mxu0 0.0
    %3884 = vmatprep.subr.mxu0 0.0
    %3885 = vmatpush1.msra.mxu0 0.0
    %3886 = vmatprep.subr.mxu0 0.0
    %3887 = vmatpush1.msra.mxu0 0.0
    %3888 = vmatprep.subr.mxu0 0.0
    %3889 = vmatpush1.msra.mxu0 0.0
    %3890 = vmatprep.subr.mxu0 0.0
    %3891 = vmatpush1.msra.mxu0 0.0
    %3892 = vmatprep.subr.mxu0 0.0
    %3893 = vmatpush1.msra.mxu0 0.0
    %3894 = vmatprep.subr.mxu0 0.0
    %3895 = vmatpush1.msra.mxu0 0.0
    %3896 = vmatprep.subr.mxu0 0.0
    %3897 = vmatpush1.msra.mxu0 0.0
    %3898 = vmatprep.subr.mxu0 0.0
    %3899 = vmatpush1.msra.mxu0 0.0
    %3900 = vmatprep.subr.mxu0 0.0
    %3901 = vmatpush1.msra.mxu0 0.0
    %3902 = vmatprep.subr.mxu0 0.0
    %3903 = vmatpush1.msra.mxu0 0.0
    %3904 = vmatprep.mubr.f32.mxu0 0.0
    %3905 = vmatmul.mubr.f32.gmra.mrb[0].mxu0 %v3823
    %v3906 = vpop.f32.mrb[0].mxu0
    %v3907 = vadd.f32 0.0, %v3906
    %v3908 = vpop.f32.mrb[0].mxu0
    %3909 = vmatprep.mubr.f32.mxu0 0.0
    %3910 = vmatmul.mubr.f32.gmra.mrb[0].mxu0 %v3826
    %v3911 = vpop.f32.mrb[0].mxu0
    %v3912 = vadd.f32 0.0, %v3911
    %v3913 = vpop.f32.mrb[0].mxu0
    %3914 = vmatprep.mubr.f32.mxu0 0.0
    %3915 = vmatmul.mubr.f32.gmra.mrb[0].mxu0 %v3829
    %v3916 = vpop.f32.mrb[0].mxu0
    %v3917 = vadd.f32 0.0, %v3916
    %v3918 = vpop.f32.mrb[0].mxu0
    %3919 = vmatprep.mubr.f32.mxu0 0.0
    %3920 = vmatmul.mubr.f32.gmra.mrb[0].mxu0 %v3832
    %v3921 = vpop.f32.mrb[0].mxu0
    %v3922 = vadd.f32 0.0, %v3921
    %v3923 = vpop.f32.mrb[0].mxu0
    %3924 = vmatprep.mubr.f32.mxu0 0.0
    %3925 = vmatmul.mubr.f32.gmra.mrb[0].mxu0 %v3835
    %v3926 = vpop.f32.mrb[0].mxu0
    %v3927 = vadd.f32 0.0, %v3926
    %v3928 = vpop.f32.mrb[0].mxu0
    %3929 = vmatprep.mubr.f32.mxu0 0.0
    %3930 = vmatmul.mubr.f32.gmra.mrb[0].mxu0 %v3838
    %v3931 = vpop.f32.mrb[0].mxu0
    %v3932 = vadd.f32 0.0, %v3931
    %v3933 = vpop.f32.mrb[0].mxu0
    %3934 = vdwg.mxu0
    %v3935 = vrcp.pop %v3788
    %v3936 = vrcp.pop %v3791
    %v3937 = vrcp.pop %v3794
    %v3938 = vrcp.pop %v3797
    %v3939 = vrcp.pop %v3800
    %v3940 = vrcp.pop %v3803
    %v3941 = vmul.f32 %v3907, %v3935
    %v3942 = vmul.f32 %v3912, %v3936
    %v3943 = vmul.f32 %v3917, %v3937
    %v3944 = vmul.f32 %v3922, %v3938
    %v3945 = vmul.f32 %v3927, %v3939
    %v3946 = vmul.f32 %v3932, %v3940
    %3953 = vrot.lane.b32.xlu0 %v3261, 8
    %v3954 = vpop.permute.xlu0 %3953
    %3955 = vrot.lane.b32.xlu0 %v3262, 8
    %v3956 = vpop.permute.xlu0 %3955
    %3957 = vrot.lane.b32.xlu0 %v3263, 8
    %v3958 = vpop.permute.xlu0 %3957
    %3959 = vrot.lane.b32.xlu0 %v3264, 8
    %v3960 = vpop.permute.xlu0 %3959
    %3961 = vrot.lane.b32.xlu0 %v3265, 8
    %v3962 = vpop.permute.xlu0 %3961
    %3963 = vrot.lane.b32.xlu0 %v3266, 8
    %v3964 = vpop.permute.xlu0 %3963
    %3977 = vrot.lane.b32.xlu0 %v3601, 16
    %v3978 = vpop.permute.xlu0 %3977
    %3979 = vrot.lane.b32.xlu0 %v3602, 16
    %v3980 = vpop.permute.xlu0 %3979
    %3981 = vrot.lane.b32.xlu0 %v3603, 16
    %v3982 = vpop.permute.xlu0 %3981
    %3983 = vrot.lane.b32.xlu0 %v3604, 16
    %v3984 = vpop.permute.xlu0 %3983
    %3985 = vrot.lane.b32.xlu0 %v3605, 16
    %v3986 = vpop.permute.xlu0 %3985
    %3987 = vrot.lane.b32.xlu0 %v3606, 16
    %v3988 = vpop.permute.xlu0 %3987
    %4001 = vrot.lane.b32.xlu0 %v3941, 24
    %v4002 = vpop.permute.xlu0 %4001
    %4003 = vrot.lane.b32.xlu0 %v3942, 24
    %v4004 = vpop.permute.xlu0 %4003
    %4005 = vrot.lane.b32.xlu0 %v3943, 24
    %v4006 = vpop.permute.xlu0 %4005
    %4007 = vrot.lane.b32.xlu0 %v3944, 24
    %v4008 = vpop.permute.xlu0 %4007
    %4009 = vrot.lane.b32.xlu0 %v3945, 24
    %v4010 = vpop.permute.xlu0 %4009
    %4011 = vrot.lane.b32.xlu0 %v3946, 24
    %v4012 = vpop.permute.xlu0 %4011
    %v4019 = vsel %vm421, %v2921, %v3954
    %v4020 = vsel %vm421, %v2922, %v3956
    %v4021 = vsel %vm421, %v2923, %v3958
    %v4022 = vsel %vm421, %v2924, %v3960
    %v4023 = vsel %vm421, %v2925, %v3962
    %v4024 = vsel %vm421, %v2926, %v3964
    %v4025 = vsel %vm1837, %v4019, %v3978
    %v4026 = vsel %vm1837, %v4020, %v3980
    %v4027 = vsel %vm1837, %v4021, %v3982
    %v4028 = vsel %vm1837, %v4022, %v3984
    %v4029 = vsel %vm1837, %v4023, %v3986
    %v4030 = vsel %vm1837, %v4024, %v3988
    %v4031 = vsel %vm1844, %v4025, %v4002
    %v4032 = vsel %vm1844, %v4026, %v4004
    %v4033 = vsel %vm1844, %v4027, %v4006
    %v4034 = vsel %vm1844, %v4028, %v4008
    %v4035 = vsel %vm1844, %v4029, %v4010
    %v4036 = vsel %vm1844, %v4030, %v4012
    %s4037 = scalar_lea.vmem %s5, 32
    %v4038 = vld [vmem:[%s4037] sm:$0xff]
    %v4039 = vld [vmem:[%s4037 + $0x8] sm:$0xff]
    %v4040 = vld [vmem:[%s4037 + $0x10] sm:$0xff]
    %v4041 = vld [vmem:[%s4037 + $0x18] sm:$0xff]
    %v4043 = vsel %vm182, %v4031, 0
    %v4046 = vsel %vm182, %v4032, 0
    %v4049 = vsel %vm182, %v4033, 0
    %v4052 = vsel %vm182, %v4034, 0
    %v4055 = vsel %vm182, %v4035, 0
    %v4058 = vsel %vm182, %v4036, 0
    %4060 = vmatprep.subr.mxu0 0.0
    %4061 = vmatpush1.msra.mxu0 %v4038
    %4062 = vmatprep.subr.mxu0 0.0
    %4063 = vmatpush1.msra.mxu0 %v4039
    %4064 = vmatprep.subr.mxu0 0.0
    %4065 = vmatpush1.msra.mxu0 %v4040
    %4066 = vmatprep.subr.mxu0 0.0
    %4067 = vmatpush1.msra.mxu0 %v4041
    %4068 = vmatprep.subr.mxu0 0.0
    %4069 = vmatpush1.msra.mxu0 0.0
    %4070 = vmatprep.subr.mxu0 0.0
    %4071 = vmatpush1.msra.mxu0 0.0
    %4072 = vmatprep.subr.mxu0 0.0
    %4073 = vmatpush1.msra.mxu0 0.0
    %4074 = vmatprep.subr.mxu0 0.0
    %4075 = vmatpush1.msra.mxu0 0.0
    %4076 = vmatprep.subr.mxu0 0.0
    %4077 = vmatpush1.msra.mxu0 0.0
    %4078 = vmatprep.subr.mxu0 0.0
    %4079 = vmatpush1.msra.mxu0 0.0
    %4080 = vmatprep.subr.mxu0 0.0
    %4081 = vmatpush1.msra.mxu0 0.0
    %4082 = vmatprep.subr.mxu0 0.0
    %4083 = vmatpush1.msra.mxu0 0.0
    %4084 = vmatprep.subr.mxu0 0.0
    %4085 = vmatpush1.msra.mxu0 0.0
    %4086 = vmatprep.subr.mxu0 0.0
    %4087 = vmatpush1.msra.mxu0 0.0
    %4088 = vmatprep.subr.mxu0 0.0
    %4089 = vmatpush1.msra.mxu0 0.0
    %4090 = vmatprep.subr.mxu0 0.0
    %4091 = vmatpush1.msra.mxu0 0.0
    %4092 = vmatprep.subr.mxu0 0.0
    %4093 = vmatpush1.msra.mxu0 0.0
    %4094 = vmatprep.subr.mxu0 0.0
    %4095 = vmatpush1.msra.mxu0 0.0
    %4096 = vmatprep.subr.mxu0 0.0
    %4097 = vmatpush1.msra.mxu0 0.0
    %4098 = vmatprep.subr.mxu0 0.0
    %4099 = vmatpush1.msra.mxu0 0.0
    %4100 = vmatprep.subr.mxu0 0.0
    %4101 = vmatpush1.msra.mxu0 0.0
    %4102 = vmatprep.subr.mxu0 0.0
    %4103 = vmatpush1.msra.mxu0 0.0
    %4104 = vmatprep.subr.mxu0 0.0
    %4105 = vmatpush1.msra.mxu0 0.0
    %4106 = vmatprep.subr.mxu0 0.0
    %4107 = vmatpush1.msra.mxu0 0.0
    %4108 = vmatprep.subr.mxu0 0.0
    %4109 = vmatpush1.msra.mxu0 0.0
    %4110 = vmatprep.subr.mxu0 0.0
    %4111 = vmatpush1.msra.mxu0 0.0
    %4112 = vmatprep.subr.mxu0 0.0
    %4113 = vmatpush1.msra.mxu0 0.0
    %4114 = vmatprep.subr.mxu0 0.0
    %4115 = vmatpush1.msra.mxu0 0.0
    %4116 = vmatprep.subr.mxu0 0.0
    %4117 = vmatpush1.msra.mxu0 0.0
    %4118 = vmatprep.subr.mxu0 0.0
    %4119 = vmatpush1.msra.mxu0 0.0
    %4120 = vmatprep.subr.mxu0 0.0
    %4121 = vmatpush1.msra.mxu0 0.0
    %4122 = vmatprep.subr.mxu0 0.0
    %4123 = vmatpush1.msra.mxu0 0.0
    %4124 = vmatprep.mubr.f32.mxu0 0.0
    %4125 = vmatmul.mubr.f32.gmra.mrb[0].mxu0 %v4043
    %v4126 = vpop.f32.mrb[0].mxu0
    %v4127 = vadd.f32 0.0, %v4126
    %v4128 = vpop.f32.mrb[0].mxu0
    %4129 = vmatprep.mubr.f32.mxu0 0.0
    %4130 = vmatmul.mubr.f32.gmra.mrb[0].mxu0 %v4046
    %v4131 = vpop.f32.mrb[0].mxu0
    %v4132 = vadd.f32 0.0, %v4131
    %v4133 = vpop.f32.mrb[0].mxu0
    %4134 = vmatprep.mubr.f32.mxu0 0.0
    %4135 = vmatmul.mubr.f32.gmra.mrb[0].mxu0 %v4049
    %v4136 = vpop.f32.mrb[0].mxu0
    %v4137 = vadd.f32 0.0, %v4136
    %v4138 = vpop.f32.mrb[0].mxu0
    %4139 = vmatprep.mubr.f32.mxu0 0.0
    %4140 = vmatmul.mubr.f32.gmra.mrb[0].mxu0 %v4052
    %v4141 = vpop.f32.mrb[0].mxu0
    %v4142 = vadd.f32 0.0, %v4141
    %v4143 = vpop.f32.mrb[0].mxu0
    %4144 = vmatprep.mubr.f32.mxu0 0.0
    %4145 = vmatmul.mubr.f32.gmra.mrb[0].mxu0 %v4055
    %v4146 = vpop.f32.mrb[0].mxu0
    %v4147 = vadd.f32 0.0, %v4146
    %v4148 = vpop.f32.mrb[0].mxu0
    %4149 = vmatprep.mubr.f32.mxu0 0.0
    %4150 = vmatmul.mubr.f32.gmra.mrb[0].mxu0 %v4058
    %v4151 = vpop.f32.mrb[0].mxu0
    %v4152 = vadd.f32 0.0, %v4151
    %v4153 = vpop.f32.mrb[0].mxu0
    %4154 = vdwg.mxu0
    %v4155 = vadd.f32 %v2365, %v4127
    %v4156 = vadd.f32 %v2366, %v4132
    %v4157 = vadd.f32 %v2367, %v4137
    %v4158 = vadd.f32 %v2368, %v4142
    %v4159 = vadd.f32 %v2369, %v4147
    %v4160 = vadd.f32 %v2370, %v4152
    %v4161 = vlaneseq
    %v4162 = vshrl.u32 %v4161, 7
    %v4163 = vsub.s32 5, %v4162
    %v4164 = vrot.slane %v2372, %v4163
    %v4165 = vadd.f32 %v4155, %v4164
    %v4166 = vadd.f32 %v4156, %v4164
    %v4167 = vadd.f32 %v4157, %v4164
    %v4168 = vadd.f32 %v4158, %v4164
    %v4169 = vadd.f32 %v4159, %v4164
    %v4170 = vadd.f32 %v4160, %v4164
    %v4171 = vsel %vm182, %v4165, 0.0
    %4172 = vadd.xlane.f32.xlu0 %v4171
    %v4173 = vpop.xlane.xlu0 %4172
    %v4174 = vsel %vm182, %v4166, 0.0
    %4175 = vadd.xlane.f32.xlu0 %v4174
    %v4176 = vpop.xlane.xlu0 %4175
    %v4177 = vsel %vm182, %v4167, 0.0
    %4178 = vadd.xlane.f32.xlu0 %v4177
    %v4179 = vpop.xlane.xlu0 %4178
    %v4180 = vsel %vm182, %v4168, 0.0
    %4181 = vadd.xlane.f32.xlu0 %v4180
    %v4182 = vpop.xlane.xlu0 %4181
    %v4183 = vsel %vm182, %v4169, 0.0
    %4184 = vadd.xlane.f32.xlu0 %v4183
    %v4185 = vpop.xlane.xlu0 %4184
    %v4186 = vsel %vm182, %v4170, 0.0
    %4187 = vadd.xlane.f32.xlu0 %v4186
    %v4188 = vpop.xlane.xlu0 %4187
    %v4189 = vmul.f32 %v4173, %v201
    %v4190 = vmul.f32 %v4176, %v201
    %v4191 = vmul.f32 %v4179, %v201
    %v4192 = vmul.f32 %v4182, %v201
    %v4193 = vmul.f32 %v4185, %v201
    %v4194 = vmul.f32 %v4188, %v201
    %v4195 = vsub.f32 %v4165, %v4189
    %v4196 = vsub.f32 %v4166, %v4190
    %v4197 = vsub.f32 %v4167, %v4191
    %v4198 = vsub.f32 %v4168, %v4192
    %v4199 = vsub.f32 %v4169, %v4193
    %v4200 = vsub.f32 %v4170, %v4194
    %v4201 = vmul.f32 %v4195, %v4195
    %v4202 = vmul.f32 %v4196, %v4196
    %v4203 = vmul.f32 %v4197, %v4197
    %v4204 = vmul.f32 %v4198, %v4198
    %v4205 = vmul.f32 %v4199, %v4199
    %v4206 = vmul.f32 %v4200, %v4200
    %v4207 = vsel %vm182, %v4201, 0.0
    %4208 = vadd.xlane.f32.xlu0 %v4207
    %v4209 = vpop.xlane.xlu0 %4208
    %v4210 = vsel %vm182, %v4202, 0.0
    %4211 = vadd.xlane.f32.xlu0 %v4210
    %v4212 = vpop.xlane.xlu0 %4211
    %v4213 = vsel %vm182, %v4203, 0.0
    %4214 = vadd.xlane.f32.xlu0 %v4213
    %v4215 = vpop.xlane.xlu0 %4214
    %v4216 = vsel %vm182, %v4204, 0.0
    %4217 = vadd.xlane.f32.xlu0 %v4216
    %v4218 = vpop.xlane.xlu0 %4217
    %v4219 = vsel %vm182, %v4205, 0.0
    %4220 = vadd.xlane.f32.xlu0 %v4219
    %v4221 = vpop.xlane.xlu0 %4220
    %v4222 = vsel %vm182, %v4206, 0.0
    %4223 = vadd.xlane.f32.xlu0 %v4222
    %v4224 = vpop.xlane.xlu0 %4223
    %v4225 = vmul.f32 %v4209, %v201
    %v4226 = vmul.f32 %v4212, %v201
    %v4227 = vmul.f32 %v4215, %v201
    %v4228 = vmul.f32 %v4218, %v201
    %v4229 = vmul.f32 %v4221, %v201
    %v4230 = vmul.f32 %v4224, %v201
    %v4231 = vadd.f32 %v4225, 1e-05
    %v4232 = vadd.f32 %v4226, 1e-05
    %v4233 = vadd.f32 %v4227, 1e-05
    %v4234 = vadd.f32 %v4228, 1e-05
    %v4235 = vadd.f32 %v4229, 1e-05
    %v4236 = vadd.f32 %v4230, 1e-05
    %v4237 = vrsqrt.pop %v4231
    %v4238 = vrsqrt.pop %v4232
    %v4239 = vrsqrt.pop %v4233
    %v4240 = vrsqrt.pop %v4234
    %v4241 = vrsqrt.pop %v4235
    %v4242 = vrsqrt.pop %v4236
    %v4243 = vmul.f32 %v4195, %v4237
    %v4244 = vmul.f32 %v4196, %v4238
    %v4245 = vmul.f32 %v4197, %v4239
    %v4246 = vmul.f32 %v4198, %v4240
    %v4247 = vmul.f32 %v4199, %v4241
    %v4248 = vmul.f32 %v4200, %v4242
    %v4249 = vlaneseq
    %v4250 = vshrl.u32 %v4249, 7
    %v4251 = vsub.s32 2, %v4250
    %v4252 = vrot.slane %v2372, %v4251
    %v4253 = vmul.f32 %v4243, %v4252
    %v4254 = vmul.f32 %v4244, %v4252
    %v4255 = vmul.f32 %v4245, %v4252
    %v4256 = vmul.f32 %v4246, %v4252
    %v4257 = vmul.f32 %v4247, %v4252
    %v4258 = vmul.f32 %v4248, %v4252
    %v4259 = vlaneseq
    %v4260 = vshrl.u32 %v4259, 7
    %v4261 = vsub.s32 3, %v4260
    %v4262 = vrot.slane %v2372, %v4261
    %v4263 = vadd.f32 %v4253, %v4262
    %v4264 = vadd.f32 %v4254, %v4262
    %v4265 = vadd.f32 %v4255, %v4262
    %v4266 = vadd.f32 %v4256, %v4262
    %v4267 = vadd.f32 %v4257, %v4262
    %v4268 = vadd.f32 %v4258, %v4262
    %s4269 = scalar_lea.vmem %s6, 32
    %v4270 = vld [vmem:[%s4269] sm:$0xff]
    %v4271 = vld [vmem:[%s4269 + $0x8] sm:$0xff]
    %v4272 = vld [vmem:[%s4269 + $0x10] sm:$0xff]
    %v4273 = vld [vmem:[%s4269 + $0x18] sm:$0xff]
    %v4274 = vlaneseq
    %v4275 = vshrl.u32 %v4274, 7
    %v4276 = vsub.s32 6, %v4275
    %v4277 = vrot.slane %v2372, %v4276
    %v4279 = vsel %vm182, %v4263, 0
    %v4282 = vsel %vm182, %v4264, 0
    %v4285 = vsel %vm182, %v4265, 0
    %v4288 = vsel %vm182, %v4266, 0
    %v4291 = vsel %vm182, %v4267, 0
    %v4294 = vsel %vm182, %v4268, 0
    %4296 = vmatprep.subr.mxu0 0.0
    %4297 = vmatpush1.msra.mxu0 %v4270
    %4298 = vmatprep.subr.mxu0 0.0
    %4299 = vmatpush1.msra.mxu0 %v4271
    %4300 = vmatprep.subr.mxu0 0.0
    %4301 = vmatpush1.msra.mxu0 %v4272
    %4302 = vmatprep.subr.mxu0 0.0
    %4303 = vmatpush1.msra.mxu0 %v4273
    %4304 = vmatprep.subr.mxu0 0.0
    %4305 = vmatpush1.msra.mxu0 0.0
    %4306 = vmatprep.subr.mxu0 0.0
    %4307 = vmatpush1.msra.mxu0 0.0
    %4308 = vmatprep.subr.mxu0 0.0
    %4309 = vmatpush1.msra.mxu0 0.0
    %4310 = vmatprep.subr.mxu0 0.0
    %4311 = vmatpush1.msra.mxu0 0.0
    %4312 = vmatprep.subr.mxu0 0.0
    %4313 = vmatpush1.msra.mxu0 0.0
    %4314 = vmatprep.subr.mxu0 0.0
    %4315 = vmatpush1.msra.mxu0 0.0
    %4316 = vmatprep.subr.mxu0 0.0
    %4317 = vmatpush1.msra.mxu0 0.0
    %4318 = vmatprep.subr.mxu0 0.0
    %4319 = vmatpush1.msra.mxu0 0.0
    %4320 = vmatprep.subr.mxu0 0.0
    %4321 = vmatpush1.msra.mxu0 0.0
    %4322 = vmatprep.subr.mxu0 0.0
    %4323 = vmatpush1.msra.mxu0 0.0
    %4324 = vmatprep.subr.mxu0 0.0
    %4325 = vmatpush1.msra.mxu0 0.0
    %4326 = vmatprep.subr.mxu0 0.0
    %4327 = vmatpush1.msra.mxu0 0.0
    %4328 = vmatprep.subr.mxu0 0.0
    %4329 = vmatpush1.msra.mxu0 0.0
    %4330 = vmatprep.subr.mxu0 0.0
    %4331 = vmatpush1.msra.mxu0 0.0
    %4332 = vmatprep.subr.mxu0 0.0
    %4333 = vmatpush1.msra.mxu0 0.0
    %4334 = vmatprep.subr.mxu0 0.0
    %4335 = vmatpush1.msra.mxu0 0.0
    %4336 = vmatprep.subr.mxu0 0.0
    %4337 = vmatpush1.msra.mxu0 0.0
    %4338 = vmatprep.subr.mxu0 0.0
    %4339 = vmatpush1.msra.mxu0 0.0
    %4340 = vmatprep.subr.mxu0 0.0
    %4341 = vmatpush1.msra.mxu0 0.0
    %4342 = vmatprep.subr.mxu0 0.0
    %4343 = vmatpush1.msra.mxu0 0.0
    %4344 = vmatprep.subr.mxu0 0.0
    %4345 = vmatpush1.msra.mxu0 0.0
    %4346 = vmatprep.subr.mxu0 0.0
    %4347 = vmatpush1.msra.mxu0 0.0
    %4348 = vmatprep.subr.mxu0 0.0
    %4349 = vmatpush1.msra.mxu0 0.0
    %4350 = vmatprep.subr.mxu0 0.0
    %4351 = vmatpush1.msra.mxu0 0.0
    %4352 = vmatprep.subr.mxu0 0.0
    %4353 = vmatpush1.msra.mxu0 0.0
    %4354 = vmatprep.subr.mxu0 0.0
    %4355 = vmatpush1.msra.mxu0 0.0
    %4356 = vmatprep.subr.mxu0 0.0
    %4357 = vmatpush1.msra.mxu0 0.0
    %4358 = vmatprep.subr.mxu0 0.0
    %4359 = vmatpush1.msra.mxu0 0.0
    %4360 = vmatprep.mubr.f32.mxu0 0.0
    %4361 = vmatmul.mubr.f32.gmra.mrb[0].mxu0 %v4279
    %v4362 = vpop.f32.mrb[0].mxu0
    %v4363 = vadd.f32 %v4277, %v4362
    %v4364 = vpop.f32.mrb[0].mxu0
    %4365 = vmatprep.mubr.f32.mxu0 0.0
    %4366 = vmatmul.mubr.f32.gmra.mrb[0].mxu0 %v4282
    %v4367 = vpop.f32.mrb[0].mxu0
    %v4368 = vadd.f32 %v4277, %v4367
    %v4369 = vpop.f32.mrb[0].mxu0
    %4370 = vmatprep.mubr.f32.mxu0 0.0
    %4371 = vmatmul.mubr.f32.gmra.mrb[0].mxu0 %v4285
    %v4372 = vpop.f32.mrb[0].mxu0
    %v4373 = vadd.f32 %v4277, %v4372
    %v4374 = vpop.f32.mrb[0].mxu0
    %4375 = vmatprep.mubr.f32.mxu0 0.0
    %4376 = vmatmul.mubr.f32.gmra.mrb[0].mxu0 %v4288
    %v4377 = vpop.f32.mrb[0].mxu0
    %v4378 = vadd.f32 %v4277, %v4377
    %v4379 = vpop.f32.mrb[0].mxu0
    %4380 = vmatprep.mubr.f32.mxu0 0.0
    %4381 = vmatmul.mubr.f32.gmra.mrb[0].mxu0 %v4291
    %v4382 = vpop.f32.mrb[0].mxu0
    %v4383 = vadd.f32 %v4277, %v4382
    %v4384 = vpop.f32.mrb[0].mxu0
    %4385 = vmatprep.mubr.f32.mxu0 0.0
    %4386 = vmatmul.mubr.f32.gmra.mrb[0].mxu0 %v4294
    %v4387 = vpop.f32.mrb[0].mxu0
    %v4388 = vadd.f32 %v4277, %v4387
    %v4389 = vpop.f32.mrb[0].mxu0
    %4390 = vdwg.mxu0
    %v4391 = vmul.f32 %v4363, 0.5
    %v4392 = vmul.f32 %v4368, 0.5
    %v4393 = vmul.f32 %v4373, 0.5
    %v4394 = vmul.f32 %v4378, 0.5
    %v4395 = vmul.f32 %v4383, 0.5
    %v4396 = vmul.f32 %v4388, 0.5
    %v4397 = vmul.f32 %v4363, 0.70710677
    %v4398 = vmul.f32 %v4368, 0.70710677
    %v4399 = vmul.f32 %v4373, 0.70710677
    %v4400 = vmul.f32 %v4378, 0.70710677
    %v4401 = vmul.f32 %v4383, 0.70710677
    %v4402 = vmul.f32 %v4388, 0.70710677
    %v4403 = verf.f32.pop %v4397
    %v4404 = verf.f32.pop %v4398
    %v4405 = verf.f32.pop %v4399
    %v4406 = verf.f32.pop %v4400
    %v4407 = verf.f32.pop %v4401
    %v4408 = verf.f32.pop %v4402
    %v4409 = vadd.f32 %v4403, 1.0
    %v4410 = vadd.f32 %v4404, 1.0
    %v4411 = vadd.f32 %v4405, 1.0
    %v4412 = vadd.f32 %v4406, 1.0
    %v4413 = vadd.f32 %v4407, 1.0
    %v4414 = vadd.f32 %v4408, 1.0
    %v4415 = vmul.f32 %v4391, %v4409
    %v4416 = vmul.f32 %v4392, %v4410
    %v4417 = vmul.f32 %v4393, %v4411
    %v4418 = vmul.f32 %v4394, %v4412
    %v4419 = vmul.f32 %v4395, %v4413
    %v4420 = vmul.f32 %v4396, %v4414
    %s4421 = scalar_lea.vmem %s7, 64
    %v4422 = vld [vmem:[%s4421] sm:$0xff]
    %v4423 = vld [vmem:[%s4421 + $0x8] sm:$0xff]
    %v4424 = vld [vmem:[%s4421 + $0x10] sm:$0xff]
    %v4425 = vld [vmem:[%s4421 + $0x18] sm:$0xff]
    %v4426 = vld [vmem:[%s4421 + $0x20] sm:$0xff]
    %v4427 = vld [vmem:[%s4421 + $0x28] sm:$0xff]
    %v4428 = vld [vmem:[%s4421 + $0x30] sm:$0xff]
    %v4429 = vld [vmem:[%s4421 + $0x38] sm:$0xff]
    %v4431 = vsel %vm2241, %v4415, 0
    %v4434 = vsel %vm2241, %v4416, 0
    %v4437 = vsel %vm2241, %v4417, 0
    %v4440 = vsel %vm2241, %v4418, 0
    %v4443 = vsel %vm2241, %v4419, 0
    %v4446 = vsel %vm2241, %v4420, 0
    %4448 = vmatprep.subr.mxu0 0.0
    %4449 = vmatpush1.msra.mxu0 %v4422
    %4450 = vmatprep.subr.mxu0 0.0
    %4451 = vmatpush1.msra.mxu0 %v4423
    %4452 = vmatprep.subr.mxu0 0.0
    %4453 = vmatpush1.msra.mxu0 %v4424
    %4454 = vmatprep.subr.mxu0 0.0
    %4455 = vmatpush1.msra.mxu0 %v4425
    %4456 = vmatprep.subr.mxu0 0.0
    %4457 = vmatpush1.msra.mxu0 %v4426
    %4458 = vmatprep.subr.mxu0 0.0
    %4459 = vmatpush1.msra.mxu0 %v4427
    %4460 = vmatprep.subr.mxu0 0.0
    %4461 = vmatpush1.msra.mxu0 %v4428
    %4462 = vmatprep.subr.mxu0 0.0
    %4463 = vmatpush1.msra.mxu0 %v4429
    %4464 = vmatprep.subr.mxu0 0.0
    %4465 = vmatpush1.msra.mxu0 0.0
    %4466 = vmatprep.subr.mxu0 0.0
    %4467 = vmatpush1.msra.mxu0 0.0
    %4468 = vmatprep.subr.mxu0 0.0
    %4469 = vmatpush1.msra.mxu0 0.0
    %4470 = vmatprep.subr.mxu0 0.0
    %4471 = vmatpush1.msra.mxu0 0.0
    %4472 = vmatprep.subr.mxu0 0.0
    %4473 = vmatpush1.msra.mxu0 0.0
    %4474 = vmatprep.subr.mxu0 0.0
    %4475 = vmatpush1.msra.mxu0 0.0
    %4476 = vmatprep.subr.mxu0 0.0
    %4477 = vmatpush1.msra.mxu0 0.0
    %4478 = vmatprep.subr.mxu0 0.0
    %4479 = vmatpush1.msra.mxu0 0.0
    %4480 = vmatprep.subr.mxu0 0.0
    %4481 = vmatpush1.msra.mxu0 0.0
    %4482 = vmatprep.subr.mxu0 0.0
    %4483 = vmatpush1.msra.mxu0 0.0
    %4484 = vmatprep.subr.mxu0 0.0
    %4485 = vmatpush1.msra.mxu0 0.0
    %4486 = vmatprep.subr.mxu0 0.0
    %4487 = vmatpush1.msra.mxu0 0.0
    %4488 = vmatprep.subr.mxu0 0.0
    %4489 = vmatpush1.msra.mxu0 0.0
    %4490 = vmatprep.subr.mxu0 0.0
    %4491 = vmatpush1.msra.mxu0 0.0
    %4492 = vmatprep.subr.mxu0 0.0
    %4493 = vmatpush1.msra.mxu0 0.0
    %4494 = vmatprep.subr.mxu0 0.0
    %4495 = vmatpush1.msra.mxu0 0.0
    %4496 = vmatprep.subr.mxu0 0.0
    %4497 = vmatpush1.msra.mxu0 0.0
    %4498 = vmatprep.subr.mxu0 0.0
    %4499 = vmatpush1.msra.mxu0 0.0
    %4500 = vmatprep.subr.mxu0 0.0
    %4501 = vmatpush1.msra.mxu0 0.0
    %4502 = vmatprep.subr.mxu0 0.0
    %4503 = vmatpush1.msra.mxu0 0.0
    %4504 = vmatprep.subr.mxu0 0.0
    %4505 = vmatpush1.msra.mxu0 0.0
    %4506 = vmatprep.subr.mxu0 0.0
    %4507 = vmatpush1.msra.mxu0 0.0
    %4508 = vmatprep.subr.mxu0 0.0
    %4509 = vmatpush1.msra.mxu0 0.0
    %4510 = vmatprep.subr.mxu0 0.0
    %4511 = vmatpush1.msra.mxu0 0.0
    %4512 = vmatprep.mubr.f32.mxu0 0.0
    %4513 = vmatmul.mubr.f32.gmra.mrb[0].mxu0 %v4431
    %v4514 = vpop.f32.mrb[0].mxu0
    %v4515 = vadd.f32 0.0, %v4514
    %v4516 = vpop.f32.mrb[0].mxu0
    %4517 = vmatprep.mubr.f32.mxu0 0.0
    %4518 = vmatmul.mubr.f32.gmra.mrb[0].mxu0 %v4434
    %v4519 = vpop.f32.mrb[0].mxu0
    %v4520 = vpop.f32.mrb[0].mxu0
    %4521 = vmatprep.mubr.f32.mxu0 0.0
    %4522 = vmatmul.mubr.f32.gmra.mrb[0].mxu0 %v4437
    %v4523 = vpop.f32.mrb[0].mxu0
    %v4524 = vpop.f32.mrb[0].mxu0
    %4525 = vmatprep.mubr.f32.mxu0 0.0
    %4526 = vmatmul.mubr.f32.gmra.mrb[0].mxu0 %v4440
    %v4527 = vpop.f32.mrb[0].mxu0
    %v4528 = vadd.f32 0.0, %v4527
    %v4529 = vpop.f32.mrb[0].mxu0
    %4530 = vmatprep.mubr.f32.mxu0 0.0
    %4531 = vmatmul.mubr.f32.gmra.mrb[0].mxu0 %v4443
    %v4532 = vpop.f32.mrb[0].mxu0
    %v4533 = vpop.f32.mrb[0].mxu0
    %4534 = vmatprep.mubr.f32.mxu0 0.0
    %4535 = vmatmul.mubr.f32.gmra.mrb[0].mxu0 %v4446
    %v4536 = vpop.f32.mrb[0].mxu0
    %v4537 = vpop.f32.mrb[0].mxu0
    %4538 = vdwg.mxu0
    %v4539 = vadd.f32 %v4165, %v4515
    %v4540 = vadd.f32 %v4168, %v4528
    %v4541 = vlaneseq
    %v4542 = vshrl.u32 %v4541, 7
    %v4543 = vsub.s32 7, %v4542
    %v4544 = vrot.slane %v2372, %v4543
    %v4545 = vadd.f32 %v4539, %v4544
    %v4546 = vadd.f32 %v4540, %v4544
    %v4547 = vld [vmem:[%s9] sm:$0xff]
    %v4548 = vld [vmem:[%s9 + $0x8] sm:$0xff]
    %v4549 = vld [vmem:[%s9 + $0x10] sm:$0xff]
    %v4550 = vld [vmem:[%s9 + $0x18] sm:$0xff]
    %v4551 = vld [vmem:[%s9 + $0x20] sm:$0xff]
    %v4553 = vrot.slane %v4546, 7
    %vm4555 = vcmask 1040384
    %v4556 = vsel %vm4555, %v4545, %v4553
    %vm4557 = vcmask 254976
    %v4558 = vsel %vm4557, %v4556, 0.0
    %4559 = vadd.xlane.f32.xlu0 %v4558
    %v4560 = vpop.xlane.xlu0 %4559
    %v4561 = vmul.f32 %v4560, %v201
    %v4562 = vsub.f32 %v4556, %v4561
    %v4563 = vmul.f32 %v4562, %v4562
    %v4564 = vsel %vm4557, %v4563, 0.0
    %4565 = vadd.xlane.f32.xlu0 %v4564
    %v4566 = vpop.xlane.xlu0 %4565
    %v4567 = vmul.f32 %v4566, %v201
    %v4568 = vadd.f32 %v4567, 1e-05
    %v4569 = vrsqrt.pop %v4568
    %v4570 = vmul.f32 %v4562, %v4569
    %v4571 = vlaneseq
    %v4572 = vshrl.u32 %v4571, 7
    %v4573 = vsub.s32 0, %v4572
    %v4574 = vrot.slane %v4547, %v4573
    %v4575 = vmul.f32 %v4570, %v4574
    %v4576 = vlaneseq
    %v4577 = vshrl.u32 %v4576, 7
    %v4578 = vsub.s32 1, %v4577
    %v4579 = vrot.slane %v4547, %v4578
    %v4580 = vadd.f32 %v4575, %v4579
    %v4581 = vlaneseq
    %v4582 = vshrl.u32 %v4581, 7
    %v4583 = vsub.s32 2, %v4582
    %v4584 = vrot.slane %v4547, %v4583
    %v4586 = vsel %vm182, %v4580, 0
    %4588 = vmatprep.subr.mxu0 0.0
    %4589 = vmatpush1.msra.mxu0 %v4548
    %4590 = vmatprep.subr.mxu0 0.0
    %4591 = vmatpush1.msra.mxu0 %v4549
    %4592 = vmatprep.subr.mxu0 0.0
    %4593 = vmatpush1.msra.mxu0 %v4550
    %4594 = vmatprep.subr.mxu0 0.0
    %4595 = vmatpush1.msra.mxu0 %v4551
    %4596 = vmatprep.subr.mxu0 0.0
    %4597 = vmatpush1.msra.mxu0 0.0
    %4598 = vmatprep.subr.mxu0 0.0
    %4599 = vmatpush1.msra.mxu0 0.0
    %4600 = vmatprep.subr.mxu0 0.0
    %4601 = vmatpush1.msra.mxu0 0.0
    %4602 = vmatprep.subr.mxu0 0.0
    %4603 = vmatpush1.msra.mxu0 0.0
    %4604 = vmatprep.subr.mxu0 0.0
    %4605 = vmatpush1.msra.mxu0 0.0
    %4606 = vmatprep.subr.mxu0 0.0
    %4607 = vmatpush1.msra.mxu0 0.0
    %4608 = vmatprep.subr.mxu0 0.0
    %4609 = vmatpush1.msra.mxu0 0.0
    %4610 = vmatprep.subr.mxu0 0.0
    %4611 = vmatpush1.msra.mxu0 0.0
    %4612 = vmatprep.subr.mxu0 0.0
    %4613 = vmatpush1.msra.mxu0 0.0
    %4614 = vmatprep.subr.mxu0 0.0
    %4615 = vmatpush1.msra.mxu0 0.0
    %4616 = vmatprep.subr.mxu0 0.0
    %4617 = vmatpush1.msra.mxu0 0.0
    %4618 = vmatprep.subr.mxu0 0.0
    %4619 = vmatpush1.msra.mxu0 0.0
    %4620 = vmatprep.subr.mxu0 0.0
    %4621 = vmatpush1.msra.mxu0 0.0
    %4622 = vmatprep.subr.mxu0 0.0
    %4623 = vmatpush1.msra.mxu0 0.0
    %4624 = vmatprep.subr.mxu0 0.0
    %4625 = vmatpush1.msra.mxu0 0.0
    %4626 = vmatprep.subr.mxu0 0.0
    %4627 = vmatpush1.msra.mxu0 0.0
    %4628 = vmatprep.subr.mxu0 0.0
    %4629 = vmatpush1.msra.mxu0 0.0
    %4630 = vmatprep.subr.mxu0 0.0
    %4631 = vmatpush1.msra.mxu0 0.0
    %4632 = vmatprep.subr.mxu0 0.0
    %4633 = vmatpush1.msra.mxu0 0.0
    %4634 = vmatprep.subr.mxu0 0.0
    %4635 = vmatpush1.msra.mxu0 0.0
    %4636 = vmatprep.subr.mxu0 0.0
    %4637 = vmatpush1.msra.mxu0 0.0
    %4638 = vmatprep.subr.mxu0 0.0
    %4639 = vmatpush1.msra.mxu0 0.0
    %4640 = vmatprep.subr.mxu0 0.0
    %4641 = vmatpush1.msra.mxu0 0.0
    %4642 = vmatprep.subr.mxu0 0.0
    %4643 = vmatpush1.msra.mxu0 0.0
    %4644 = vmatprep.subr.mxu0 0.0
    %4645 = vmatpush1.msra.mxu0 0.0
    %4646 = vmatprep.subr.mxu0 0.0
    %4647 = vmatpush1.msra.mxu0 0.0
    %4648 = vmatprep.subr.mxu0 0.0
    %4649 = vmatpush1.msra.mxu0 0.0
    %4650 = vmatprep.subr.mxu0 0.0
    %4651 = vmatpush1.msra.mxu0 0.0
    %4652 = vmatprep.mubr.f32.mxu0 0.0
    %4653 = vmatmul.mubr.f32.gmra.mrb[0].mxu0 %v4586
    %v4654 = vpop.f32.mrb[0].mxu0
    %v4655 = vadd.f32 %v4584, %v4654
    %v4656 = vpop.f32.mrb[0].mxu0
    %4657 = vdwg.mxu0
    %vm4658 = vcmask 74752
    %4659 = vst.msk [vmem:[#allocation2] sm:$0x3] %vm4658, %v4655
    // Predicated region
    $region42: #{vit_forward.1} parent=1 // pred_check
      _
    $region43: #{vit_forward.1} parent=1 // pred_check_branch
      %4661 = sbr.rel (0) target = $region45
    $region44: #{vit_forward.1} parent=1 // pred_region
      %s4663 = ssub.s32 32, 32
      %4664 = vsyncadd [#allocation3], %s4663
      %s4666 = sshll.u32 [#allocation2], 4
      %s4667 = int_to_ptr.vmem [resolvable:$true] %s4666
      %4669 = dma.vmem_to_hbm [thread:$0]  %s4667, 32, %s10, [#allocation3]
    $region45: #{vit_forward.1} parent=1 // pred_fallthru
      _
    // Predicated region
    $region46: #{vit_forward.1} parent=1 // pred_check
      _
    $region47: #{vit_forward.1} parent=1 // pred_check_branch
      %4671 = sbr.rel (0) target = $region49
    $region48: #{vit_forward.1} parent=1 // pred_region
      %4672 = dma.done [#allocation3], 32
    $region49: #{vit_forward.1} parent=1 // pred_fallthru
      _
    %4673 = vsyncpa [#allocation3], 1

</llo_original>
